<compile_context>
chip_gen: v7x
topology: tpu7x:2x2x1
jax: 0.10.0
libtpu: 0.0.40
codegen_flags: <defaults>
</compile_context>

<pallas_src>
import functools
import math

import jax
import jax.numpy as jnp
from jax.experimental import pallas as pl
from jax.experimental.pallas import tpu as pltpu


# Set to jnp.bfloat16 on v6e / v7x to halve matmul-operand DMA bytes (the MXU is
# bf16-native there); accumulation and all BatchNorm / tanh math stays f32.
# Kept f32 by default so the strict 1e-3 self-check below passes on every
# generation (v5e's VPU/EUP have no bf16 path anyway).
MATMUL_DTYPE = jnp.float32

# Stay well under v7x's 64 MiB physical VMEM (v5e/v6e have 128 MiB).
_VMEM_BUDGET = 56 * 1024 * 1024


# -----------------------------------------------------------------------------
# Pallas kernels
# -----------------------------------------------------------------------------
def _fused_convt_bn_relu_kernel(pT_ref, wT_ref, g_ref, b_ref, o_ref, *, eps):
    # y^T = w^T @ patches^T : (C_out, M), M on lanes -> lane-dense MXU output
    # and unmasked stores.
    y = jnp.dot(wT_ref[...], pT_ref[...], preferred_element_type=jnp.float32)
    m = jnp.float32(y.shape[1])
    # BatchNorm (training-mode batch statistics, biased variance) fused in-VMEM.
    mean = jnp.sum(y, axis=1, keepdims=True) / m                    # (C, 1)
    centered = y - mean
    var = jnp.sum(centered * centered, axis=1, keepdims=True) / m   # centered, no
    scale = g_ref[...] * jax.lax.rsqrt(var + eps)                   # cancellation
    o_ref[...] = jnp.maximum(centered * scale + b_ref[...], 0.0)    # FMA + max


def _convt_tanh_kernel(pT_ref, wT_ref, o_ref):
    y = jnp.dot(wT_ref[...], pT_ref[...], preferred_element_type=jnp.float32)
    o_ref[...] = jnp.tanh(y)


# -----------------------------------------------------------------------------
# Pallas wrappers
# -----------------------------------------------------------------------------
def _vmem_estimate_bytes(*shape_dtype_pairs):
    # x2 for the auto-pipeline's double buffering of every operand/output.
    total = 0
    for shape, dtype in shape_dtype_pairs:
        total += 2 * math.prod(shape) * jnp.dtype(dtype).itemsize
    return total + (2 << 20)  # slack for compiler-internal scratch


def fused_convt_bn_relu(pT, wT, gamma, beta, eps=1e-5):
    """One fused pallas_call: (C_out,K)x(K,M) matmul + BN(batch stats) + ReLU."""
    K, M = pT.shape
    C, _ = wT.shape
    est = _vmem_estimate_bytes(((K, M), MATMUL_DTYPE), ((C, K), MATMUL_DTYPE),
                               ((C, 1), jnp.float32), ((C, 1), jnp.float32),
                               ((C, M), jnp.float32))
    # TODO(synk): for batches where a full-M block no longer fits VMEM, fall back
    # to an M-chunked grid with resident sum/sumsq accumulators + a finalize pass.
    assert est <= _VMEM_BUDGET, f"fused BN layer needs {est} B VMEM > budget"

    return pl.pallas_call(
        functools.partial(_fused_convt_bn_relu_kernel, eps=eps),
        out_shape=jax.ShapeDtypeStruct((C, M), jnp.float32),
        grid_spec=pltpu.PrefetchScalarGridSpec(
            num_scalar_prefetch=0,
            grid=(1,),                               # full-M single block
            in_specs=[pl.BlockSpec((K, M), lambda i: (0, 0)),
                      pl.BlockSpec((C, K), lambda i: (0, 0)),
                      pl.BlockSpec((C, 1), lambda i: (0, 0)),
                      pl.BlockSpec((C, 1), lambda i: (0, 0))],
            out_specs=pl.BlockSpec((C, M), lambda i: (0, 0)),
        ),
        compiler_params=pltpu.CompilerParams(
            dimension_semantics=("arbitrary",),
            vmem_limit_bytes=_VMEM_BUDGET,
        ),
    )(pT.astype(MATMUL_DTYPE), wT.astype(MATMUL_DTYPE),
      gamma.reshape(C, 1).astype(jnp.float32),
      beta.reshape(C, 1).astype(jnp.float32))


def convt_tanh(pT, wT):
    """Final layer: matmul + tanh, chunked along lane-dim M (>=2 parallel steps
    on large M so both v7x TensorCores are used and input DMAs pipeline)."""
    K, M = pT.shape
    C, _ = wT.shape
    if M >= 4096 and M % 2048 == 0:
        n = M // 2048
    elif M >= 512 and M % 256 == 0:
        n = 2
    else:
        n = 1
    tm = M // n

    return pl.pallas_call(
        _convt_tanh_kernel,
        out_shape=jax.ShapeDtypeStruct((C, M), jnp.float32),
        grid_spec=pltpu.PrefetchScalarGridSpec(
            num_scalar_prefetch=0,
            grid=(n,),
            in_specs=[pl.BlockSpec((K, tm), lambda i: (0, i)),
                      pl.BlockSpec((C, K), lambda i: (0, 0))],
            out_specs=pl.BlockSpec((C, tm), lambda i: (0, i)),
        ),
        compiler_params=pltpu.CompilerParams(
            dimension_semantics=("parallel",),
            vmem_limit_bytes=_VMEM_BUDGET,
        ),
    )(pT.astype(MATMUL_DTYPE), wT.astype(MATMUL_DTYPE))


# -----------------------------------------------------------------------------
# JAX glue: ConvTranspose2d lowered to (zero-dilation + pad + transposed im2col)
# Activations live channel-first as (C, N, H, W) between layers so the lane dim
# of every kernel is the big spatial*batch axis and no per-layer NCHW<->NHWC
# transposes are needed.
# -----------------------------------------------------------------------------
def conv_transpose_patchesT(x_cnhw, kernel_size, stride, padding):
    """(C_in, N, H, W) -> transposed im2col patches (K, M).

    K = k*k*C_in ordered (kh, kw, c_in);  M = N*Ho*Wo ordered (n, ho, wo).
    Pure data movement (no FLOPs).
    # TODO(synk): fold this 16-tap loop into the Pallas kernel (or use the
    # stride-2 polyphase decomposition) to cut activation HBM bytes ~16x; skipped
    # here since every layer already fits a single VMEM-resident block.
    """
    C, N, H, W = x_cnhw.shape
    k = kernel_size
    if stride > 1:
        Hd, Wd = H + (H - 1) * (stride - 1), W + (W - 1) * (stride - 1)
        up = jnp.zeros((C, N, Hd, Wd), x_cnhw.dtype)
        up = up.at[:, :, ::stride, ::stride].set(x_cnhw)
    else:
        up, Hd, Wd = x_cnhw, H, W
    pad = k - 1 - padding
    up = jnp.pad(up, ((0, 0), (0, 0), (pad, pad), (pad, pad)))
    Hp, Wp = Hd + 2 * pad, Wd + 2 * pad
    Ho, Wo = Hp - k + 1, Wp - k + 1
    taps = [up[:, :, kh:kh + Ho, kw:kw + Wo] for kh in range(k) for kw in range(k)]
    patches = jnp.stack(taps, axis=0)                  # (k*k, C, N, Ho, Wo)
    return patches.reshape(k * k * C, N * Ho * Wo), (N, Ho, Wo)


def convtranspose_weight_to_matT(w_t):
    # PyTorch ConvTranspose2d weight: (Cin, Cout, K, K).
    Cin, Cout, K, _ = w_t.shape
    wf = w_t[:, :, ::-1, ::-1]                     # spatial flip
    wT = jnp.transpose(wf, (1, 2, 3, 0))           # (Cout, K, K, Cin)
    return wT.reshape(Cout, K * K * Cin)           # column order (kh, kw, cin)


LAYER_CFG = [(1, 0), (2, 1), (2, 1), (2, 1), (2, 1)]   # (stride, padding) per layer


def generator_forward(x, params):
    """x: (N, noise_dim, 1, 1) NCHW.  Returns (N, img_channels, 64, 64) NCHW."""
    h = jnp.transpose(x, (1, 0, 2, 3))             # (C, N, H, W) internal layout
    n_layers = len(params["weights"])
    for li, (w, (stride, padding)) in enumerate(zip(params["weights"], LAYER_CFG)):
        pT, (N, Ho, Wo) = conv_transpose_patchesT(h, 4, stride, padding)
        wT = convtranspose_weight_to_matT(w)
        C = wT.shape[0]
        if li == n_layers - 1:
            yT = convt_tanh(pT, wT)
        else:
            yT = fused_convt_bn_relu(pT, wT, params["gammas"][li], params["betas"][li])
        h = yT.reshape(C, N, Ho, Wo)
    return jnp.transpose(h, (1, 0, 2, 3))          # back to NCHW


# -----------------------------------------------------------------------------
# Pure-JAX reference (direct scatter definition of ConvTranspose2d) for checking
# -----------------------------------------------------------------------------
def conv_transpose_ref(x, w, stride, padding):
    N, Cin, H, W = x.shape
    _, Cout, K, _ = w.shape
    Ho = (H - 1) * stride - 2 * padding + K
    Wo = (W - 1) * stride - 2 * padding + K
    full = jnp.zeros((N, Cout, (H - 1) * stride + K, (W - 1) * stride + K), jnp.float32)
    for kh in range(K):
        for kw in range(K):
            contrib = jnp.einsum("nchw,cd->ndhw", x, w[:, :, kh, kw])
            full = full.at[:, :, kh:kh + (H - 1) * stride + 1:stride,
                           kw:kw + (W - 1) * stride + 1:stride].add(contrib)
    return full[:, :, padding:padding + Ho, padding:padding + Wo]


def reference_forward(x, params):
    h = x
    n_layers = len(params["weights"])
    for li, (w, (stride, padding)) in enumerate(zip(params["weights"], LAYER_CFG)):
        h = conv_transpose_ref(h, w, stride, padding)
        if li < n_layers - 1:
            mean = jnp.mean(h, axis=(0, 2, 3), keepdims=True)
            var = jnp.var(h, axis=(0, 2, 3), keepdims=True)
            g = params["gammas"][li].reshape(1, -1, 1, 1)
            b = params["betas"][li].reshape(1, -1, 1, 1)
            h = jnp.maximum((h - mean) / jnp.sqrt(var + 1e-5) * g + b, 0.0)
        else:
            h = jnp.tanh(h)
    return h


# -----------------------------------------------------------------------------
# Parameter construction (deterministic, DCGAN-style N(0, 0.02) weights;
# BN gamma=1, beta=0 matching PyTorch defaults)
# -----------------------------------------------------------------------------
def make_params(key, noise_dim, features, img_channels):
    chans = [noise_dim, features * 8, features * 4, features * 2, features, img_channels]
    weights, gammas, betas = [], [], []
    for li in range(5):
        key, wk = jax.random.split(key)
        cin, cout = chans[li], chans[li + 1]
        weights.append(0.02 * jax.random.normal(wk, (cin, cout, 4, 4), jnp.float32))
        if li < 4:
            gammas.append(jnp.ones((cout,), jnp.float32))
            betas.append(jnp.zeros((cout,), jnp.float32))
    return {"weights": weights, "gammas": gammas, "betas": betas}


if __name__ == "__main__":
    noise_dim, features, img_channels, batch = 32, 8, 3, 2

    key = jax.random.PRNGKey(0)
    key, xk = jax.random.split(key)
    params = make_params(key, noise_dim, features, img_channels)
    x = jax.random.normal(xk, (batch, noise_dim, 1, 1), jnp.float32)

    out = jax.jit(generator_forward)(x, params)
    out = jax.block_until_ready(out)
    assert out.shape == (batch, img_channels, 64, 64), out.shape

    ref = reference_forward(x, params)
    err = float(jnp.max(jnp.abs(out - ref)))
    assert err < 1e-3, f"mismatch vs reference: {err}"

    print("KERNEL_OK")
</pallas_src>

<mosaic_0001>
module attributes {stable_mosaic.version = 11 : i64} {
  func.func @_fused_convt_bn_relu_kernel(%arg0: i32, %arg1: memref<512x32xf32, #tpu.memory_space<vmem>>, %arg2: memref<64x512xf32, #tpu.memory_space<vmem>>, %arg3: memref<64x1xf32, #tpu.memory_space<vmem>>, %arg4: memref<64x1xf32, #tpu.memory_space<vmem>>, %arg5: memref<64x32xf32, #tpu.memory_space<vmem>>) attributes {dimension_semantics = [#tpu.dimension_semantics<arbitrary>], iteration_bounds = array<i64: 1>, scalar_prefetch = 0 : i64, scratch_operands = 0 : i64, tpu.core_type = #tpu.core_type<tc>, window_params = [{pipeline_mode = #tpu.pipeline_mode<synchronous>, transform_indices = @transform_0, window_bounds = array<i64: 512, 32>}, {pipeline_mode = #tpu.pipeline_mode<synchronous>, transform_indices = @transform_1, window_bounds = array<i64: 64, 512>}, {pipeline_mode = #tpu.pipeline_mode<synchronous>, transform_indices = @transform_2, window_bounds = array<i64: 64, 1>}, {pipeline_mode = #tpu.pipeline_mode<synchronous>, transform_indices = @transform_3, window_bounds = array<i64: 64, 1>}, {pipeline_mode = #tpu.pipeline_mode<synchronous>, transform_indices = @transform_4, window_bounds = array<i64: 64, 32>}]} {
    %c0 = arith.constant 0 : index
    %c0_0 = arith.constant 0 : index
    %0 = vector.load %arg2[%c0, %c0_0] : memref<64x512xf32, #tpu.memory_space<vmem>>, vector<64x512xf32>
    %c0_1 = arith.constant 0 : index
    %c0_2 = arith.constant 0 : index
    %1 = vector.load %arg1[%c0_1, %c0_2] : memref<512x32xf32, #tpu.memory_space<vmem>>, vector<512x32xf32>
    %cst = arith.constant dense<0.000000e+00> : vector<64x32xf32>
    %2 = tpu.matmul %0, %1, %cst {dimension_numbers = #tpu.dot_dimension_numbers<[1], [0], [0], [1], [0, 0, 1, 1], [], []>} : vector<64x512xf32>, vector<512x32xf32>, vector<64x32xf32> -> vector<64x32xf32>
    %cst_3 = arith.constant dense<0.000000e+00> : vector<64xf32>
    %3 = vector.multi_reduction <add>, %2, %cst_3 [1] : vector<64x32xf32> to vector<64xf32>
    %4 = vector.shape_cast %3 : vector<64xf32> to vector<64x1xf32>
    %cst_4 = arith.constant 3.200000e+01 : f32
    %5 = vector.broadcast %cst_4 : f32 to vector<64x1xf32>
    %6 = arith.divf %4, %5 : vector<64x1xf32>
    %7 = vector.broadcast %6 : vector<64x1xf32> to vector<64x32xf32>
    %8 = arith.subf %2, %7 : vector<64x32xf32>
    %9 = arith.mulf %8, %8 : vector<64x32xf32>
    %cst_5 = arith.constant dense<0.000000e+00> : vector<64xf32>
    %10 = vector.multi_reduction <add>, %9, %cst_5 [1] : vector<64x32xf32> to vector<64xf32>
    %11 = vector.shape_cast %10 : vector<64xf32> to vector<64x1xf32>
    %cst_6 = arith.constant 3.200000e+01 : f32
    %12 = vector.broadcast %cst_6 : f32 to vector<64x1xf32>
    %13 = arith.divf %11, %12 : vector<64x1xf32>
    %c0_7 = arith.constant 0 : index
    %c0_8 = arith.constant 0 : index
    %14 = vector.load %arg3[%c0_7, %c0_8] : memref<64x1xf32, #tpu.memory_space<vmem>>, vector<64x1xf32>
    %cst_9 = arith.constant 9.99999974E-6 : f32
    %15 = vector.broadcast %cst_9 : f32 to vector<64x1xf32>
    %16 = arith.addf %13, %15 : vector<64x1xf32>
    %17 = math.rsqrt %16 : vector<64x1xf32>
    %18 = arith.mulf %14, %17 : vector<64x1xf32>
    %19 = vector.broadcast %18 : vector<64x1xf32> to vector<64x32xf32>
    %20 = arith.mulf %8, %19 : vector<64x32xf32>
    %c0_10 = arith.constant 0 : index
    %c0_11 = arith.constant 0 : index
    %21 = vector.load %arg4[%c0_10, %c0_11] : memref<64x1xf32, #tpu.memory_space<vmem>>, vector<64x1xf32>
    %22 = vector.broadcast %21 : vector<64x1xf32> to vector<64x32xf32>
    %23 = arith.addf %20, %22 : vector<64x32xf32>
    %cst_12 = arith.constant 0.000000e+00 : f32
    %24 = vector.broadcast %cst_12 : f32 to vector<64x32xf32>
    %25 = arith.maximumf %23, %24 : vector<64x32xf32>
    %c0_13 = arith.constant 0 : index
    %c0_14 = arith.constant 0 : index
    %26 = vector.load %arg5[%c0_13, %c0_14] : memref<64x32xf32, #tpu.memory_space<vmem>>, vector<64x32xf32>
    tpu.vector_store %arg5[%c0_13, %c0_14], %25 {strides = array<i32>} : memref<64x32xf32, #tpu.memory_space<vmem>>, vector<64x32xf32>,
    return
  }
  func.func @transform_0(%arg0: i32) -> (i32, i32) {
    %c0_i32 = arith.constant 0 : i32
    %c0_i32_0 = arith.constant 0 : i32
    %c0_i32_1 = arith.constant 0 : i32
    return %c0_i32, %c0_i32_0 : i32, i32
  }
  func.func @transform_1(%arg0: i32) -> (i32, i32) {
    %c0_i32 = arith.constant 0 : i32
    %c0_i32_0 = arith.constant 0 : i32
    %c0_i32_1 = arith.constant 0 : i32
    return %c0_i32, %c0_i32_0 : i32, i32
  }
  func.func @transform_2(%arg0: i32) -> (i32, i32) {
    %c0_i32 = arith.constant 0 : i32
    %c0_i32_0 = arith.constant 0 : i32
    %c0_i32_1 = arith.constant 0 : i32
    return %c0_i32, %c0_i32_0 : i32, i32
  }
  func.func @transform_3(%arg0: i32) -> (i32, i32) {
    %c0_i32 = arith.constant 0 : i32
    %c0_i32_0 = arith.constant 0 : i32
    %c0_i32_1 = arith.constant 0 : i32
    return %c0_i32, %c0_i32_0 : i32, i32
  }
  func.func @transform_4(%arg0: i32) -> (i32, i32) {
    %c0_i32 = arith.constant 0 : i32
    %c0_i32_0 = arith.constant 0 : i32
    %c0_i32_1 = arith.constant 0 : i32
    return %c0_i32, %c0_i32_0 : i32, i32
  }
}

module attributes {stable_mosaic.version = 11 : i64} {
  func.func @_fused_convt_bn_relu_kernel(%arg0: i32, %arg1: memref<1024x128xf32, #tpu.memory_space<vmem>>, %arg2: memref<32x1024xf32, #tpu.memory_space<vmem>>, %arg3: memref<32x1xf32, #tpu.memory_space<vmem>>, %arg4: memref<32x1xf32, #tpu.memory_space<vmem>>, %arg5: memref<32x128xf32, #tpu.memory_space<vmem>>) attributes {dimension_semantics = [#tpu.dimension_semantics<arbitrary>], iteration_bounds = array<i64: 1>, scalar_prefetch = 0 : i64, scratch_operands = 0 : i64, tpu.core_type = #tpu.core_type<tc>, window_params = [{pipeline_mode = #tpu.pipeline_mode<synchronous>, transform_indices = @transform_0, window_bounds = array<i64: 1024, 128>}, {pipeline_mode = #tpu.pipeline_mode<synchronous>, transform_indices = @transform_1, window_bounds = array<i64: 32, 1024>}, {pipeline_mode = #tpu.pipeline_mode<synchronous>, transform_indices = @transform_2, window_bounds = array<i64: 32, 1>}, {pipeline_mode = #tpu.pipeline_mode<synchronous>, transform_indices = @transform_3, window_bounds = array<i64: 32, 1>}, {pipeline_mode = #tpu.pipeline_mode<synchronous>, transform_indices = @transform_4, window_bounds = array<i64: 32, 128>}]} {
    %c0 = arith.constant 0 : index
    %c0_0 = arith.constant 0 : index
    %0 = vector.load %arg2[%c0, %c0_0] : memref<32x1024xf32, #tpu.memory_space<vmem>>, vector<32x1024xf32>
    %c0_1 = arith.constant 0 : index
    %c0_2 = arith.constant 0 : index
    %1 = vector.load %arg1[%c0_1, %c0_2] : memref<1024x128xf32, #tpu.memory_space<vmem>>, vector<1024x128xf32>
    %cst = arith.constant dense<0.000000e+00> : vector<32x128xf32>
    %2 = tpu.matmul %0, %1, %cst {dimension_numbers = #tpu.dot_dimension_numbers<[1], [0], [0], [1], [0, 0, 1, 1], [], []>} : vector<32x1024xf32>, vector<1024x128xf32>, vector<32x128xf32> -> vector<32x128xf32>
    %cst_3 = arith.constant dense<0.000000e+00> : vector<32xf32>
    %3 = vector.multi_reduction <add>, %2, %cst_3 [1] : vector<32x128xf32> to vector<32xf32>
    %4 = vector.shape_cast %3 : vector<32xf32> to vector<32x1xf32>
    %cst_4 = arith.constant 1.280000e+02 : f32
    %5 = vector.broadcast %cst_4 : f32 to vector<32x1xf32>
    %6 = arith.divf %4, %5 : vector<32x1xf32>
    %7 = vector.broadcast %6 : vector<32x1xf32> to vector<32x128xf32>
    %8 = arith.subf %2, %7 : vector<32x128xf32>
    %9 = arith.mulf %8, %8 : vector<32x128xf32>
    %cst_5 = arith.constant dense<0.000000e+00> : vector<32xf32>
    %10 = vector.multi_reduction <add>, %9, %cst_5 [1] : vector<32x128xf32> to vector<32xf32>
    %11 = vector.shape_cast %10 : vector<32xf32> to vector<32x1xf32>
    %cst_6 = arith.constant 1.280000e+02 : f32
    %12 = vector.broadcast %cst_6 : f32 to vector<32x1xf32>
    %13 = arith.divf %11, %12 : vector<32x1xf32>
    %c0_7 = arith.constant 0 : index
    %c0_8 = arith.constant 0 : index
    %14 = vector.load %arg3[%c0_7, %c0_8] : memref<32x1xf32, #tpu.memory_space<vmem>>, vector<32x1xf32>
    %cst_9 = arith.constant 9.99999974E-6 : f32
    %15 = vector.broadcast %cst_9 : f32 to vector<32x1xf32>
    %16 = arith.addf %13, %15 : vector<32x1xf32>
    %17 = math.rsqrt %16 : vector<32x1xf32>
    %18 = arith.mulf %14, %17 : vector<32x1xf32>
    %19 = vector.broadcast %18 : vector<32x1xf32> to vector<32x128xf32>
    %20 = arith.mulf %8, %19 : vector<32x128xf32>
    %c0_10 = arith.constant 0 : index
    %c0_11 = arith.constant 0 : index
    %21 = vector.load %arg4[%c0_10, %c0_11] : memref<32x1xf32, #tpu.memory_space<vmem>>, vector<32x1xf32>
    %22 = vector.broadcast %21 : vector<32x1xf32> to vector<32x128xf32>
    %23 = arith.addf %20, %22 : vector<32x128xf32>
    %cst_12 = arith.constant 0.000000e+00 : f32
    %24 = vector.broadcast %cst_12 : f32 to vector<32x128xf32>
    %25 = arith.maximumf %23, %24 : vector<32x128xf32>
    %c0_13 = arith.constant 0 : index
    %c0_14 = arith.constant 0 : index
    %26 = vector.load %arg5[%c0_13, %c0_14] : memref<32x128xf32, #tpu.memory_space<vmem>>, vector<32x128xf32>
    tpu.vector_store %arg5[%c0_13, %c0_14], %25 {strides = array<i32>} : memref<32x128xf32, #tpu.memory_space<vmem>>, vector<32x128xf32>,
    return
  }
  func.func @transform_0(%arg0: i32) -> (i32, i32) {
    %c0_i32 = arith.constant 0 : i32
    %c0_i32_0 = arith.constant 0 : i32
    %c0_i32_1 = arith.constant 0 : i32
    return %c0_i32, %c0_i32_0 : i32, i32
  }
  func.func @transform_1(%arg0: i32) -> (i32, i32) {
    %c0_i32 = arith.constant 0 : i32
    %c0_i32_0 = arith.constant 0 : i32
    %c0_i32_1 = arith.constant 0 : i32
    return %c0_i32, %c0_i32_0 : i32, i32
  }
  func.func @transform_2(%arg0: i32) -> (i32, i32) {
    %c0_i32 = arith.constant 0 : i32
    %c0_i32_0 = arith.constant 0 : i32
    %c0_i32_1 = arith.constant 0 : i32
    return %c0_i32, %c0_i32_0 : i32, i32
  }
  func.func @transform_3(%arg0: i32) -> (i32, i32) {
    %c0_i32 = arith.constant 0 : i32
    %c0_i32_0 = arith.constant 0 : i32
    %c0_i32_1 = arith.constant 0 : i32
    return %c0_i32, %c0_i32_0 : i32, i32
  }
  func.func @transform_4(%arg0: i32) -> (i32, i32) {
    %c0_i32 = arith.constant 0 : i32
    %c0_i32_0 = arith.constant 0 : i32
    %c0_i32_1 = arith.constant 0 : i32
    return %c0_i32, %c0_i32_0 : i32, i32
  }
}

module attributes {stable_mosaic.version = 11 : i64} {
  func.func @_fused_convt_bn_relu_kernel(%arg0: i32, %arg1: memref<512x512xf32, #tpu.memory_space<vmem>>, %arg2: memref<16x512xf32, #tpu.memory_space<vmem>>, %arg3: memref<16x1xf32, #tpu.memory_space<vmem>>, %arg4: memref<16x1xf32, #tpu.memory_space<vmem>>, %arg5: memref<16x512xf32, #tpu.memory_space<vmem>>) attributes {dimension_semantics = [#tpu.dimension_semantics<arbitrary>], iteration_bounds = array<i64: 1>, scalar_prefetch = 0 : i64, scratch_operands = 0 : i64, tpu.core_type = #tpu.core_type<tc>, window_params = [{pipeline_mode = #tpu.pipeline_mode<synchronous>, transform_indices = @transform_0, window_bounds = array<i64: 512, 512>}, {pipeline_mode = #tpu.pipeline_mode<synchronous>, transform_indices = @transform_1, window_bounds = array<i64: 16, 512>}, {pipeline_mode = #tpu.pipeline_mode<synchronous>, transform_indices = @transform_2, window_bounds = array<i64: 16, 1>}, {pipeline_mode = #tpu.pipeline_mode<synchronous>, transform_indices = @transform_3, window_bounds = array<i64: 16, 1>}, {pipeline_mode = #tpu.pipeline_mode<synchronous>, transform_indices = @transform_4, window_bounds = array<i64: 16, 512>}]} {
    %c0 = arith.constant 0 : index
    %c0_0 = arith.constant 0 : index
    %0 = vector.load %arg2[%c0, %c0_0] : memref<16x512xf32, #tpu.memory_space<vmem>>, vector<16x512xf32>
    %c0_1 = arith.constant 0 : index
    %c0_2 = arith.constant 0 : index
    %1 = vector.load %arg1[%c0_1, %c0_2] : memref<512x512xf32, #tpu.memory_space<vmem>>, vector<512x512xf32>
    %cst = arith.constant dense<0.000000e+00> : vector<16x512xf32>
    %2 = tpu.matmul %0, %1, %cst {dimension_numbers = #tpu.dot_dimension_numbers<[1], [0], [0], [1], [0, 0, 1, 1], [], []>} : vector<16x512xf32>, vector<512x512xf32>, vector<16x512xf32> -> vector<16x512xf32>
    %cst_3 = arith.constant dense<0.000000e+00> : vector<16xf32>
    %3 = vector.multi_reduction <add>, %2, %cst_3 [1] : vector<16x512xf32> to vector<16xf32>
    %4 = vector.shape_cast %3 : vector<16xf32> to vector<16x1xf32>
    %cst_4 = arith.constant 5.120000e+02 : f32
    %5 = vector.broadcast %cst_4 : f32 to vector<16x1xf32>
    %6 = arith.divf %4, %5 : vector<16x1xf32>
    %7 = vector.broadcast %6 : vector<16x1xf32> to vector<16x512xf32>
    %8 = arith.subf %2, %7 : vector<16x512xf32>
    %9 = arith.mulf %8, %8 : vector<16x512xf32>
    %cst_5 = arith.constant dense<0.000000e+00> : vector<16xf32>
    %10 = vector.multi_reduction <add>, %9, %cst_5 [1] : vector<16x512xf32> to vector<16xf32>
    %11 = vector.shape_cast %10 : vector<16xf32> to vector<16x1xf32>
    %cst_6 = arith.constant 5.120000e+02 : f32
    %12 = vector.broadcast %cst_6 : f32 to vector<16x1xf32>
    %13 = arith.divf %11, %12 : vector<16x1xf32>
    %c0_7 = arith.constant 0 : index
    %c0_8 = arith.constant 0 : index
    %14 = vector.load %arg3[%c0_7, %c0_8] : memref<16x1xf32, #tpu.memory_space<vmem>>, vector<16x1xf32>
    %cst_9 = arith.constant 9.99999974E-6 : f32
    %15 = vector.broadcast %cst_9 : f32 to vector<16x1xf32>
    %16 = arith.addf %13, %15 : vector<16x1xf32>
    %17 = math.rsqrt %16 : vector<16x1xf32>
    %18 = arith.mulf %14, %17 : vector<16x1xf32>
    %19 = vector.broadcast %18 : vector<16x1xf32> to vector<16x512xf32>
    %20 = arith.mulf %8, %19 : vector<16x512xf32>
    %c0_10 = arith.constant 0 : index
    %c0_11 = arith.constant 0 : index
    %21 = vector.load %arg4[%c0_10, %c0_11] : memref<16x1xf32, #tpu.memory_space<vmem>>, vector<16x1xf32>
    %22 = vector.broadcast %21 : vector<16x1xf32> to vector<16x512xf32>
    %23 = arith.addf %20, %22 : vector<16x512xf32>
    %cst_12 = arith.constant 0.000000e+00 : f32
    %24 = vector.broadcast %cst_12 : f32 to vector<16x512xf32>
    %25 = arith.maximumf %23, %24 : vector<16x512xf32>
    %c0_13 = arith.constant 0 : index
    %c0_14 = arith.constant 0 : index
    %26 = vector.load %arg5[%c0_13, %c0_14] : memref<16x512xf32, #tpu.memory_space<vmem>>, vector<16x512xf32>
    tpu.vector_store %arg5[%c0_13, %c0_14], %25 {strides = array<i32>} : memref<16x512xf32, #tpu.memory_space<vmem>>, vector<16x512xf32>,
    return
  }
  func.func @transform_0(%arg0: i32) -> (i32, i32) {
    %c0_i32 = arith.constant 0 : i32
    %c0_i32_0 = arith.constant 0 : i32
    %c0_i32_1 = arith.constant 0 : i32
    return %c0_i32, %c0_i32_0 : i32, i32
  }
  func.func @transform_1(%arg0: i32) -> (i32, i32) {
    %c0_i32 = arith.constant 0 : i32
    %c0_i32_0 = arith.constant 0 : i32
    %c0_i32_1 = arith.constant 0 : i32
    return %c0_i32, %c0_i32_0 : i32, i32
  }
  func.func @transform_2(%arg0: i32) -> (i32, i32) {
    %c0_i32 = arith.constant 0 : i32
    %c0_i32_0 = arith.constant 0 : i32
    %c0_i32_1 = arith.constant 0 : i32
    return %c0_i32, %c0_i32_0 : i32, i32
  }
  func.func @transform_3(%arg0: i32) -> (i32, i32) {
    %c0_i32 = arith.constant 0 : i32
    %c0_i32_0 = arith.constant 0 : i32
    %c0_i32_1 = arith.constant 0 : i32
    return %c0_i32, %c0_i32_0 : i32, i32
  }
  func.func @transform_4(%arg0: i32) -> (i32, i32) {
    %c0_i32 = arith.constant 0 : i32
    %c0_i32_0 = arith.constant 0 : i32
    %c0_i32_1 = arith.constant 0 : i32
    return %c0_i32, %c0_i32_0 : i32, i32
  }
}

module attributes {stable_mosaic.version = 11 : i64} {
  func.func @_fused_convt_bn_relu_kernel(%arg0: i32, %arg1: memref<256x2048xf32, #tpu.memory_space<vmem>>, %arg2: memref<8x256xf32, #tpu.memory_space<vmem>>, %arg3: memref<8x1xf32, #tpu.memory_space<vmem>>, %arg4: memref<8x1xf32, #tpu.memory_space<vmem>>, %arg5: memref<8x2048xf32, #tpu.memory_space<vmem>>) attributes {dimension_semantics = [#tpu.dimension_semantics<arbitrary>], iteration_bounds = array<i64: 1>, scalar_prefetch = 0 : i64, scratch_operands = 0 : i64, tpu.core_type = #tpu.core_type<tc>, window_params = [{pipeline_mode = #tpu.pipeline_mode<synchronous>, transform_indices = @transform_0, window_bounds = array<i64: 256, 2048>}, {pipeline_mode = #tpu.pipeline_mode<synchronous>, transform_indices = @transform_1, window_bounds = array<i64: 8, 256>}, {pipeline_mode = #tpu.pipeline_mode<synchronous>, transform_indices = @transform_2, window_bounds = array<i64: 8, 1>}, {pipeline_mode = #tpu.pipeline_mode<synchronous>, transform_indices = @transform_3, window_bounds = array<i64: 8, 1>}, {pipeline_mode = #tpu.pipeline_mode<synchronous>, transform_indices = @transform_4, window_bounds = array<i64: 8, 2048>}]} {
    %c0 = arith.constant 0 : index
    %c0_0 = arith.constant 0 : index
    %0 = vector.load %arg2[%c0, %c0_0] : memref<8x256xf32, #tpu.memory_space<vmem>>, vector<8x256xf32>
    %c0_1 = arith.constant 0 : index
    %c0_2 = arith.constant 0 : index
    %1 = vector.load %arg1[%c0_1, %c0_2] : memref<256x2048xf32, #tpu.memory_space<vmem>>, vector<256x2048xf32>
    %cst = arith.constant dense<0.000000e+00> : vector<8x2048xf32>
    %2 = tpu.matmul %0, %1, %cst {dimension_numbers = #tpu.dot_dimension_numbers<[1], [0], [0], [1], [0, 0, 1, 1], [], []>} : vector<8x256xf32>, vector<256x2048xf32>, vector<8x2048xf32> -> vector<8x2048xf32>
    %cst_3 = arith.constant dense<0.000000e+00> : vector<8xf32>
    %3 = vector.multi_reduction <add>, %2, %cst_3 [1] : vector<8x2048xf32> to vector<8xf32>
    %4 = vector.shape_cast %3 : vector<8xf32> to vector<8x1xf32>
    %cst_4 = arith.constant 2.048000e+03 : f32
    %5 = vector.broadcast %cst_4 : f32 to vector<8x1xf32>
    %6 = arith.divf %4, %5 : vector<8x1xf32>
    %7 = vector.broadcast %6 : vector<8x1xf32> to vector<8x2048xf32>
    %8 = arith.subf %2, %7 : vector<8x2048xf32>
    %9 = arith.mulf %8, %8 : vector<8x2048xf32>
    %cst_5 = arith.constant dense<0.000000e+00> : vector<8xf32>
    %10 = vector.multi_reduction <add>, %9, %cst_5 [1] : vector<8x2048xf32> to vector<8xf32>
    %11 = vector.shape_cast %10 : vector<8xf32> to vector<8x1xf32>
    %cst_6 = arith.constant 2.048000e+03 : f32
    %12 = vector.broadcast %cst_6 : f32 to vector<8x1xf32>
    %13 = arith.divf %11, %12 : vector<8x1xf32>
    %c0_7 = arith.constant 0 : index
    %c0_8 = arith.constant 0 : index
    %14 = vector.load %arg3[%c0_7, %c0_8] : memref<8x1xf32, #tpu.memory_space<vmem>>, vector<8x1xf32>
    %cst_9 = arith.constant 9.99999974E-6 : f32
    %15 = vector.broadcast %cst_9 : f32 to vector<8x1xf32>
    %16 = arith.addf %13, %15 : vector<8x1xf32>
    %17 = math.rsqrt %16 : vector<8x1xf32>
    %18 = arith.mulf %14, %17 : vector<8x1xf32>
    %19 = vector.broadcast %18 : vector<8x1xf32> to vector<8x2048xf32>
    %20 = arith.mulf %8, %19 : vector<8x2048xf32>
    %c0_10 = arith.constant 0 : index
    %c0_11 = arith.constant 0 : index
    %21 = vector.load %arg4[%c0_10, %c0_11] : memref<8x1xf32, #tpu.memory_space<vmem>>, vector<8x1xf32>
    %22 = vector.broadcast %21 : vector<8x1xf32> to vector<8x2048xf32>
    %23 = arith.addf %20, %22 : vector<8x2048xf32>
    %cst_12 = arith.constant 0.000000e+00 : f32
    %24 = vector.broadcast %cst_12 : f32 to vector<8x2048xf32>
    %25 = arith.maximumf %23, %24 : vector<8x2048xf32>
    %c0_13 = arith.constant 0 : index
    %c0_14 = arith.constant 0 : index
    %26 = vector.load %arg5[%c0_13, %c0_14] : memref<8x2048xf32, #tpu.memory_space<vmem>>, vector<8x2048xf32>
    tpu.vector_store %arg5[%c0_13, %c0_14], %25 {strides = array<i32>} : memref<8x2048xf32, #tpu.memory_space<vmem>>, vector<8x2048xf32>,
    return
  }
  func.func @transform_0(%arg0: i32) -> (i32, i32) {
    %c0_i32 = arith.constant 0 : i32
    %c0_i32_0 = arith.constant 0 : i32
    %c0_i32_1 = arith.constant 0 : i32
    return %c0_i32, %c0_i32_0 : i32, i32
  }
  func.func @transform_1(%arg0: i32) -> (i32, i32) {
    %c0_i32 = arith.constant 0 : i32
    %c0_i32_0 = arith.constant 0 : i32
    %c0_i32_1 = arith.constant 0 : i32
    return %c0_i32, %c0_i32_0 : i32, i32
  }
  func.func @transform_2(%arg0: i32) -> (i32, i32) {
    %c0_i32 = arith.constant 0 : i32
    %c0_i32_0 = arith.constant 0 : i32
    %c0_i32_1 = arith.constant 0 : i32
    return %c0_i32, %c0_i32_0 : i32, i32
  }
  func.func @transform_3(%arg0: i32) -> (i32, i32) {
    %c0_i32 = arith.constant 0 : i32
    %c0_i32_0 = arith.constant 0 : i32
    %c0_i32_1 = arith.constant 0 : i32
    return %c0_i32, %c0_i32_0 : i32, i32
  }
  func.func @transform_4(%arg0: i32) -> (i32, i32) {
    %c0_i32 = arith.constant 0 : i32
    %c0_i32_0 = arith.constant 0 : i32
    %c0_i32_1 = arith.constant 0 : i32
    return %c0_i32, %c0_i32_0 : i32, i32
  }
}

module attributes {stable_mosaic.version = 11 : i64} {
  func.func @_convt_tanh_kernel(%arg0: i32, %arg1: memref<128x2048xf32, #tpu.memory_space<vmem>>, %arg2: memref<3x128xf32, #tpu.memory_space<vmem>>, %arg3: memref<3x2048xf32, #tpu.memory_space<vmem>>) attributes {dimension_semantics = [#tpu.dimension_semantics<parallel>], iteration_bounds = array<i64: 4>, scalar_prefetch = 0 : i64, scratch_operands = 0 : i64, tpu.core_type = #tpu.core_type<tc>, window_params = [{transform_indices = @transform_0, window_bounds = array<i64: 128, 2048>}, {pipeline_mode = #tpu.pipeline_mode<synchronous>, transform_indices = @transform_1, window_bounds = array<i64: 3, 128>}, {transform_indices = @transform_2, window_bounds = array<i64: 3, 2048>}]} {
    %c0 = arith.constant 0 : index
    %c0_0 = arith.constant 0 : index
    %0 = vector.load %arg2[%c0, %c0_0] : memref<3x128xf32, #tpu.memory_space<vmem>>, vector<3x128xf32>
    %c0_1 = arith.constant 0 : index
    %c0_2 = arith.constant 0 : index
    %1 = vector.load %arg1[%c0_1, %c0_2] : memref<128x2048xf32, #tpu.memory_space<vmem>>, vector<128x2048xf32>
    %cst = arith.constant dense<0.000000e+00> : vector<3x2048xf32>
    %2 = tpu.matmul %0, %1, %cst {dimension_numbers = #tpu.dot_dimension_numbers<[1], [0], [0], [1], [0, 0, 1, 1], [], []>} : vector<3x128xf32>, vector<128x2048xf32>, vector<3x2048xf32> -> vector<3x2048xf32>
    %3 = math.tanh %2 : vector<3x2048xf32>
    %c0_3 = arith.constant 0 : index
    %c0_4 = arith.constant 0 : index
    %4 = vector.load %arg3[%c0_3, %c0_4] : memref<3x2048xf32, #tpu.memory_space<vmem>>, vector<3x2048xf32>
    tpu.vector_store %arg3[%c0_3, %c0_4], %3 {strides = array<i32>} : memref<3x2048xf32, #tpu.memory_space<vmem>>, vector<3x2048xf32>,
    return
  }
  func.func @transform_0(%arg0: i32) -> (i32, i32) {
    %c0_i32 = arith.constant 0 : i32
    %c0_i32_0 = arith.constant 0 : i32
    return %c0_i32, %arg0 : i32, i32
  }
  func.func @transform_1(%arg0: i32) -> (i32, i32) {
    %c0_i32 = arith.constant 0 : i32
    %c0_i32_0 = arith.constant 0 : i32
    %c0_i32_1 = arith.constant 0 : i32
    return %c0_i32, %c0_i32_0 : i32, i32
  }
  func.func @transform_2(%arg0: i32) -> (i32, i32) {
    %c0_i32 = arith.constant 0 : i32
    %c0_i32_0 = arith.constant 0 : i32
    return %c0_i32, %arg0 : i32, i32
  }
}

</mosaic_0001>

<llo_original>
// kernel: generator_forward.5
$region0: #{generator_forward.5}
  #allocation0 [shape = 'u32[]', space=smem, size = 0x4, offset = 0x4, fixed_abs, tag = 'smem constant byte address 0x4 - core index']
  #allocation1 [shape = 'u32[144,128]{1,0:T(1,128)}', space=vmem, size = 0x12000, scoped, tag = 'internal scratch']
  %s0 = inlined_call_operand.vmem [shape: f32[512,32], index: 0, kind: input, shape index: {}]
  %s1 = inlined_call_operand.vmem [shape: f32[64,512], index: 1, kind: input, shape index: {}]
  %s2 = inlined_call_operand.vmem [shape: f32[64,1], index: 2, kind: input, shape index: {}]
  %s3 = inlined_call_operand.vmem [shape: f32[64,1], index: 3, kind: input, shape index: {}]
  %s4 = inlined_call_operand.vmem [shape: f32[64,32], index: 4, kind: output, shape index: {}]
  %s5 = sld [smem:[#allocation0]]
  $region26: #{generator_forward.5} parent=0
    _
  %s7 = ssub.s32 1, %s5
  %s8 = scalar_select 0, %s7, %s5
  // Predicated region
  $region2: #{generator_forward.5} parent=0 // pred_check
    _
  $region3: #{generator_forward.5} parent=0 // pred_check_branch
    %10 = sbr.rel (0) target = $region5
  $region4: #{generator_forward.5} parent=0 // pred_region
    _
  $region5: #{generator_forward.5} parent=0 // pred_fallthru
    _
  // Predicated region
  $region6: #{generator_forward.5} parent=0 // pred_check
    _
  $region7: #{generator_forward.5} parent=0 // pred_check_branch
    %12 = sbr.rel (0) target = $region9
  $region8: #{generator_forward.5} parent=0 // pred_region
    _
  $region9: #{generator_forward.5} parent=0 // pred_fallthru
    _
  // Predicated region
  $region10: #{generator_forward.5} parent=0 // pred_check
    _
  $region11: #{generator_forward.5} parent=0 // pred_check_branch
    %14 = sbr.rel (0) target = $region13
  $region12: #{generator_forward.5} parent=0 // pred_region
    _
  $region13: #{generator_forward.5} parent=0 // pred_fallthru
    _
  // Predicated region
  $region14: #{generator_forward.5} parent=0 // pred_check
    _
  $region15: #{generator_forward.5} parent=0 // pred_check_branch
    %16 = sbr.rel (0) target = $region17
  $region16: #{generator_forward.5} parent=0 // pred_region
    _
  $region17: #{generator_forward.5} parent=0 // pred_fallthru
    _
  %v17 = vld [vmem:[%s1] sm:$0xff]
  %v18 = vld [vmem:[%s1 + $0x8] sm:$0xff]
  %v19 = vld [vmem:[%s1 + $0x10] sm:$0xff]
  %v20 = vld [vmem:[%s1 + $0x18] sm:$0xff]
  %v21 = vld [vmem:[%s1 + $0x20] sm:$0xff]
  %v22 = vld [vmem:[%s1 + $0x28] sm:$0xff]
  %v23 = vld [vmem:[%s1 + $0x30] sm:$0xff]
  %v24 = vld [vmem:[%s1 + $0x38] sm:$0xff]
  %v25 = vld [vmem:[%s1 + $0x40] sm:$0xff]
  %v26 = vld [vmem:[%s1 + $0x48] sm:$0xff]
  %v27 = vld [vmem:[%s1 + $0x50] sm:$0xff]
  %v28 = vld [vmem:[%s1 + $0x58] sm:$0xff]
  %v29 = vld [vmem:[%s1 + $0x60] sm:$0xff]
  %v30 = vld [vmem:[%s1 + $0x68] sm:$0xff]
  %v31 = vld [vmem:[%s1 + $0x70] sm:$0xff]
  %v32 = vld [vmem:[%s1 + $0x78] sm:$0xff]
  %v33 = vld [vmem:[%s1 + $0x80] sm:$0xff]
  %v34 = vld [vmem:[%s1 + $0x88] sm:$0xff]
  %v35 = vld [vmem:[%s1 + $0x90] sm:$0xff]
  %v36 = vld [vmem:[%s1 + $0x98] sm:$0xff]
  %v37 = vld [vmem:[%s1 + $0xa0] sm:$0xff]
  %v38 = vld [vmem:[%s1 + $0xa8] sm:$0xff]
  %v39 = vld [vmem:[%s1 + $0xb0] sm:$0xff]
  %v40 = vld [vmem:[%s1 + $0xb8] sm:$0xff]
  %v41 = vld [vmem:[%s1 + $0xc0] sm:$0xff]
  %v42 = vld [vmem:[%s1 + $0xc8] sm:$0xff]
  %v43 = vld [vmem:[%s1 + $0xd0] sm:$0xff]
  %v44 = vld [vmem:[%s1 + $0xd8] sm:$0xff]
  %v45 = vld [vmem:[%s1 + $0xe0] sm:$0xff]
  %v46 = vld [vmem:[%s1 + $0xe8] sm:$0xff]
  %v47 = vld [vmem:[%s1 + $0xf0] sm:$0xff]
  %v48 = vld [vmem:[%s1 + $0xf8] sm:$0xff]
  %v49 = vld [vmem:[%s0] sm:$0xff]
  %v50 = vld [vmem:[%s0 + $0x8] sm:$0xff]
  %v51 = vld [vmem:[%s0 + $0x10] sm:$0xff]
  %v52 = vld [vmem:[%s0 + $0x18] sm:$0xff]
  %v53 = vld [vmem:[%s0 + $0x20] sm:$0xff]
  %v54 = vld [vmem:[%s0 + $0x28] sm:$0xff]
  %v55 = vld [vmem:[%s0 + $0x30] sm:$0xff]
  %v56 = vld [vmem:[%s0 + $0x38] sm:$0xff]
  %v57 = vld [vmem:[%s0 + $0x40] sm:$0xff]
  %v58 = vld [vmem:[%s0 + $0x48] sm:$0xff]
  %v59 = vld [vmem:[%s0 + $0x50] sm:$0xff]
  %v60 = vld [vmem:[%s0 + $0x58] sm:$0xff]
  %v61 = vld [vmem:[%s0 + $0x60] sm:$0xff]
  %v62 = vld [vmem:[%s0 + $0x68] sm:$0xff]
  %v63 = vld [vmem:[%s0 + $0x70] sm:$0xff]
  %v64 = vld [vmem:[%s0 + $0x78] sm:$0xff]
  %v65 = vld [vmem:[%s0 + $0x80] sm:$0xff]
  %v66 = vld [vmem:[%s0 + $0x88] sm:$0xff]
  %v67 = vld [vmem:[%s0 + $0x90] sm:$0xff]
  %v68 = vld [vmem:[%s0 + $0x98] sm:$0xff]
  %v69 = vld [vmem:[%s0 + $0xa0] sm:$0xff]
  %v70 = vld [vmem:[%s0 + $0xa8] sm:$0xff]
  %v71 = vld [vmem:[%s0 + $0xb0] sm:$0xff]
  %v72 = vld [vmem:[%s0 + $0xb8] sm:$0xff]
  %v73 = vld [vmem:[%s0 + $0xc0] sm:$0xff]
  %v74 = vld [vmem:[%s0 + $0xc8] sm:$0xff]
  %v75 = vld [vmem:[%s0 + $0xd0] sm:$0xff]
  %v76 = vld [vmem:[%s0 + $0xd8] sm:$0xff]
  %v77 = vld [vmem:[%s0 + $0xe0] sm:$0xff]
  %v78 = vld [vmem:[%s0 + $0xe8] sm:$0xff]
  %v79 = vld [vmem:[%s0 + $0xf0] sm:$0xff]
  %v80 = vld [vmem:[%s0 + $0xf8] sm:$0xff]
  %v81 = vld [vmem:[%s0 + $0x100] sm:$0xff]
  %v82 = vld [vmem:[%s0 + $0x108] sm:$0xff]
  %v83 = vld [vmem:[%s0 + $0x110] sm:$0xff]
  %v84 = vld [vmem:[%s0 + $0x118] sm:$0xff]
  %v85 = vld [vmem:[%s0 + $0x120] sm:$0xff]
  %v86 = vld [vmem:[%s0 + $0x128] sm:$0xff]
  %v87 = vld [vmem:[%s0 + $0x130] sm:$0xff]
  %v88 = vld [vmem:[%s0 + $0x138] sm:$0xff]
  %v89 = vld [vmem:[%s0 + $0x140] sm:$0xff]
  %v90 = vld [vmem:[%s0 + $0x148] sm:$0xff]
  %v91 = vld [vmem:[%s0 + $0x150] sm:$0xff]
  %v92 = vld [vmem:[%s0 + $0x158] sm:$0xff]
  %v93 = vld [vmem:[%s0 + $0x160] sm:$0xff]
  %v94 = vld [vmem:[%s0 + $0x168] sm:$0xff]
  %v95 = vld [vmem:[%s0 + $0x170] sm:$0xff]
  %v96 = vld [vmem:[%s0 + $0x178] sm:$0xff]
  %v97 = vld [vmem:[%s0 + $0x180] sm:$0xff]
  %v98 = vld [vmem:[%s0 + $0x188] sm:$0xff]
  %v99 = vld [vmem:[%s0 + $0x190] sm:$0xff]
  %v100 = vld [vmem:[%s0 + $0x198] sm:$0xff]
  %v101 = vld [vmem:[%s0 + $0x1a0] sm:$0xff]
  %v102 = vld [vmem:[%s0 + $0x1a8] sm:$0xff]
  %v103 = vld [vmem:[%s0 + $0x1b0] sm:$0xff]
  %v104 = vld [vmem:[%s0 + $0x1b8] sm:$0xff]
  %v105 = vld [vmem:[%s0 + $0x1c0] sm:$0xff]
  %v106 = vld [vmem:[%s0 + $0x1c8] sm:$0xff]
  %v107 = vld [vmem:[%s0 + $0x1d0] sm:$0xff]
  %v108 = vld [vmem:[%s0 + $0x1d8] sm:$0xff]
  %v109 = vld [vmem:[%s0 + $0x1e0] sm:$0xff]
  %v110 = vld [vmem:[%s0 + $0x1e8] sm:$0xff]
  %v111 = vld [vmem:[%s0 + $0x1f0] sm:$0xff]
  %v112 = vld [vmem:[%s0 + $0x1f8] sm:$0xff]
  %113 = vmatprep.subr.mxu0 0.0
  %114 = vmatpush1.msra.mxu0 %v49
  %115 = vmatprep.subr.mxu0 0.0
  %116 = vmatpush1.msra.mxu0 %v50
  %117 = vmatprep.subr.mxu0 0.0
  %118 = vmatpush1.msra.mxu0 %v51
  %119 = vmatprep.subr.mxu0 0.0
  %120 = vmatpush1.msra.mxu0 %v52
  %121 = vmatprep.subr.mxu0 0.0
  %122 = vmatpush1.msra.mxu0 %v53
  %123 = vmatprep.subr.mxu0 0.0
  %124 = vmatpush1.msra.mxu0 %v54
  %125 = vmatprep.subr.mxu0 0.0
  %126 = vmatpush1.msra.mxu0 %v55
  %127 = vmatprep.subr.mxu0 0.0
  %128 = vmatpush1.msra.mxu0 %v56
  %129 = vmatprep.subr.mxu0 0.0
  %130 = vmatpush1.msra.mxu0 %v57
  %131 = vmatprep.subr.mxu0 0.0
  %132 = vmatpush1.msra.mxu0 %v58
  %133 = vmatprep.subr.mxu0 0.0
  %134 = vmatpush1.msra.mxu0 %v59
  %135 = vmatprep.subr.mxu0 0.0
  %136 = vmatpush1.msra.mxu0 %v60
  %137 = vmatprep.subr.mxu0 0.0
  %138 = vmatpush1.msra.mxu0 %v61
  %139 = vmatprep.subr.mxu0 0.0
  %140 = vmatpush1.msra.mxu0 %v62
  %141 = vmatprep.subr.mxu0 0.0
  %142 = vmatpush1.msra.mxu0 %v63
  %143 = vmatprep.subr.mxu0 0.0
  %144 = vmatpush1.msra.mxu0 %v64
  %145 = vmatprep.subr.mxu0 0.0
  %146 = vmatpush1.msra.mxu0 %v65
  %147 = vmatprep.subr.mxu0 0.0
  %148 = vmatpush1.msra.mxu0 %v66
  %149 = vmatprep.subr.mxu0 0.0
  %150 = vmatpush1.msra.mxu0 %v67
  %151 = vmatprep.subr.mxu0 0.0
  %152 = vmatpush1.msra.mxu0 %v68
  %153 = vmatprep.subr.mxu0 0.0
  %154 = vmatpush1.msra.mxu0 %v69
  %155 = vmatprep.subr.mxu0 0.0
  %156 = vmatpush1.msra.mxu0 %v70
  %157 = vmatprep.subr.mxu0 0.0
  %158 = vmatpush1.msra.mxu0 %v71
  %159 = vmatprep.subr.mxu0 0.0
  %160 = vmatpush1.msra.mxu0 %v72
  %161 = vmatprep.subr.mxu0 0.0
  %162 = vmatpush1.msra.mxu0 %v73
  %163 = vmatprep.subr.mxu0 0.0
  %164 = vmatpush1.msra.mxu0 %v74
  %165 = vmatprep.subr.mxu0 0.0
  %166 = vmatpush1.msra.mxu0 %v75
  %167 = vmatprep.subr.mxu0 0.0
  %168 = vmatpush1.msra.mxu0 %v76
  %169 = vmatprep.subr.mxu0 0.0
  %170 = vmatpush1.msra.mxu0 %v77
  %171 = vmatprep.subr.mxu0 0.0
  %172 = vmatpush1.msra.mxu0 %v78
  %173 = vmatprep.subr.mxu0 0.0
  %174 = vmatpush1.msra.mxu0 %v79
  %175 = vmatprep.subr.mxu0 0.0
  %176 = vmatpush1.msra.mxu0 %v80
  %177 = vmatprep.mubr.f32.mxu0 %v18
  %178 = vmatmul.mubr.f32.gmra.mrb[0].mxu0 %v17
  %v179 = vpop.f32.mrb[0].mxu0
  %v180 = vadd.f32 0.0, %v179
  %v181 = vpop.f32.mrb[0].mxu0
  %182 = vmatprep.mubr.f32.mxu0 %v22
  %183 = vmatmul.mubr.f32.gmra.mrb[0].mxu0 %v21
  %v184 = vpop.f32.mrb[0].mxu0
  %v185 = vadd.f32 0.0, %v184
  %v186 = vpop.f32.mrb[0].mxu0
  %187 = vmatprep.mubr.f32.mxu0 %v26
  %188 = vmatmul.mubr.f32.gmra.mrb[0].mxu0 %v25
  %v189 = vpop.f32.mrb[0].mxu0
  %v190 = vadd.f32 0.0, %v189
  %v191 = vpop.f32.mrb[0].mxu0
  %192 = vmatprep.mubr.f32.mxu0 %v30
  %193 = vmatmul.mubr.f32.gmra.mrb[0].mxu0 %v29
  %v194 = vpop.f32.mrb[0].mxu0
  %v195 = vadd.f32 0.0, %v194
  %v196 = vpop.f32.mrb[0].mxu0
  %197 = vmatprep.mubr.f32.mxu0 %v34
  %198 = vmatmul.mubr.f32.gmra.mrb[0].mxu0 %v33
  %v199 = vpop.f32.mrb[0].mxu0
  %v200 = vadd.f32 0.0, %v199
  %v201 = vpop.f32.mrb[0].mxu0
  %202 = vmatprep.mubr.f32.mxu0 %v38
  %203 = vmatmul.mubr.f32.gmra.mrb[0].mxu0 %v37
  %v204 = vpop.f32.mrb[0].mxu0
  %v205 = vadd.f32 0.0, %v204
  %v206 = vpop.f32.mrb[0].mxu0
  %207 = vmatprep.mubr.f32.mxu0 %v42
  %208 = vmatmul.mubr.f32.gmra.mrb[0].mxu0 %v41
  %v209 = vpop.f32.mrb[0].mxu0
  %v210 = vadd.f32 0.0, %v209
  %v211 = vpop.f32.mrb[0].mxu0
  %212 = vmatprep.mubr.f32.mxu0 %v46
  %213 = vmatmul.mubr.f32.gmra.mrb[0].mxu0 %v45
  %v214 = vpop.f32.mrb[0].mxu0
  %v215 = vadd.f32 0.0, %v214
  %v216 = vpop.f32.mrb[0].mxu0
  %217 = vdwg.mxu0
  %218 = vmatprep.subr.mxu0 0.0
  %219 = vmatpush1.msra.mxu0 %v81
  %220 = vmatprep.subr.mxu0 0.0
  %221 = vmatpush1.msra.mxu0 %v82
  %222 = vmatprep.subr.mxu0 0.0
  %223 = vmatpush1.msra.mxu0 %v83
  %224 = vmatprep.subr.mxu0 0.0
  %225 = vmatpush1.msra.mxu0 %v84
  %226 = vmatprep.subr.mxu0 0.0
  %227 = vmatpush1.msra.mxu0 %v85
  %228 = vmatprep.subr.mxu0 0.0
  %229 = vmatpush1.msra.mxu0 %v86
  %230 = vmatprep.subr.mxu0 0.0
  %231 = vmatpush1.msra.mxu0 %v87
  %232 = vmatprep.subr.mxu0 0.0
  %233 = vmatpush1.msra.mxu0 %v88
  %234 = vmatprep.subr.mxu0 0.0
  %235 = vmatpush1.msra.mxu0 %v89
  %236 = vmatprep.subr.mxu0 0.0
  %237 = vmatpush1.msra.mxu0 %v90
  %238 = vmatprep.subr.mxu0 0.0
  %239 = vmatpush1.msra.mxu0 %v91
  %240 = vmatprep.subr.mxu0 0.0
  %241 = vmatpush1.msra.mxu0 %v92
  %242 = vmatprep.subr.mxu0 0.0
  %243 = vmatpush1.msra.mxu0 %v93
  %244 = vmatprep.subr.mxu0 0.0
  %245 = vmatpush1.msra.mxu0 %v94
  %246 = vmatprep.subr.mxu0 0.0
  %247 = vmatpush1.msra.mxu0 %v95
  %248 = vmatprep.subr.mxu0 0.0
  %249 = vmatpush1.msra.mxu0 %v96
  %250 = vmatprep.subr.mxu0 0.0
  %251 = vmatpush1.msra.mxu0 %v97
  %252 = vmatprep.subr.mxu0 0.0
  %253 = vmatpush1.msra.mxu0 %v98
  %254 = vmatprep.subr.mxu0 0.0
  %255 = vmatpush1.msra.mxu0 %v99
  %256 = vmatprep.subr.mxu0 0.0
  %257 = vmatpush1.msra.mxu0 %v100
  %258 = vmatprep.subr.mxu0 0.0
  %259 = vmatpush1.msra.mxu0 %v101
  %260 = vmatprep.subr.mxu0 0.0
  %261 = vmatpush1.msra.mxu0 %v102
  %262 = vmatprep.subr.mxu0 0.0
  %263 = vmatpush1.msra.mxu0 %v103
  %264 = vmatprep.subr.mxu0 0.0
  %265 = vmatpush1.msra.mxu0 %v104
  %266 = vmatprep.subr.mxu0 0.0
  %267 = vmatpush1.msra.mxu0 %v105
  %268 = vmatprep.subr.mxu0 0.0
  %269 = vmatpush1.msra.mxu0 %v106
  %270 = vmatprep.subr.mxu0 0.0
  %271 = vmatpush1.msra.mxu0 %v107
  %272 = vmatprep.subr.mxu0 0.0
  %273 = vmatpush1.msra.mxu0 %v108
  %274 = vmatprep.subr.mxu0 0.0
  %275 = vmatpush1.msra.mxu0 %v109
  %276 = vmatprep.subr.mxu0 0.0
  %277 = vmatpush1.msra.mxu0 %v110
  %278 = vmatprep.subr.mxu0 0.0
  %279 = vmatpush1.msra.mxu0 %v111
  %280 = vmatprep.subr.mxu0 0.0
  %281 = vmatpush1.msra.mxu0 %v112
  %282 = vmatprep.mubr.f32.mxu0 %v20
  %283 = vmatmul.mubr.f32.gmra.mrb[0].mxu0 %v19
  %v284 = vpop.f32.mrb[0].mxu0
  %v285 = vadd.f32 %v180, %v284
  %v286 = vpop.f32.mrb[0].mxu0
  %287 = vmatprep.mubr.f32.mxu0 %v24
  %288 = vmatmul.mubr.f32.gmra.mrb[0].mxu0 %v23
  %v289 = vpop.f32.mrb[0].mxu0
  %v290 = vadd.f32 %v185, %v289
  %v291 = vpop.f32.mrb[0].mxu0
  %292 = vmatprep.mubr.f32.mxu0 %v28
  %293 = vmatmul.mubr.f32.gmra.mrb[0].mxu0 %v27
  %v294 = vpop.f32.mrb[0].mxu0
  %v295 = vadd.f32 %v190, %v294
  %v296 = vpop.f32.mrb[0].mxu0
  %297 = vmatprep.mubr.f32.mxu0 %v32
  %298 = vmatmul.mubr.f32.gmra.mrb[0].mxu0 %v31
  %v299 = vpop.f32.mrb[0].mxu0
  %v300 = vadd.f32 %v195, %v299
  %v301 = vpop.f32.mrb[0].mxu0
  %302 = vmatprep.mubr.f32.mxu0 %v36
  %303 = vmatmul.mubr.f32.gmra.mrb[0].mxu0 %v35
  %v304 = vpop.f32.mrb[0].mxu0
  %v305 = vadd.f32 %v200, %v304
  %v306 = vpop.f32.mrb[0].mxu0
  %307 = vmatprep.mubr.f32.mxu0 %v40
  %308 = vmatmul.mubr.f32.gmra.mrb[0].mxu0 %v39
  %v309 = vpop.f32.mrb[0].mxu0
  %v310 = vadd.f32 %v205, %v309
  %v311 = vpop.f32.mrb[0].mxu0
  %312 = vmatprep.mubr.f32.mxu0 %v44
  %313 = vmatmul.mubr.f32.gmra.mrb[0].mxu0 %v43
  %v314 = vpop.f32.mrb[0].mxu0
  %v315 = vadd.f32 %v210, %v314
  %v316 = vpop.f32.mrb[0].mxu0
  %317 = vmatprep.mubr.f32.mxu0 %v48
  %318 = vmatmul.mubr.f32.gmra.mrb[0].mxu0 %v47
  %v319 = vpop.f32.mrb[0].mxu0
  %v320 = vadd.f32 %v215, %v319
  %v321 = vpop.f32.mrb[0].mxu0
  %322 = vdwg.mxu0
  %vm323 = vcmask 261120
  %v324 = vsel %vm323, %v285, 0.0
  %325 = vadd.xlane.f32.xlu0 %v324
  %v326 = vpop.xlane.xlu0 %325
  %v327 = vsel %vm323, %v290, 0.0
  %328 = vadd.xlane.f32.xlu0 %v327
  %v329 = vpop.xlane.xlu0 %328
  %v330 = vsel %vm323, %v295, 0.0
  %331 = vadd.xlane.f32.xlu0 %v330
  %v332 = vpop.xlane.xlu0 %331
  %v333 = vsel %vm323, %v300, 0.0
  %334 = vadd.xlane.f32.xlu0 %v333
  %v335 = vpop.xlane.xlu0 %334
  %v336 = vsel %vm323, %v305, 0.0
  %337 = vadd.xlane.f32.xlu0 %v336
  %v338 = vpop.xlane.xlu0 %337
  %v339 = vsel %vm323, %v310, 0.0
  %340 = vadd.xlane.f32.xlu0 %v339
  %v341 = vpop.xlane.xlu0 %340
  %v342 = vsel %vm323, %v315, 0.0
  %343 = vadd.xlane.f32.xlu0 %v342
  %v344 = vpop.xlane.xlu0 %343
  %v345 = vsel %vm323, %v320, 0.0
  %346 = vadd.xlane.f32.xlu0 %v345
  %v347 = vpop.xlane.xlu0 %346
  %v348 = vrcp.pop 32.0
  %v349 = vmul.f32 %v326, %v348
  %v350 = vmul.f32 %v329, %v348
  %v351 = vmul.f32 %v332, %v348
  %v352 = vmul.f32 %v335, %v348
  %v353 = vmul.f32 %v338, %v348
  %v354 = vmul.f32 %v341, %v348
  %v355 = vmul.f32 %v344, %v348
  %v356 = vmul.f32 %v347, %v348
  %v357 = vsub.f32 %v285, %v349
  %v358 = vsub.f32 %v290, %v350
  %v359 = vsub.f32 %v295, %v351
  %v360 = vsub.f32 %v300, %v352
  %v361 = vsub.f32 %v305, %v353
  %v362 = vsub.f32 %v310, %v354
  %v363 = vsub.f32 %v315, %v355
  %v364 = vsub.f32 %v320, %v356
  %v365 = vmul.f32 %v357, %v357
  %v366 = vmul.f32 %v358, %v358
  %v367 = vmul.f32 %v359, %v359
  %v368 = vmul.f32 %v360, %v360
  %v369 = vmul.f32 %v361, %v361
  %v370 = vmul.f32 %v362, %v362
  %v371 = vmul.f32 %v363, %v363
  %v372 = vmul.f32 %v364, %v364
  %v373 = vsel %vm323, %v365, 0.0
  %374 = vadd.xlane.f32.xlu0 %v373
  %v375 = vpop.xlane.xlu0 %374
  %v376 = vsel %vm323, %v366, 0.0
  %377 = vadd.xlane.f32.xlu0 %v376
  %v378 = vpop.xlane.xlu0 %377
  %v379 = vsel %vm323, %v367, 0.0
  %380 = vadd.xlane.f32.xlu0 %v379
  %v381 = vpop.xlane.xlu0 %380
  %v382 = vsel %vm323, %v368, 0.0
  %383 = vadd.xlane.f32.xlu0 %v382
  %v384 = vpop.xlane.xlu0 %383
  %v385 = vsel %vm323, %v369, 0.0
  %386 = vadd.xlane.f32.xlu0 %v385
  %v387 = vpop.xlane.xlu0 %386
  %v388 = vsel %vm323, %v370, 0.0
  %389 = vadd.xlane.f32.xlu0 %v388
  %v390 = vpop.xlane.xlu0 %389
  %v391 = vsel %vm323, %v371, 0.0
  %392 = vadd.xlane.f32.xlu0 %v391
  %v393 = vpop.xlane.xlu0 %392
  %v394 = vsel %vm323, %v372, 0.0
  %395 = vadd.xlane.f32.xlu0 %v394
  %v396 = vpop.xlane.xlu0 %395
  %v397 = vmul.f32 %v375, %v348
  %v398 = vmul.f32 %v378, %v348
  %v399 = vmul.f32 %v381, %v348
  %v400 = vmul.f32 %v384, %v348
  %v401 = vmul.f32 %v387, %v348
  %v402 = vmul.f32 %v390, %v348
  %v403 = vmul.f32 %v393, %v348
  %v404 = vmul.f32 %v396, %v348
  %v405 = vld [vmem:[%s2] sm:$0xff]
  %v406 = vld [vmem:[%s2 + $0x8] sm:$0xff]
  %v407 = vld [vmem:[%s2 + $0x10] sm:$0xff]
  %v408 = vld [vmem:[%s2 + $0x18] sm:$0xff]
  %v409 = vld [vmem:[%s2 + $0x20] sm:$0xff]
  %v410 = vld [vmem:[%s2 + $0x28] sm:$0xff]
  %v411 = vld [vmem:[%s2 + $0x30] sm:$0xff]
  %v412 = vld [vmem:[%s2 + $0x38] sm:$0xff]
  %v413 = vadd.f32 %v397, 1e-05
  %v414 = vadd.f32 %v398, 1e-05
  %v415 = vadd.f32 %v399, 1e-05
  %v416 = vadd.f32 %v400, 1e-05
  %v417 = vadd.f32 %v401, 1e-05
  %v418 = vadd.f32 %v402, 1e-05
  %v419 = vadd.f32 %v403, 1e-05
  %v420 = vadd.f32 %v404, 1e-05
  %v421 = vrsqrt.pop %v413
  %v422 = vrsqrt.pop %v414
  %v423 = vrsqrt.pop %v415
  %v424 = vrsqrt.pop %v416
  %v425 = vrsqrt.pop %v417
  %v426 = vrsqrt.pop %v418
  %v427 = vrsqrt.pop %v419
  %v428 = vrsqrt.pop %v420
  %v429 = vmul.f32 %v405, %v421
  %v430 = vmul.f32 %v406, %v422
  %v431 = vmul.f32 %v407, %v423
  %v432 = vmul.f32 %v408, %v424
  %v433 = vmul.f32 %v409, %v425
  %v434 = vmul.f32 %v410, %v426
  %v435 = vmul.f32 %v411, %v427
  %v436 = vmul.f32 %v412, %v428
  %438 = vset.pattern.permute.xlu0 0
  %439 = vperm.xlu0 %438, %v429
  %v440 = vpop.permute.xlu0 %439
  %443 = vset.pattern.permute.xlu0 0
  %444 = vperm.xlu0 %443, %v430
  %v445 = vpop.permute.xlu0 %444
  %448 = vset.pattern.permute.xlu0 0
  %449 = vperm.xlu0 %448, %v431
  %v450 = vpop.permute.xlu0 %449
  %453 = vset.pattern.permute.xlu0 0
  %454 = vperm.xlu0 %453, %v432
  %v455 = vpop.permute.xlu0 %454
  %458 = vset.pattern.permute.xlu0 0
  %459 = vperm.xlu0 %458, %v433
  %v460 = vpop.permute.xlu0 %459
  %463 = vset.pattern.permute.xlu0 0
  %464 = vperm.xlu0 %463, %v434
  %v465 = vpop.permute.xlu0 %464
  %468 = vset.pattern.permute.xlu0 0
  %469 = vperm.xlu0 %468, %v435
  %v470 = vpop.permute.xlu0 %469
  %473 = vset.pattern.permute.xlu0 0
  %474 = vperm.xlu0 %473, %v436
  %v475 = vpop.permute.xlu0 %474
  %v477 = vmul.f32 %v357, %v440
  %v478 = vmul.f32 %v358, %v445
  %v479 = vmul.f32 %v359, %v450
  %v480 = vmul.f32 %v360, %v455
  %v481 = vmul.f32 %v361, %v460
  %v482 = vmul.f32 %v362, %v465
  %v483 = vmul.f32 %v363, %v470
  %v484 = vmul.f32 %v364, %v475
  %v485 = vld [vmem:[%s3] sm:$0xff]
  %v486 = vld [vmem:[%s3 + $0x8] sm:$0xff]
  %v487 = vld [vmem:[%s3 + $0x10] sm:$0xff]
  %v488 = vld [vmem:[%s3 + $0x18] sm:$0xff]
  %v489 = vld [vmem:[%s3 + $0x20] sm:$0xff]
  %v490 = vld [vmem:[%s3 + $0x28] sm:$0xff]
  %v491 = vld [vmem:[%s3 + $0x30] sm:$0xff]
  %v492 = vld [vmem:[%s3 + $0x38] sm:$0xff]
  %494 = vset.pattern.permute.xlu0 0
  %495 = vperm.xlu0 %494, %v485
  %v496 = vpop.permute.xlu0 %495
  %499 = vset.pattern.permute.xlu0 0
  %500 = vperm.xlu0 %499, %v486
  %v501 = vpop.permute.xlu0 %500
  %504 = vset.pattern.permute.xlu0 0
  %505 = vperm.xlu0 %504, %v487
  %v506 = vpop.permute.xlu0 %505
  %509 = vset.pattern.permute.xlu0 0
  %510 = vperm.xlu0 %509, %v488
  %v511 = vpop.permute.xlu0 %510
  %514 = vset.pattern.permute.xlu0 0
  %515 = vperm.xlu0 %514, %v489
  %v516 = vpop.permute.xlu0 %515
  %519 = vset.pattern.permute.xlu0 0
  %520 = vperm.xlu0 %519, %v490
  %v521 = vpop.permute.xlu0 %520
  %524 = vset.pattern.permute.xlu0 0
  %525 = vperm.xlu0 %524, %v491
  %v526 = vpop.permute.xlu0 %525
  %529 = vset.pattern.permute.xlu0 0
  %530 = vperm.xlu0 %529, %v492
  %v531 = vpop.permute.xlu0 %530
  %v533 = vadd.f32 %v477, %v496
  %v534 = vadd.f32 %v478, %v501
  %v535 = vadd.f32 %v479, %v506
  %v536 = vadd.f32 %v480, %v511
  %v537 = vadd.f32 %v481, %v516
  %v538 = vadd.f32 %v482, %v521
  %v539 = vadd.f32 %v483, %v526
  %v540 = vadd.f32 %v484, %v531
  %v541 = vmax.f32 %v533, 0.0
  %v542 = vmax.f32 %v534, 0.0
  %v543 = vmax.f32 %v535, 0.0
  %v544 = vmax.f32 %v536, 0.0
  %v545 = vmax.f32 %v537, 0.0
  %v546 = vmax.f32 %v538, 0.0
  %v547 = vmax.f32 %v539, 0.0
  %v548 = vmax.f32 %v540, 0.0
  %549 = vst.msk [vmem:[%s4] sm:$0xff] %vm323, %v541
  %550 = vst.msk [vmem:[%s4 + $0x8] sm:$0xff] %vm323, %v542
  %551 = vst.msk [vmem:[%s4 + $0x10] sm:$0xff] %vm323, %v543
  %552 = vst.msk [vmem:[%s4 + $0x18] sm:$0xff] %vm323, %v544
  %553 = vst.msk [vmem:[%s4 + $0x20] sm:$0xff] %vm323, %v545
  %554 = vst.msk [vmem:[%s4 + $0x28] sm:$0xff] %vm323, %v546
  %555 = vst.msk [vmem:[%s4 + $0x30] sm:$0xff] %vm323, %v547
  %556 = vst.msk [vmem:[%s4 + $0x38] sm:$0xff] %vm323, %v548
  // Predicated region
  $region18: #{generator_forward.5} parent=0 // pred_check
    _
  $region19: #{generator_forward.5} parent=0 // pred_check_branch
    %558 = sbr.rel (0) target = $region21
  $region20: #{generator_forward.5} parent=0 // pred_region
    _
  $region21: #{generator_forward.5} parent=0 // pred_fallthru
    _
  // Predicated region
  $region22: #{generator_forward.5} parent=0 // pred_check
    _
  $region23: #{generator_forward.5} parent=0 // pred_check_branch
    %560 = sbr.rel (0) target = $region25
  $region24: #{generator_forward.5} parent=0 // pred_region
    _
  $region25: #{generator_forward.5} parent=0 // pred_fallthru
    _

// kernel: generator_forward.6
$region0: #{generator_forward.6}
  #allocation0 [shape = 'u32[]', space=smem, size = 0x4, offset = 0x4, fixed_abs, tag = 'smem constant byte address 0x4 - core index']
  #allocation1 [shape = 'u32[144,128]{1,0:T(1,128)}', space=vmem, size = 0x12000, scoped, tag = 'internal scratch']
  %s0 = inlined_call_operand.vmem [shape: f32[1024,128], index: 0, kind: input, shape index: {}]
  %s1 = inlined_call_operand.vmem [shape: f32[32,1024], index: 1, kind: input, shape index: {}]
  %s2 = inlined_call_operand.vmem [shape: f32[32,1], index: 2, kind: input, shape index: {}]
  %s3 = inlined_call_operand.vmem [shape: f32[32,1], index: 3, kind: input, shape index: {}]
  %s4 = inlined_call_operand.vmem [shape: f32[32,128], index: 4, kind: output, shape index: {}]
  %s5 = sld [smem:[#allocation0]]
  $region26: #{generator_forward.6} parent=0
    _
  %s7 = ssub.s32 1, %s5
  %s8 = scalar_select 0, %s7, %s5
  // Predicated region
  $region2: #{generator_forward.6} parent=0 // pred_check
    _
  $region3: #{generator_forward.6} parent=0 // pred_check_branch
    %10 = sbr.rel (0) target = $region5
  $region4: #{generator_forward.6} parent=0 // pred_region
    _
  $region5: #{generator_forward.6} parent=0 // pred_fallthru
    _
  // Predicated region
  $region6: #{generator_forward.6} parent=0 // pred_check
    _
  $region7: #{generator_forward.6} parent=0 // pred_check_branch
    %12 = sbr.rel (0) target = $region9
  $region8: #{generator_forward.6} parent=0 // pred_region
    _
  $region9: #{generator_forward.6} parent=0 // pred_fallthru
    _
  // Predicated region
  $region10: #{generator_forward.6} parent=0 // pred_check
    _
  $region11: #{generator_forward.6} parent=0 // pred_check_branch
    %14 = sbr.rel (0) target = $region13
  $region12: #{generator_forward.6} parent=0 // pred_region
    _
  $region13: #{generator_forward.6} parent=0 // pred_fallthru
    _
  // Predicated region
  $region14: #{generator_forward.6} parent=0 // pred_check
    _
  $region15: #{generator_forward.6} parent=0 // pred_check_branch
    %16 = sbr.rel (0) target = $region17
  $region16: #{generator_forward.6} parent=0 // pred_region
    _
  $region17: #{generator_forward.6} parent=0 // pred_fallthru
    _
  %v17 = vld [vmem:[%s1] sm:$0xff]
  %v18 = vld [vmem:[%s1 + $0x8] sm:$0xff]
  %v19 = vld [vmem:[%s1 + $0x10] sm:$0xff]
  %v20 = vld [vmem:[%s1 + $0x18] sm:$0xff]
  %v21 = vld [vmem:[%s1 + $0x20] sm:$0xff]
  %v22 = vld [vmem:[%s1 + $0x28] sm:$0xff]
  %v23 = vld [vmem:[%s1 + $0x30] sm:$0xff]
  %v24 = vld [vmem:[%s1 + $0x38] sm:$0xff]
  %v25 = vld [vmem:[%s1 + $0x40] sm:$0xff]
  %v26 = vld [vmem:[%s1 + $0x48] sm:$0xff]
  %v27 = vld [vmem:[%s1 + $0x50] sm:$0xff]
  %v28 = vld [vmem:[%s1 + $0x58] sm:$0xff]
  %v29 = vld [vmem:[%s1 + $0x60] sm:$0xff]
  %v30 = vld [vmem:[%s1 + $0x68] sm:$0xff]
  %v31 = vld [vmem:[%s1 + $0x70] sm:$0xff]
  %v32 = vld [vmem:[%s1 + $0x78] sm:$0xff]
  %v33 = vld [vmem:[%s1 + $0x80] sm:$0xff]
  %v34 = vld [vmem:[%s1 + $0x88] sm:$0xff]
  %v35 = vld [vmem:[%s1 + $0x90] sm:$0xff]
  %v36 = vld [vmem:[%s1 + $0x98] sm:$0xff]
  %v37 = vld [vmem:[%s1 + $0xa0] sm:$0xff]
  %v38 = vld [vmem:[%s1 + $0xa8] sm:$0xff]
  %v39 = vld [vmem:[%s1 + $0xb0] sm:$0xff]
  %v40 = vld [vmem:[%s1 + $0xb8] sm:$0xff]
  %v41 = vld [vmem:[%s1 + $0xc0] sm:$0xff]
  %v42 = vld [vmem:[%s1 + $0xc8] sm:$0xff]
  %v43 = vld [vmem:[%s1 + $0xd0] sm:$0xff]
  %v44 = vld [vmem:[%s1 + $0xd8] sm:$0xff]
  %v45 = vld [vmem:[%s1 + $0xe0] sm:$0xff]
  %v46 = vld [vmem:[%s1 + $0xe8] sm:$0xff]
  %v47 = vld [vmem:[%s1 + $0xf0] sm:$0xff]
  %v48 = vld [vmem:[%s1 + $0xf8] sm:$0xff]
  %v49 = vld [vmem:[%s0] sm:$0xff]
  %v50 = vld [vmem:[%s0 + $0x8] sm:$0xff]
  %v51 = vld [vmem:[%s0 + $0x10] sm:$0xff]
  %v52 = vld [vmem:[%s0 + $0x18] sm:$0xff]
  %v53 = vld [vmem:[%s0 + $0x20] sm:$0xff]
  %v54 = vld [vmem:[%s0 + $0x28] sm:$0xff]
  %v55 = vld [vmem:[%s0 + $0x30] sm:$0xff]
  %v56 = vld [vmem:[%s0 + $0x38] sm:$0xff]
  %v57 = vld [vmem:[%s0 + $0x40] sm:$0xff]
  %v58 = vld [vmem:[%s0 + $0x48] sm:$0xff]
  %v59 = vld [vmem:[%s0 + $0x50] sm:$0xff]
  %v60 = vld [vmem:[%s0 + $0x58] sm:$0xff]
  %v61 = vld [vmem:[%s0 + $0x60] sm:$0xff]
  %v62 = vld [vmem:[%s0 + $0x68] sm:$0xff]
  %v63 = vld [vmem:[%s0 + $0x70] sm:$0xff]
  %v64 = vld [vmem:[%s0 + $0x78] sm:$0xff]
  %v65 = vld [vmem:[%s0 + $0x80] sm:$0xff]
  %v66 = vld [vmem:[%s0 + $0x88] sm:$0xff]
  %v67 = vld [vmem:[%s0 + $0x90] sm:$0xff]
  %v68 = vld [vmem:[%s0 + $0x98] sm:$0xff]
  %v69 = vld [vmem:[%s0 + $0xa0] sm:$0xff]
  %v70 = vld [vmem:[%s0 + $0xa8] sm:$0xff]
  %v71 = vld [vmem:[%s0 + $0xb0] sm:$0xff]
  %v72 = vld [vmem:[%s0 + $0xb8] sm:$0xff]
  %v73 = vld [vmem:[%s0 + $0xc0] sm:$0xff]
  %v74 = vld [vmem:[%s0 + $0xc8] sm:$0xff]
  %v75 = vld [vmem:[%s0 + $0xd0] sm:$0xff]
  %v76 = vld [vmem:[%s0 + $0xd8] sm:$0xff]
  %v77 = vld [vmem:[%s0 + $0xe0] sm:$0xff]
  %v78 = vld [vmem:[%s0 + $0xe8] sm:$0xff]
  %v79 = vld [vmem:[%s0 + $0xf0] sm:$0xff]
  %v80 = vld [vmem:[%s0 + $0xf8] sm:$0xff]
  %v81 = vld [vmem:[%s0 + $0x100] sm:$0xff]
  %v82 = vld [vmem:[%s0 + $0x108] sm:$0xff]
  %v83 = vld [vmem:[%s0 + $0x110] sm:$0xff]
  %v84 = vld [vmem:[%s0 + $0x118] sm:$0xff]
  %v85 = vld [vmem:[%s0 + $0x120] sm:$0xff]
  %v86 = vld [vmem:[%s0 + $0x128] sm:$0xff]
  %v87 = vld [vmem:[%s0 + $0x130] sm:$0xff]
  %v88 = vld [vmem:[%s0 + $0x138] sm:$0xff]
  %v89 = vld [vmem:[%s0 + $0x140] sm:$0xff]
  %v90 = vld [vmem:[%s0 + $0x148] sm:$0xff]
  %v91 = vld [vmem:[%s0 + $0x150] sm:$0xff]
  %v92 = vld [vmem:[%s0 + $0x158] sm:$0xff]
  %v93 = vld [vmem:[%s0 + $0x160] sm:$0xff]
  %v94 = vld [vmem:[%s0 + $0x168] sm:$0xff]
  %v95 = vld [vmem:[%s0 + $0x170] sm:$0xff]
  %v96 = vld [vmem:[%s0 + $0x178] sm:$0xff]
  %v97 = vld [vmem:[%s0 + $0x180] sm:$0xff]
  %v98 = vld [vmem:[%s0 + $0x188] sm:$0xff]
  %v99 = vld [vmem:[%s0 + $0x190] sm:$0xff]
  %v100 = vld [vmem:[%s0 + $0x198] sm:$0xff]
  %v101 = vld [vmem:[%s0 + $0x1a0] sm:$0xff]
  %v102 = vld [vmem:[%s0 + $0x1a8] sm:$0xff]
  %v103 = vld [vmem:[%s0 + $0x1b0] sm:$0xff]
  %v104 = vld [vmem:[%s0 + $0x1b8] sm:$0xff]
  %v105 = vld [vmem:[%s0 + $0x1c0] sm:$0xff]
  %v106 = vld [vmem:[%s0 + $0x1c8] sm:$0xff]
  %v107 = vld [vmem:[%s0 + $0x1d0] sm:$0xff]
  %v108 = vld [vmem:[%s0 + $0x1d8] sm:$0xff]
  %v109 = vld [vmem:[%s0 + $0x1e0] sm:$0xff]
  %v110 = vld [vmem:[%s0 + $0x1e8] sm:$0xff]
  %v111 = vld [vmem:[%s0 + $0x1f0] sm:$0xff]
  %v112 = vld [vmem:[%s0 + $0x1f8] sm:$0xff]
  %v113 = vld [vmem:[%s0 + $0x200] sm:$0xff]
  %v114 = vld [vmem:[%s0 + $0x208] sm:$0xff]
  %v115 = vld [vmem:[%s0 + $0x210] sm:$0xff]
  %v116 = vld [vmem:[%s0 + $0x218] sm:$0xff]
  %v117 = vld [vmem:[%s0 + $0x220] sm:$0xff]
  %v118 = vld [vmem:[%s0 + $0x228] sm:$0xff]
  %v119 = vld [vmem:[%s0 + $0x230] sm:$0xff]
  %v120 = vld [vmem:[%s0 + $0x238] sm:$0xff]
  %v121 = vld [vmem:[%s0 + $0x240] sm:$0xff]
  %v122 = vld [vmem:[%s0 + $0x248] sm:$0xff]
  %v123 = vld [vmem:[%s0 + $0x250] sm:$0xff]
  %v124 = vld [vmem:[%s0 + $0x258] sm:$0xff]
  %v125 = vld [vmem:[%s0 + $0x260] sm:$0xff]
  %v126 = vld [vmem:[%s0 + $0x268] sm:$0xff]
  %v127 = vld [vmem:[%s0 + $0x270] sm:$0xff]
  %v128 = vld [vmem:[%s0 + $0x278] sm:$0xff]
  %v129 = vld [vmem:[%s0 + $0x280] sm:$0xff]
  %v130 = vld [vmem:[%s0 + $0x288] sm:$0xff]
  %v131 = vld [vmem:[%s0 + $0x290] sm:$0xff]
  %v132 = vld [vmem:[%s0 + $0x298] sm:$0xff]
  %v133 = vld [vmem:[%s0 + $0x2a0] sm:$0xff]
  %v134 = vld [vmem:[%s0 + $0x2a8] sm:$0xff]
  %v135 = vld [vmem:[%s0 + $0x2b0] sm:$0xff]
  %v136 = vld [vmem:[%s0 + $0x2b8] sm:$0xff]
  %v137 = vld [vmem:[%s0 + $0x2c0] sm:$0xff]
  %v138 = vld [vmem:[%s0 + $0x2c8] sm:$0xff]
  %v139 = vld [vmem:[%s0 + $0x2d0] sm:$0xff]
  %v140 = vld [vmem:[%s0 + $0x2d8] sm:$0xff]
  %v141 = vld [vmem:[%s0 + $0x2e0] sm:$0xff]
  %v142 = vld [vmem:[%s0 + $0x2e8] sm:$0xff]
  %v143 = vld [vmem:[%s0 + $0x2f0] sm:$0xff]
  %v144 = vld [vmem:[%s0 + $0x2f8] sm:$0xff]
  %v145 = vld [vmem:[%s0 + $0x300] sm:$0xff]
  %v146 = vld [vmem:[%s0 + $0x308] sm:$0xff]
  %v147 = vld [vmem:[%s0 + $0x310] sm:$0xff]
  %v148 = vld [vmem:[%s0 + $0x318] sm:$0xff]
  %v149 = vld [vmem:[%s0 + $0x320] sm:$0xff]
  %v150 = vld [vmem:[%s0 + $0x328] sm:$0xff]
  %v151 = vld [vmem:[%s0 + $0x330] sm:$0xff]
  %v152 = vld [vmem:[%s0 + $0x338] sm:$0xff]
  %v153 = vld [vmem:[%s0 + $0x340] sm:$0xff]
  %v154 = vld [vmem:[%s0 + $0x348] sm:$0xff]
  %v155 = vld [vmem:[%s0 + $0x350] sm:$0xff]
  %v156 = vld [vmem:[%s0 + $0x358] sm:$0xff]
  %v157 = vld [vmem:[%s0 + $0x360] sm:$0xff]
  %v158 = vld [vmem:[%s0 + $0x368] sm:$0xff]
  %v159 = vld [vmem:[%s0 + $0x370] sm:$0xff]
  %v160 = vld [vmem:[%s0 + $0x378] sm:$0xff]
  %v161 = vld [vmem:[%s0 + $0x380] sm:$0xff]
  %v162 = vld [vmem:[%s0 + $0x388] sm:$0xff]
  %v163 = vld [vmem:[%s0 + $0x390] sm:$0xff]
  %v164 = vld [vmem:[%s0 + $0x398] sm:$0xff]
  %v165 = vld [vmem:[%s0 + $0x3a0] sm:$0xff]
  %v166 = vld [vmem:[%s0 + $0x3a8] sm:$0xff]
  %v167 = vld [vmem:[%s0 + $0x3b0] sm:$0xff]
  %v168 = vld [vmem:[%s0 + $0x3b8] sm:$0xff]
  %v169 = vld [vmem:[%s0 + $0x3c0] sm:$0xff]
  %v170 = vld [vmem:[%s0 + $0x3c8] sm:$0xff]
  %v171 = vld [vmem:[%s0 + $0x3d0] sm:$0xff]
  %v172 = vld [vmem:[%s0 + $0x3d8] sm:$0xff]
  %v173 = vld [vmem:[%s0 + $0x3e0] sm:$0xff]
  %v174 = vld [vmem:[%s0 + $0x3e8] sm:$0xff]
  %v175 = vld [vmem:[%s0 + $0x3f0] sm:$0xff]
  %v176 = vld [vmem:[%s0 + $0x3f8] sm:$0xff]
  %177 = vmatprep.subr.mxu0 0.0
  %178 = vmatpush1.msra.mxu0 %v49
  %179 = vmatprep.subr.mxu0 0.0
  %180 = vmatpush1.msra.mxu0 %v50
  %181 = vmatprep.subr.mxu0 0.0
  %182 = vmatpush1.msra.mxu0 %v51
  %183 = vmatprep.subr.mxu0 0.0
  %184 = vmatpush1.msra.mxu0 %v52
  %185 = vmatprep.subr.mxu0 0.0
  %186 = vmatpush1.msra.mxu0 %v53
  %187 = vmatprep.subr.mxu0 0.0
  %188 = vmatpush1.msra.mxu0 %v54
  %189 = vmatprep.subr.mxu0 0.0
  %190 = vmatpush1.msra.mxu0 %v55
  %191 = vmatprep.subr.mxu0 0.0
  %192 = vmatpush1.msra.mxu0 %v56
  %193 = vmatprep.subr.mxu0 0.0
  %194 = vmatpush1.msra.mxu0 %v57
  %195 = vmatprep.subr.mxu0 0.0
  %196 = vmatpush1.msra.mxu0 %v58
  %197 = vmatprep.subr.mxu0 0.0
  %198 = vmatpush1.msra.mxu0 %v59
  %199 = vmatprep.subr.mxu0 0.0
  %200 = vmatpush1.msra.mxu0 %v60
  %201 = vmatprep.subr.mxu0 0.0
  %202 = vmatpush1.msra.mxu0 %v61
  %203 = vmatprep.subr.mxu0 0.0
  %204 = vmatpush1.msra.mxu0 %v62
  %205 = vmatprep.subr.mxu0 0.0
  %206 = vmatpush1.msra.mxu0 %v63
  %207 = vmatprep.subr.mxu0 0.0
  %208 = vmatpush1.msra.mxu0 %v64
  %209 = vmatprep.subr.mxu0 0.0
  %210 = vmatpush1.msra.mxu0 %v65
  %211 = vmatprep.subr.mxu0 0.0
  %212 = vmatpush1.msra.mxu0 %v66
  %213 = vmatprep.subr.mxu0 0.0
  %214 = vmatpush1.msra.mxu0 %v67
  %215 = vmatprep.subr.mxu0 0.0
  %216 = vmatpush1.msra.mxu0 %v68
  %217 = vmatprep.subr.mxu0 0.0
  %218 = vmatpush1.msra.mxu0 %v69
  %219 = vmatprep.subr.mxu0 0.0
  %220 = vmatpush1.msra.mxu0 %v70
  %221 = vmatprep.subr.mxu0 0.0
  %222 = vmatpush1.msra.mxu0 %v71
  %223 = vmatprep.subr.mxu0 0.0
  %224 = vmatpush1.msra.mxu0 %v72
  %225 = vmatprep.subr.mxu0 0.0
  %226 = vmatpush1.msra.mxu0 %v73
  %227 = vmatprep.subr.mxu0 0.0
  %228 = vmatpush1.msra.mxu0 %v74
  %229 = vmatprep.subr.mxu0 0.0
  %230 = vmatpush1.msra.mxu0 %v75
  %231 = vmatprep.subr.mxu0 0.0
  %232 = vmatpush1.msra.mxu0 %v76
  %233 = vmatprep.subr.mxu0 0.0
  %234 = vmatpush1.msra.mxu0 %v77
  %235 = vmatprep.subr.mxu0 0.0
  %236 = vmatpush1.msra.mxu0 %v78
  %237 = vmatprep.subr.mxu0 0.0
  %238 = vmatpush1.msra.mxu0 %v79
  %239 = vmatprep.subr.mxu0 0.0
  %240 = vmatpush1.msra.mxu0 %v80
  %241 = vmatprep.mubr.f32.mxu0 %v18
  %242 = vmatmul.mubr.f32.gmra.mrb[0].mxu0 %v17
  %v243 = vpop.f32.mrb[0].mxu0
  %v244 = vadd.f32 0.0, %v243
  %v245 = vpop.f32.mrb[0].mxu0
  %246 = vmatprep.mubr.f32.mxu0 %v26
  %247 = vmatmul.mubr.f32.gmra.mrb[0].mxu0 %v25
  %v248 = vpop.f32.mrb[0].mxu0
  %v249 = vadd.f32 0.0, %v248
  %v250 = vpop.f32.mrb[0].mxu0
  %251 = vmatprep.mubr.f32.mxu0 %v34
  %252 = vmatmul.mubr.f32.gmra.mrb[0].mxu0 %v33
  %v253 = vpop.f32.mrb[0].mxu0
  %v254 = vadd.f32 0.0, %v253
  %v255 = vpop.f32.mrb[0].mxu0
  %256 = vmatprep.mubr.f32.mxu0 %v42
  %257 = vmatmul.mubr.f32.gmra.mrb[0].mxu0 %v41
  %v258 = vpop.f32.mrb[0].mxu0
  %v259 = vadd.f32 0.0, %v258
  %v260 = vpop.f32.mrb[0].mxu0
  %261 = vdwg.mxu0
  %262 = vmatprep.subr.mxu0 0.0
  %263 = vmatpush1.msra.mxu0 %v81
  %264 = vmatprep.subr.mxu0 0.0
  %265 = vmatpush1.msra.mxu0 %v82
  %266 = vmatprep.subr.mxu0 0.0
  %267 = vmatpush1.msra.mxu0 %v83
  %268 = vmatprep.subr.mxu0 0.0
  %269 = vmatpush1.msra.mxu0 %v84
  %270 = vmatprep.subr.mxu0 0.0
  %271 = vmatpush1.msra.mxu0 %v85
  %272 = vmatprep.subr.mxu0 0.0
  %273 = vmatpush1.msra.mxu0 %v86
  %274 = vmatprep.subr.mxu0 0.0
  %275 = vmatpush1.msra.mxu0 %v87
  %276 = vmatprep.subr.mxu0 0.0
  %277 = vmatpush1.msra.mxu0 %v88
  %278 = vmatprep.subr.mxu0 0.0
  %279 = vmatpush1.msra.mxu0 %v89
  %280 = vmatprep.subr.mxu0 0.0
  %281 = vmatpush1.msra.mxu0 %v90
  %282 = vmatprep.subr.mxu0 0.0
  %283 = vmatpush1.msra.mxu0 %v91
  %284 = vmatprep.subr.mxu0 0.0
  %285 = vmatpush1.msra.mxu0 %v92
  %286 = vmatprep.subr.mxu0 0.0
  %287 = vmatpush1.msra.mxu0 %v93
  %288 = vmatprep.subr.mxu0 0.0
  %289 = vmatpush1.msra.mxu0 %v94
  %290 = vmatprep.subr.mxu0 0.0
  %291 = vmatpush1.msra.mxu0 %v95
  %292 = vmatprep.subr.mxu0 0.0
  %293 = vmatpush1.msra.mxu0 %v96
  %294 = vmatprep.subr.mxu0 0.0
  %295 = vmatpush1.msra.mxu0 %v97
  %296 = vmatprep.subr.mxu0 0.0
  %297 = vmatpush1.msra.mxu0 %v98
  %298 = vmatprep.subr.mxu0 0.0
  %299 = vmatpush1.msra.mxu0 %v99
  %300 = vmatprep.subr.mxu0 0.0
  %301 = vmatpush1.msra.mxu0 %v100
  %302 = vmatprep.subr.mxu0 0.0
  %303 = vmatpush1.msra.mxu0 %v101
  %304 = vmatprep.subr.mxu0 0.0
  %305 = vmatpush1.msra.mxu0 %v102
  %306 = vmatprep.subr.mxu0 0.0
  %307 = vmatpush1.msra.mxu0 %v103
  %308 = vmatprep.subr.mxu0 0.0
  %309 = vmatpush1.msra.mxu0 %v104
  %310 = vmatprep.subr.mxu0 0.0
  %311 = vmatpush1.msra.mxu0 %v105
  %312 = vmatprep.subr.mxu0 0.0
  %313 = vmatpush1.msra.mxu0 %v106
  %314 = vmatprep.subr.mxu0 0.0
  %315 = vmatpush1.msra.mxu0 %v107
  %316 = vmatprep.subr.mxu0 0.0
  %317 = vmatpush1.msra.mxu0 %v108
  %318 = vmatprep.subr.mxu0 0.0
  %319 = vmatpush1.msra.mxu0 %v109
  %320 = vmatprep.subr.mxu0 0.0
  %321 = vmatpush1.msra.mxu0 %v110
  %322 = vmatprep.subr.mxu0 0.0
  %323 = vmatpush1.msra.mxu0 %v111
  %324 = vmatprep.subr.mxu0 0.0
  %325 = vmatpush1.msra.mxu0 %v112
  %326 = vmatprep.mubr.f32.mxu0 %v20
  %327 = vmatmul.mubr.f32.gmra.mrb[0].mxu0 %v19
  %v328 = vpop.f32.mrb[0].mxu0
  %v329 = vadd.f32 %v244, %v328
  %v330 = vpop.f32.mrb[0].mxu0
  %331 = vmatprep.mubr.f32.mxu0 %v28
  %332 = vmatmul.mubr.f32.gmra.mrb[0].mxu0 %v27
  %v333 = vpop.f32.mrb[0].mxu0
  %v334 = vadd.f32 %v249, %v333
  %v335 = vpop.f32.mrb[0].mxu0
  %336 = vmatprep.mubr.f32.mxu0 %v36
  %337 = vmatmul.mubr.f32.gmra.mrb[0].mxu0 %v35
  %v338 = vpop.f32.mrb[0].mxu0
  %v339 = vadd.f32 %v254, %v338
  %v340 = vpop.f32.mrb[0].mxu0
  %341 = vmatprep.mubr.f32.mxu0 %v44
  %342 = vmatmul.mubr.f32.gmra.mrb[0].mxu0 %v43
  %v343 = vpop.f32.mrb[0].mxu0
  %v344 = vadd.f32 %v259, %v343
  %v345 = vpop.f32.mrb[0].mxu0
  %346 = vdwg.mxu0
  %347 = vmatprep.subr.mxu0 0.0
  %348 = vmatpush1.msra.mxu0 %v113
  %349 = vmatprep.subr.mxu0 0.0
  %350 = vmatpush1.msra.mxu0 %v114
  %351 = vmatprep.subr.mxu0 0.0
  %352 = vmatpush1.msra.mxu0 %v115
  %353 = vmatprep.subr.mxu0 0.0
  %354 = vmatpush1.msra.mxu0 %v116
  %355 = vmatprep.subr.mxu0 0.0
  %356 = vmatpush1.msra.mxu0 %v117
  %357 = vmatprep.subr.mxu0 0.0
  %358 = vmatpush1.msra.mxu0 %v118
  %359 = vmatprep.subr.mxu0 0.0
  %360 = vmatpush1.msra.mxu0 %v119
  %361 = vmatprep.subr.mxu0 0.0
  %362 = vmatpush1.msra.mxu0 %v120
  %363 = vmatprep.subr.mxu0 0.0
  %364 = vmatpush1.msra.mxu0 %v121
  %365 = vmatprep.subr.mxu0 0.0
  %366 = vmatpush1.msra.mxu0 %v122
  %367 = vmatprep.subr.mxu0 0.0
  %368 = vmatpush1.msra.mxu0 %v123
  %369 = vmatprep.subr.mxu0 0.0
  %370 = vmatpush1.msra.mxu0 %v124
  %371 = vmatprep.subr.mxu0 0.0
  %372 = vmatpush1.msra.mxu0 %v125
  %373 = vmatprep.subr.mxu0 0.0
  %374 = vmatpush1.msra.mxu0 %v126
  %375 = vmatprep.subr.mxu0 0.0
  %376 = vmatpush1.msra.mxu0 %v127
  %377 = vmatprep.subr.mxu0 0.0
  %378 = vmatpush1.msra.mxu0 %v128
  %379 = vmatprep.subr.mxu0 0.0
  %380 = vmatpush1.msra.mxu0 %v129
  %381 = vmatprep.subr.mxu0 0.0
  %382 = vmatpush1.msra.mxu0 %v130
  %383 = vmatprep.subr.mxu0 0.0
  %384 = vmatpush1.msra.mxu0 %v131
  %385 = vmatprep.subr.mxu0 0.0
  %386 = vmatpush1.msra.mxu0 %v132
  %387 = vmatprep.subr.mxu0 0.0
  %388 = vmatpush1.msra.mxu0 %v133
  %389 = vmatprep.subr.mxu0 0.0
  %390 = vmatpush1.msra.mxu0 %v134
  %391 = vmatprep.subr.mxu0 0.0
  %392 = vmatpush1.msra.mxu0 %v135
  %393 = vmatprep.subr.mxu0 0.0
  %394 = vmatpush1.msra.mxu0 %v136
  %395 = vmatprep.subr.mxu0 0.0
  %396 = vmatpush1.msra.mxu0 %v137
  %397 = vmatprep.subr.mxu0 0.0
  %398 = vmatpush1.msra.mxu0 %v138
  %399 = vmatprep.subr.mxu0 0.0
  %400 = vmatpush1.msra.mxu0 %v139
  %401 = vmatprep.subr.mxu0 0.0
  %402 = vmatpush1.msra.mxu0 %v140
  %403 = vmatprep.subr.mxu0 0.0
  %404 = vmatpush1.msra.mxu0 %v141
  %405 = vmatprep.subr.mxu0 0.0
  %406 = vmatpush1.msra.mxu0 %v142
  %407 = vmatprep.subr.mxu0 0.0
  %408 = vmatpush1.msra.mxu0 %v143
  %409 = vmatprep.subr.mxu0 0.0
  %410 = vmatpush1.msra.mxu0 %v144
  %411 = vmatprep.mubr.f32.mxu0 %v22
  %412 = vmatmul.mubr.f32.gmra.mrb[0].mxu0 %v21
  %v413 = vpop.f32.mrb[0].mxu0
  %v414 = vadd.f32 %v329, %v413
  %v415 = vpop.f32.mrb[0].mxu0
  %416 = vmatprep.mubr.f32.mxu0 %v30
  %417 = vmatmul.mubr.f32.gmra.mrb[0].mxu0 %v29
  %v418 = vpop.f32.mrb[0].mxu0
  %v419 = vadd.f32 %v334, %v418
  %v420 = vpop.f32.mrb[0].mxu0
  %421 = vmatprep.mubr.f32.mxu0 %v38
  %422 = vmatmul.mubr.f32.gmra.mrb[0].mxu0 %v37
  %v423 = vpop.f32.mrb[0].mxu0
  %v424 = vadd.f32 %v339, %v423
  %v425 = vpop.f32.mrb[0].mxu0
  %426 = vmatprep.mubr.f32.mxu0 %v46
  %427 = vmatmul.mubr.f32.gmra.mrb[0].mxu0 %v45
  %v428 = vpop.f32.mrb[0].mxu0
  %v429 = vadd.f32 %v344, %v428
  %v430 = vpop.f32.mrb[0].mxu0
  %431 = vdwg.mxu0
  %432 = vmatprep.subr.mxu0 0.0
  %433 = vmatpush1.msra.mxu0 %v145
  %434 = vmatprep.subr.mxu0 0.0
  %435 = vmatpush1.msra.mxu0 %v146
  %436 = vmatprep.subr.mxu0 0.0
  %437 = vmatpush1.msra.mxu0 %v147
  %438 = vmatprep.subr.mxu0 0.0
  %439 = vmatpush1.msra.mxu0 %v148
  %440 = vmatprep.subr.mxu0 0.0
  %441 = vmatpush1.msra.mxu0 %v149
  %442 = vmatprep.subr.mxu0 0.0
  %443 = vmatpush1.msra.mxu0 %v150
  %444 = vmatprep.subr.mxu0 0.0
  %445 = vmatpush1.msra.mxu0 %v151
  %446 = vmatprep.subr.mxu0 0.0
  %447 = vmatpush1.msra.mxu0 %v152
  %448 = vmatprep.subr.mxu0 0.0
  %449 = vmatpush1.msra.mxu0 %v153
  %450 = vmatprep.subr.mxu0 0.0
  %451 = vmatpush1.msra.mxu0 %v154
  %452 = vmatprep.subr.mxu0 0.0
  %453 = vmatpush1.msra.mxu0 %v155
  %454 = vmatprep.subr.mxu0 0.0
  %455 = vmatpush1.msra.mxu0 %v156
  %456 = vmatprep.subr.mxu0 0.0
  %457 = vmatpush1.msra.mxu0 %v157
  %458 = vmatprep.subr.mxu0 0.0
  %459 = vmatpush1.msra.mxu0 %v158
  %460 = vmatprep.subr.mxu0 0.0
  %461 = vmatpush1.msra.mxu0 %v159
  %462 = vmatprep.subr.mxu0 0.0
  %463 = vmatpush1.msra.mxu0 %v160
  %464 = vmatprep.subr.mxu0 0.0
  %465 = vmatpush1.msra.mxu0 %v161
  %466 = vmatprep.subr.mxu0 0.0
  %467 = vmatpush1.msra.mxu0 %v162
  %468 = vmatprep.subr.mxu0 0.0
  %469 = vmatpush1.msra.mxu0 %v163
  %470 = vmatprep.subr.mxu0 0.0
  %471 = vmatpush1.msra.mxu0 %v164
  %472 = vmatprep.subr.mxu0 0.0
  %473 = vmatpush1.msra.mxu0 %v165
  %474 = vmatprep.subr.mxu0 0.0
  %475 = vmatpush1.msra.mxu0 %v166
  %476 = vmatprep.subr.mxu0 0.0
  %477 = vmatpush1.msra.mxu0 %v167
  %478 = vmatprep.subr.mxu0 0.0
  %479 = vmatpush1.msra.mxu0 %v168
  %480 = vmatprep.subr.mxu0 0.0
  %481 = vmatpush1.msra.mxu0 %v169
  %482 = vmatprep.subr.mxu0 0.0
  %483 = vmatpush1.msra.mxu0 %v170
  %484 = vmatprep.subr.mxu0 0.0
  %485 = vmatpush1.msra.mxu0 %v171
  %486 = vmatprep.subr.mxu0 0.0
  %487 = vmatpush1.msra.mxu0 %v172
  %488 = vmatprep.subr.mxu0 0.0
  %489 = vmatpush1.msra.mxu0 %v173
  %490 = vmatprep.subr.mxu0 0.0
  %491 = vmatpush1.msra.mxu0 %v174
  %492 = vmatprep.subr.mxu0 0.0
  %493 = vmatpush1.msra.mxu0 %v175
  %494 = vmatprep.subr.mxu0 0.0
  %495 = vmatpush1.msra.mxu0 %v176
  %496 = vmatprep.mubr.f32.mxu0 %v24
  %497 = vmatmul.mubr.f32.gmra.mrb[0].mxu0 %v23
  %v498 = vpop.f32.mrb[0].mxu0
  %v499 = vadd.f32 %v414, %v498
  %v500 = vpop.f32.mrb[0].mxu0
  %501 = vmatprep.mubr.f32.mxu0 %v32
  %502 = vmatmul.mubr.f32.gmra.mrb[0].mxu0 %v31
  %v503 = vpop.f32.mrb[0].mxu0
  %v504 = vadd.f32 %v419, %v503
  %v505 = vpop.f32.mrb[0].mxu0
  %506 = vmatprep.mubr.f32.mxu0 %v40
  %507 = vmatmul.mubr.f32.gmra.mrb[0].mxu0 %v39
  %v508 = vpop.f32.mrb[0].mxu0
  %v509 = vadd.f32 %v424, %v508
  %v510 = vpop.f32.mrb[0].mxu0
  %511 = vmatprep.mubr.f32.mxu0 %v48
  %512 = vmatmul.mubr.f32.gmra.mrb[0].mxu0 %v47
  %v513 = vpop.f32.mrb[0].mxu0
  %v514 = vadd.f32 %v429, %v513
  %v515 = vpop.f32.mrb[0].mxu0
  %516 = vdwg.mxu0
  %517 = vadd.xlane.f32.xlu0 %v499
  %v518 = vpop.xlane.xlu0 %517
  %519 = vadd.xlane.f32.xlu0 %v504
  %v520 = vpop.xlane.xlu0 %519
  %521 = vadd.xlane.f32.xlu0 %v509
  %v522 = vpop.xlane.xlu0 %521
  %523 = vadd.xlane.f32.xlu0 %v514
  %v524 = vpop.xlane.xlu0 %523
  %v525 = vrcp.pop 128.0
  %v526 = vmul.f32 %v518, %v525
  %v527 = vmul.f32 %v520, %v525
  %v528 = vmul.f32 %v522, %v525
  %v529 = vmul.f32 %v524, %v525
  %v530 = vsub.f32 %v499, %v526
  %v531 = vsub.f32 %v504, %v527
  %v532 = vsub.f32 %v509, %v528
  %v533 = vsub.f32 %v514, %v529
  %v534 = vmul.f32 %v530, %v530
  %v535 = vmul.f32 %v531, %v531
  %v536 = vmul.f32 %v532, %v532
  %v537 = vmul.f32 %v533, %v533
  %538 = vadd.xlane.f32.xlu0 %v534
  %v539 = vpop.xlane.xlu0 %538
  %540 = vadd.xlane.f32.xlu0 %v535
  %v541 = vpop.xlane.xlu0 %540
  %542 = vadd.xlane.f32.xlu0 %v536
  %v543 = vpop.xlane.xlu0 %542
  %544 = vadd.xlane.f32.xlu0 %v537
  %v545 = vpop.xlane.xlu0 %544
  %v546 = vmul.f32 %v539, %v525
  %v547 = vmul.f32 %v541, %v525
  %v548 = vmul.f32 %v543, %v525
  %v549 = vmul.f32 %v545, %v525
  %v550 = vld [vmem:[%s2] sm:$0xff]
  %v551 = vld [vmem:[%s2 + $0x8] sm:$0xff]
  %v552 = vld [vmem:[%s2 + $0x10] sm:$0xff]
  %v553 = vld [vmem:[%s2 + $0x18] sm:$0xff]
  %v554 = vadd.f32 %v546, 1e-05
  %v555 = vadd.f32 %v547, 1e-05
  %v556 = vadd.f32 %v548, 1e-05
  %v557 = vadd.f32 %v549, 1e-05
  %v558 = vrsqrt.pop %v554
  %v559 = vrsqrt.pop %v555
  %v560 = vrsqrt.pop %v556
  %v561 = vrsqrt.pop %v557
  %v562 = vmul.f32 %v550, %v558
  %v563 = vmul.f32 %v551, %v559
  %v564 = vmul.f32 %v552, %v560
  %v565 = vmul.f32 %v553, %v561
  %567 = vset.pattern.permute.xlu0 0
  %568 = vperm.xlu0 %567, %v562
  %v569 = vpop.permute.xlu0 %568
  %572 = vset.pattern.permute.xlu0 0
  %573 = vperm.xlu0 %572, %v563
  %v574 = vpop.permute.xlu0 %573
  %577 = vset.pattern.permute.xlu0 0
  %578 = vperm.xlu0 %577, %v564
  %v579 = vpop.permute.xlu0 %578
  %582 = vset.pattern.permute.xlu0 0
  %583 = vperm.xlu0 %582, %v565
  %v584 = vpop.permute.xlu0 %583
  %v586 = vmul.f32 %v530, %v569
  %v587 = vmul.f32 %v531, %v574
  %v588 = vmul.f32 %v532, %v579
  %v589 = vmul.f32 %v533, %v584
  %v590 = vld [vmem:[%s3] sm:$0xff]
  %v591 = vld [vmem:[%s3 + $0x8] sm:$0xff]
  %v592 = vld [vmem:[%s3 + $0x10] sm:$0xff]
  %v593 = vld [vmem:[%s3 + $0x18] sm:$0xff]
  %595 = vset.pattern.permute.xlu0 0
  %596 = vperm.xlu0 %595, %v590
  %v597 = vpop.permute.xlu0 %596
  %600 = vset.pattern.permute.xlu0 0
  %601 = vperm.xlu0 %600, %v591
  %v602 = vpop.permute.xlu0 %601
  %605 = vset.pattern.permute.xlu0 0
  %606 = vperm.xlu0 %605, %v592
  %v607 = vpop.permute.xlu0 %606
  %610 = vset.pattern.permute.xlu0 0
  %611 = vperm.xlu0 %610, %v593
  %v612 = vpop.permute.xlu0 %611
  %v614 = vadd.f32 %v586, %v597
  %v615 = vadd.f32 %v587, %v602
  %v616 = vadd.f32 %v588, %v607
  %v617 = vadd.f32 %v589, %v612
  %v618 = vmax.f32 %v614, 0.0
  %v619 = vmax.f32 %v615, 0.0
  %v620 = vmax.f32 %v616, 0.0
  %v621 = vmax.f32 %v617, 0.0
  %622 = vst [vmem:[%s4] sm:$0xff] %v618
  %623 = vst [vmem:[%s4 + $0x8] sm:$0xff] %v619
  %624 = vst [vmem:[%s4 + $0x10] sm:$0xff] %v620
  %625 = vst [vmem:[%s4 + $0x18] sm:$0xff] %v621
  // Predicated region
  $region18: #{generator_forward.6} parent=0 // pred_check
    _
  $region19: #{generator_forward.6} parent=0 // pred_check_branch
    %627 = sbr.rel (0) target = $region21
  $region20: #{generator_forward.6} parent=0 // pred_region
    _
  $region21: #{generator_forward.6} parent=0 // pred_fallthru
    _
  // Predicated region
  $region22: #{generator_forward.6} parent=0 // pred_check
    _
  $region23: #{generator_forward.6} parent=0 // pred_check_branch
    %629 = sbr.rel (0) target = $region25
  $region24: #{generator_forward.6} parent=0 // pred_region
    _
  $region25: #{generator_forward.6} parent=0 // pred_fallthru
    _

// kernel: generator_forward.7
$region0: #{generator_forward.7}
  #allocation0 [shape = 'u32[]', space=smem, size = 0x4, offset = 0x4, fixed_abs, tag = 'smem constant byte address 0x4 - core index']
  #allocation1 [shape = 'u32[144,128]{1,0:T(1,128)}', space=vmem, size = 0x12000, scoped, tag = 'internal scratch']
  %s0 = inlined_call_operand.vmem [shape: f32[512,512], index: 0, kind: input, shape index: {}]
  %s1 = inlined_call_operand.vmem [shape: f32[16,512], index: 1, kind: input, shape index: {}]
  %s2 = inlined_call_operand.vmem [shape: f32[16,1], index: 2, kind: input, shape index: {}]
  %s3 = inlined_call_operand.vmem [shape: f32[16,1], index: 3, kind: input, shape index: {}]
  %s4 = inlined_call_operand.vmem [shape: f32[16,512], index: 4, kind: output, shape index: {}]
  %s5 = sld [smem:[#allocation0]]
  $region26: #{generator_forward.7} parent=0
    _
  %s7 = ssub.s32 1, %s5
  %s8 = scalar_select 0, %s7, %s5
  // Predicated region
  $region2: #{generator_forward.7} parent=0 // pred_check
    _
  $region3: #{generator_forward.7} parent=0 // pred_check_branch
    %10 = sbr.rel (0) target = $region5
  $region4: #{generator_forward.7} parent=0 // pred_region
    _
  $region5: #{generator_forward.7} parent=0 // pred_fallthru
    _
  // Predicated region
  $region6: #{generator_forward.7} parent=0 // pred_check
    _
  $region7: #{generator_forward.7} parent=0 // pred_check_branch
    %12 = sbr.rel (0) target = $region9
  $region8: #{generator_forward.7} parent=0 // pred_region
    _
  $region9: #{generator_forward.7} parent=0 // pred_fallthru
    _
  // Predicated region
  $region10: #{generator_forward.7} parent=0 // pred_check
    _
  $region11: #{generator_forward.7} parent=0 // pred_check_branch
    %14 = sbr.rel (0) target = $region13
  $region12: #{generator_forward.7} parent=0 // pred_region
    _
  $region13: #{generator_forward.7} parent=0 // pred_fallthru
    _
  // Predicated region
  $region14: #{generator_forward.7} parent=0 // pred_check
    _
  $region15: #{generator_forward.7} parent=0 // pred_check_branch
    %16 = sbr.rel (0) target = $region17
  $region16: #{generator_forward.7} parent=0 // pred_region
    _
  $region17: #{generator_forward.7} parent=0 // pred_fallthru
    _
  %v17 = vld [vmem:[%s1] sm:$0xff]
  %v18 = vld [vmem:[%s1 + $0x8] sm:$0xff]
  %v19 = vld [vmem:[%s1 + $0x10] sm:$0xff]
  %v20 = vld [vmem:[%s1 + $0x18] sm:$0xff]
  %v21 = vld [vmem:[%s1 + $0x20] sm:$0xff]
  %v22 = vld [vmem:[%s1 + $0x28] sm:$0xff]
  %v23 = vld [vmem:[%s1 + $0x30] sm:$0xff]
  %v24 = vld [vmem:[%s1 + $0x38] sm:$0xff]
  %v25 = vld [vmem:[%s0] sm:$0xff]
  %v26 = vld [vmem:[%s0 + $0x8] sm:$0xff]
  %v27 = vld [vmem:[%s0 + $0x10] sm:$0xff]
  %v28 = vld [vmem:[%s0 + $0x18] sm:$0xff]
  %v29 = vld [vmem:[%s0 + $0x20] sm:$0xff]
  %v30 = vld [vmem:[%s0 + $0x28] sm:$0xff]
  %v31 = vld [vmem:[%s0 + $0x30] sm:$0xff]
  %v32 = vld [vmem:[%s0 + $0x38] sm:$0xff]
  %v33 = vld [vmem:[%s0 + $0x40] sm:$0xff]
  %v34 = vld [vmem:[%s0 + $0x48] sm:$0xff]
  %v35 = vld [vmem:[%s0 + $0x50] sm:$0xff]
  %v36 = vld [vmem:[%s0 + $0x58] sm:$0xff]
  %v37 = vld [vmem:[%s0 + $0x60] sm:$0xff]
  %v38 = vld [vmem:[%s0 + $0x68] sm:$0xff]
  %v39 = vld [vmem:[%s0 + $0x70] sm:$0xff]
  %v40 = vld [vmem:[%s0 + $0x78] sm:$0xff]
  %v41 = vld [vmem:[%s0 + $0x80] sm:$0xff]
  %v42 = vld [vmem:[%s0 + $0x88] sm:$0xff]
  %v43 = vld [vmem:[%s0 + $0x90] sm:$0xff]
  %v44 = vld [vmem:[%s0 + $0x98] sm:$0xff]
  %v45 = vld [vmem:[%s0 + $0xa0] sm:$0xff]
  %v46 = vld [vmem:[%s0 + $0xa8] sm:$0xff]
  %v47 = vld [vmem:[%s0 + $0xb0] sm:$0xff]
  %v48 = vld [vmem:[%s0 + $0xb8] sm:$0xff]
  %v49 = vld [vmem:[%s0 + $0xc0] sm:$0xff]
  %v50 = vld [vmem:[%s0 + $0xc8] sm:$0xff]
  %v51 = vld [vmem:[%s0 + $0xd0] sm:$0xff]
  %v52 = vld [vmem:[%s0 + $0xd8] sm:$0xff]
  %v53 = vld [vmem:[%s0 + $0xe0] sm:$0xff]
  %v54 = vld [vmem:[%s0 + $0xe8] sm:$0xff]
  %v55 = vld [vmem:[%s0 + $0xf0] sm:$0xff]
  %v56 = vld [vmem:[%s0 + $0xf8] sm:$0xff]
  %v57 = vld [vmem:[%s0 + $0x100] sm:$0xff]
  %v58 = vld [vmem:[%s0 + $0x108] sm:$0xff]
  %v59 = vld [vmem:[%s0 + $0x110] sm:$0xff]
  %v60 = vld [vmem:[%s0 + $0x118] sm:$0xff]
  %v61 = vld [vmem:[%s0 + $0x120] sm:$0xff]
  %v62 = vld [vmem:[%s0 + $0x128] sm:$0xff]
  %v63 = vld [vmem:[%s0 + $0x130] sm:$0xff]
  %v64 = vld [vmem:[%s0 + $0x138] sm:$0xff]
  %v65 = vld [vmem:[%s0 + $0x140] sm:$0xff]
  %v66 = vld [vmem:[%s0 + $0x148] sm:$0xff]
  %v67 = vld [vmem:[%s0 + $0x150] sm:$0xff]
  %v68 = vld [vmem:[%s0 + $0x158] sm:$0xff]
  %v69 = vld [vmem:[%s0 + $0x160] sm:$0xff]
  %v70 = vld [vmem:[%s0 + $0x168] sm:$0xff]
  %v71 = vld [vmem:[%s0 + $0x170] sm:$0xff]
  %v72 = vld [vmem:[%s0 + $0x178] sm:$0xff]
  %v73 = vld [vmem:[%s0 + $0x180] sm:$0xff]
  %v74 = vld [vmem:[%s0 + $0x188] sm:$0xff]
  %v75 = vld [vmem:[%s0 + $0x190] sm:$0xff]
  %v76 = vld [vmem:[%s0 + $0x198] sm:$0xff]
  %v77 = vld [vmem:[%s0 + $0x1a0] sm:$0xff]
  %v78 = vld [vmem:[%s0 + $0x1a8] sm:$0xff]
  %v79 = vld [vmem:[%s0 + $0x1b0] sm:$0xff]
  %v80 = vld [vmem:[%s0 + $0x1b8] sm:$0xff]
  %v81 = vld [vmem:[%s0 + $0x1c0] sm:$0xff]
  %v82 = vld [vmem:[%s0 + $0x1c8] sm:$0xff]
  %v83 = vld [vmem:[%s0 + $0x1d0] sm:$0xff]
  %v84 = vld [vmem:[%s0 + $0x1d8] sm:$0xff]
  %v85 = vld [vmem:[%s0 + $0x1e0] sm:$0xff]
  %v86 = vld [vmem:[%s0 + $0x1e8] sm:$0xff]
  %v87 = vld [vmem:[%s0 + $0x1f0] sm:$0xff]
  %v88 = vld [vmem:[%s0 + $0x1f8] sm:$0xff]
  %v89 = vld [vmem:[%s0 + $0x200] sm:$0xff]
  %v90 = vld [vmem:[%s0 + $0x208] sm:$0xff]
  %v91 = vld [vmem:[%s0 + $0x210] sm:$0xff]
  %v92 = vld [vmem:[%s0 + $0x218] sm:$0xff]
  %v93 = vld [vmem:[%s0 + $0x220] sm:$0xff]
  %v94 = vld [vmem:[%s0 + $0x228] sm:$0xff]
  %v95 = vld [vmem:[%s0 + $0x230] sm:$0xff]
  %v96 = vld [vmem:[%s0 + $0x238] sm:$0xff]
  %v97 = vld [vmem:[%s0 + $0x240] sm:$0xff]
  %v98 = vld [vmem:[%s0 + $0x248] sm:$0xff]
  %v99 = vld [vmem:[%s0 + $0x250] sm:$0xff]
  %v100 = vld [vmem:[%s0 + $0x258] sm:$0xff]
  %v101 = vld [vmem:[%s0 + $0x260] sm:$0xff]
  %v102 = vld [vmem:[%s0 + $0x268] sm:$0xff]
  %v103 = vld [vmem:[%s0 + $0x270] sm:$0xff]
  %v104 = vld [vmem:[%s0 + $0x278] sm:$0xff]
  %v105 = vld [vmem:[%s0 + $0x280] sm:$0xff]
  %v106 = vld [vmem:[%s0 + $0x288] sm:$0xff]
  %v107 = vld [vmem:[%s0 + $0x290] sm:$0xff]
  %v108 = vld [vmem:[%s0 + $0x298] sm:$0xff]
  %v109 = vld [vmem:[%s0 + $0x2a0] sm:$0xff]
  %v110 = vld [vmem:[%s0 + $0x2a8] sm:$0xff]
  %v111 = vld [vmem:[%s0 + $0x2b0] sm:$0xff]
  %v112 = vld [vmem:[%s0 + $0x2b8] sm:$0xff]
  %v113 = vld [vmem:[%s0 + $0x2c0] sm:$0xff]
  %v114 = vld [vmem:[%s0 + $0x2c8] sm:$0xff]
  %v115 = vld [vmem:[%s0 + $0x2d0] sm:$0xff]
  %v116 = vld [vmem:[%s0 + $0x2d8] sm:$0xff]
  %v117 = vld [vmem:[%s0 + $0x2e0] sm:$0xff]
  %v118 = vld [vmem:[%s0 + $0x2e8] sm:$0xff]
  %v119 = vld [vmem:[%s0 + $0x2f0] sm:$0xff]
  %v120 = vld [vmem:[%s0 + $0x2f8] sm:$0xff]
  %v121 = vld [vmem:[%s0 + $0x300] sm:$0xff]
  %v122 = vld [vmem:[%s0 + $0x308] sm:$0xff]
  %v123 = vld [vmem:[%s0 + $0x310] sm:$0xff]
  %v124 = vld [vmem:[%s0 + $0x318] sm:$0xff]
  %v125 = vld [vmem:[%s0 + $0x320] sm:$0xff]
  %v126 = vld [vmem:[%s0 + $0x328] sm:$0xff]
  %v127 = vld [vmem:[%s0 + $0x330] sm:$0xff]
  %v128 = vld [vmem:[%s0 + $0x338] sm:$0xff]
  %v129 = vld [vmem:[%s0 + $0x340] sm:$0xff]
  %v130 = vld [vmem:[%s0 + $0x348] sm:$0xff]
  %v131 = vld [vmem:[%s0 + $0x350] sm:$0xff]
  %v132 = vld [vmem:[%s0 + $0x358] sm:$0xff]
  %v133 = vld [vmem:[%s0 + $0x360] sm:$0xff]
  %v134 = vld [vmem:[%s0 + $0x368] sm:$0xff]
  %v135 = vld [vmem:[%s0 + $0x370] sm:$0xff]
  %v136 = vld [vmem:[%s0 + $0x378] sm:$0xff]
  %v137 = vld [vmem:[%s0 + $0x380] sm:$0xff]
  %v138 = vld [vmem:[%s0 + $0x388] sm:$0xff]
  %v139 = vld [vmem:[%s0 + $0x390] sm:$0xff]
  %v140 = vld [vmem:[%s0 + $0x398] sm:$0xff]
  %v141 = vld [vmem:[%s0 + $0x3a0] sm:$0xff]
  %v142 = vld [vmem:[%s0 + $0x3a8] sm:$0xff]
  %v143 = vld [vmem:[%s0 + $0x3b0] sm:$0xff]
  %v144 = vld [vmem:[%s0 + $0x3b8] sm:$0xff]
  %v145 = vld [vmem:[%s0 + $0x3c0] sm:$0xff]
  %v146 = vld [vmem:[%s0 + $0x3c8] sm:$0xff]
  %v147 = vld [vmem:[%s0 + $0x3d0] sm:$0xff]
  %v148 = vld [vmem:[%s0 + $0x3d8] sm:$0xff]
  %v149 = vld [vmem:[%s0 + $0x3e0] sm:$0xff]
  %v150 = vld [vmem:[%s0 + $0x3e8] sm:$0xff]
  %v151 = vld [vmem:[%s0 + $0x3f0] sm:$0xff]
  %v152 = vld [vmem:[%s0 + $0x3f8] sm:$0xff]
  %v153 = vld [vmem:[%s0 + $0x400] sm:$0xff]
  %v154 = vld [vmem:[%s0 + $0x408] sm:$0xff]
  %v155 = vld [vmem:[%s0 + $0x410] sm:$0xff]
  %v156 = vld [vmem:[%s0 + $0x418] sm:$0xff]
  %v157 = vld [vmem:[%s0 + $0x420] sm:$0xff]
  %v158 = vld [vmem:[%s0 + $0x428] sm:$0xff]
  %v159 = vld [vmem:[%s0 + $0x430] sm:$0xff]
  %v160 = vld [vmem:[%s0 + $0x438] sm:$0xff]
  %v161 = vld [vmem:[%s0 + $0x440] sm:$0xff]
  %v162 = vld [vmem:[%s0 + $0x448] sm:$0xff]
  %v163 = vld [vmem:[%s0 + $0x450] sm:$0xff]
  %v164 = vld [vmem:[%s0 + $0x458] sm:$0xff]
  %v165 = vld [vmem:[%s0 + $0x460] sm:$0xff]
  %v166 = vld [vmem:[%s0 + $0x468] sm:$0xff]
  %v167 = vld [vmem:[%s0 + $0x470] sm:$0xff]
  %v168 = vld [vmem:[%s0 + $0x478] sm:$0xff]
  %v169 = vld [vmem:[%s0 + $0x480] sm:$0xff]
  %v170 = vld [vmem:[%s0 + $0x488] sm:$0xff]
  %v171 = vld [vmem:[%s0 + $0x490] sm:$0xff]
  %v172 = vld [vmem:[%s0 + $0x498] sm:$0xff]
  %v173 = vld [vmem:[%s0 + $0x4a0] sm:$0xff]
  %v174 = vld [vmem:[%s0 + $0x4a8] sm:$0xff]
  %v175 = vld [vmem:[%s0 + $0x4b0] sm:$0xff]
  %v176 = vld [vmem:[%s0 + $0x4b8] sm:$0xff]
  %v177 = vld [vmem:[%s0 + $0x4c0] sm:$0xff]
  %v178 = vld [vmem:[%s0 + $0x4c8] sm:$0xff]
  %v179 = vld [vmem:[%s0 + $0x4d0] sm:$0xff]
  %v180 = vld [vmem:[%s0 + $0x4d8] sm:$0xff]
  %v181 = vld [vmem:[%s0 + $0x4e0] sm:$0xff]
  %v182 = vld [vmem:[%s0 + $0x4e8] sm:$0xff]
  %v183 = vld [vmem:[%s0 + $0x4f0] sm:$0xff]
  %v184 = vld [vmem:[%s0 + $0x4f8] sm:$0xff]
  %v185 = vld [vmem:[%s0 + $0x500] sm:$0xff]
  %v186 = vld [vmem:[%s0 + $0x508] sm:$0xff]
  %v187 = vld [vmem:[%s0 + $0x510] sm:$0xff]
  %v188 = vld [vmem:[%s0 + $0x518] sm:$0xff]
  %v189 = vld [vmem:[%s0 + $0x520] sm:$0xff]
  %v190 = vld [vmem:[%s0 + $0x528] sm:$0xff]
  %v191 = vld [vmem:[%s0 + $0x530] sm:$0xff]
  %v192 = vld [vmem:[%s0 + $0x538] sm:$0xff]
  %v193 = vld [vmem:[%s0 + $0x540] sm:$0xff]
  %v194 = vld [vmem:[%s0 + $0x548] sm:$0xff]
  %v195 = vld [vmem:[%s0 + $0x550] sm:$0xff]
  %v196 = vld [vmem:[%s0 + $0x558] sm:$0xff]
  %v197 = vld [vmem:[%s0 + $0x560] sm:$0xff]
  %v198 = vld [vmem:[%s0 + $0x568] sm:$0xff]
  %v199 = vld [vmem:[%s0 + $0x570] sm:$0xff]
  %v200 = vld [vmem:[%s0 + $0x578] sm:$0xff]
  %v201 = vld [vmem:[%s0 + $0x580] sm:$0xff]
  %v202 = vld [vmem:[%s0 + $0x588] sm:$0xff]
  %v203 = vld [vmem:[%s0 + $0x590] sm:$0xff]
  %v204 = vld [vmem:[%s0 + $0x598] sm:$0xff]
  %v205 = vld [vmem:[%s0 + $0x5a0] sm:$0xff]
  %v206 = vld [vmem:[%s0 + $0x5a8] sm:$0xff]
  %v207 = vld [vmem:[%s0 + $0x5b0] sm:$0xff]
  %v208 = vld [vmem:[%s0 + $0x5b8] sm:$0xff]
  %v209 = vld [vmem:[%s0 + $0x5c0] sm:$0xff]
  %v210 = vld [vmem:[%s0 + $0x5c8] sm:$0xff]
  %v211 = vld [vmem:[%s0 + $0x5d0] sm:$0xff]
  %v212 = vld [vmem:[%s0 + $0x5d8] sm:$0xff]
  %v213 = vld [vmem:[%s0 + $0x5e0] sm:$0xff]
  %v214 = vld [vmem:[%s0 + $0x5e8] sm:$0xff]
  %v215 = vld [vmem:[%s0 + $0x5f0] sm:$0xff]
  %v216 = vld [vmem:[%s0 + $0x5f8] sm:$0xff]
  %v217 = vld [vmem:[%s0 + $0x600] sm:$0xff]
  %v218 = vld [vmem:[%s0 + $0x608] sm:$0xff]
  %v219 = vld [vmem:[%s0 + $0x610] sm:$0xff]
  %v220 = vld [vmem:[%s0 + $0x618] sm:$0xff]
  %v221 = vld [vmem:[%s0 + $0x620] sm:$0xff]
  %v222 = vld [vmem:[%s0 + $0x628] sm:$0xff]
  %v223 = vld [vmem:[%s0 + $0x630] sm:$0xff]
  %v224 = vld [vmem:[%s0 + $0x638] sm:$0xff]
  %v225 = vld [vmem:[%s0 + $0x640] sm:$0xff]
  %v226 = vld [vmem:[%s0 + $0x648] sm:$0xff]
  %v227 = vld [vmem:[%s0 + $0x650] sm:$0xff]
  %v228 = vld [vmem:[%s0 + $0x658] sm:$0xff]
  %v229 = vld [vmem:[%s0 + $0x660] sm:$0xff]
  %v230 = vld [vmem:[%s0 + $0x668] sm:$0xff]
  %v231 = vld [vmem:[%s0 + $0x670] sm:$0xff]
  %v232 = vld [vmem:[%s0 + $0x678] sm:$0xff]
  %v233 = vld [vmem:[%s0 + $0x680] sm:$0xff]
  %v234 = vld [vmem:[%s0 + $0x688] sm:$0xff]
  %v235 = vld [vmem:[%s0 + $0x690] sm:$0xff]
  %v236 = vld [vmem:[%s0 + $0x698] sm:$0xff]
  %v237 = vld [vmem:[%s0 + $0x6a0] sm:$0xff]
  %v238 = vld [vmem:[%s0 + $0x6a8] sm:$0xff]
  %v239 = vld [vmem:[%s0 + $0x6b0] sm:$0xff]
  %v240 = vld [vmem:[%s0 + $0x6b8] sm:$0xff]
  %v241 = vld [vmem:[%s0 + $0x6c0] sm:$0xff]
  %v242 = vld [vmem:[%s0 + $0x6c8] sm:$0xff]
  %v243 = vld [vmem:[%s0 + $0x6d0] sm:$0xff]
  %v244 = vld [vmem:[%s0 + $0x6d8] sm:$0xff]
  %v245 = vld [vmem:[%s0 + $0x6e0] sm:$0xff]
  %v246 = vld [vmem:[%s0 + $0x6e8] sm:$0xff]
  %v247 = vld [vmem:[%s0 + $0x6f0] sm:$0xff]
  %v248 = vld [vmem:[%s0 + $0x6f8] sm:$0xff]
  %v249 = vld [vmem:[%s0 + $0x700] sm:$0xff]
  %v250 = vld [vmem:[%s0 + $0x708] sm:$0xff]
  %v251 = vld [vmem:[%s0 + $0x710] sm:$0xff]
  %v252 = vld [vmem:[%s0 + $0x718] sm:$0xff]
  %v253 = vld [vmem:[%s0 + $0x720] sm:$0xff]
  %v254 = vld [vmem:[%s0 + $0x728] sm:$0xff]
  %v255 = vld [vmem:[%s0 + $0x730] sm:$0xff]
  %v256 = vld [vmem:[%s0 + $0x738] sm:$0xff]
  %v257 = vld [vmem:[%s0 + $0x740] sm:$0xff]
  %v258 = vld [vmem:[%s0 + $0x748] sm:$0xff]
  %v259 = vld [vmem:[%s0 + $0x750] sm:$0xff]
  %v260 = vld [vmem:[%s0 + $0x758] sm:$0xff]
  %v261 = vld [vmem:[%s0 + $0x760] sm:$0xff]
  %v262 = vld [vmem:[%s0 + $0x768] sm:$0xff]
  %v263 = vld [vmem:[%s0 + $0x770] sm:$0xff]
  %v264 = vld [vmem:[%s0 + $0x778] sm:$0xff]
  %v265 = vld [vmem:[%s0 + $0x780] sm:$0xff]
  %v266 = vld [vmem:[%s0 + $0x788] sm:$0xff]
  %v267 = vld [vmem:[%s0 + $0x790] sm:$0xff]
  %v268 = vld [vmem:[%s0 + $0x798] sm:$0xff]
  %v269 = vld [vmem:[%s0 + $0x7a0] sm:$0xff]
  %v270 = vld [vmem:[%s0 + $0x7a8] sm:$0xff]
  %v271 = vld [vmem:[%s0 + $0x7b0] sm:$0xff]
  %v272 = vld [vmem:[%s0 + $0x7b8] sm:$0xff]
  %v273 = vld [vmem:[%s0 + $0x7c0] sm:$0xff]
  %v274 = vld [vmem:[%s0 + $0x7c8] sm:$0xff]
  %v275 = vld [vmem:[%s0 + $0x7d0] sm:$0xff]
  %v276 = vld [vmem:[%s0 + $0x7d8] sm:$0xff]
  %v277 = vld [vmem:[%s0 + $0x7e0] sm:$0xff]
  %v278 = vld [vmem:[%s0 + $0x7e8] sm:$0xff]
  %v279 = vld [vmem:[%s0 + $0x7f0] sm:$0xff]
  %v280 = vld [vmem:[%s0 + $0x7f8] sm:$0xff]
  %281 = vmatprep.subr.mxu0 %v26
  %282 = vmatpush1.msra.mxu0 %v25
  %283 = vmatprep.subr.mxu0 %v30
  %284 = vmatpush1.msra.mxu0 %v29
  %285 = vmatprep.subr.mxu0 %v34
  %286 = vmatpush1.msra.mxu0 %v33
  %287 = vmatprep.subr.mxu0 %v38
  %288 = vmatpush1.msra.mxu0 %v37
  %289 = vmatprep.subr.mxu0 %v42
  %290 = vmatpush1.msra.mxu0 %v41
  %291 = vmatprep.subr.mxu0 %v46
  %292 = vmatpush1.msra.mxu0 %v45
  %293 = vmatprep.subr.mxu0 %v50
  %294 = vmatpush1.msra.mxu0 %v49
  %295 = vmatprep.subr.mxu0 %v54
  %296 = vmatpush1.msra.mxu0 %v53
  %297 = vmatprep.subr.mxu0 %v58
  %298 = vmatpush1.msra.mxu0 %v57
  %299 = vmatprep.subr.mxu0 %v62
  %300 = vmatpush1.msra.mxu0 %v61
  %301 = vmatprep.subr.mxu0 %v66
  %302 = vmatpush1.msra.mxu0 %v65
  %303 = vmatprep.subr.mxu0 %v70
  %304 = vmatpush1.msra.mxu0 %v69
  %305 = vmatprep.subr.mxu0 %v74
  %306 = vmatpush1.msra.mxu0 %v73
  %307 = vmatprep.subr.mxu0 %v78
  %308 = vmatpush1.msra.mxu0 %v77
  %309 = vmatprep.subr.mxu0 %v82
  %310 = vmatpush1.msra.mxu0 %v81
  %311 = vmatprep.subr.mxu0 %v86
  %312 = vmatpush1.msra.mxu0 %v85
  %313 = vmatprep.subr.mxu0 %v90
  %314 = vmatpush1.msra.mxu0 %v89
  %315 = vmatprep.subr.mxu0 %v94
  %316 = vmatpush1.msra.mxu0 %v93
  %317 = vmatprep.subr.mxu0 %v98
  %318 = vmatpush1.msra.mxu0 %v97
  %319 = vmatprep.subr.mxu0 %v102
  %320 = vmatpush1.msra.mxu0 %v101
  %321 = vmatprep.subr.mxu0 %v106
  %322 = vmatpush1.msra.mxu0 %v105
  %323 = vmatprep.subr.mxu0 %v110
  %324 = vmatpush1.msra.mxu0 %v109
  %325 = vmatprep.subr.mxu0 %v114
  %326 = vmatpush1.msra.mxu0 %v113
  %327 = vmatprep.subr.mxu0 %v118
  %328 = vmatpush1.msra.mxu0 %v117
  %329 = vmatprep.subr.mxu0 %v122
  %330 = vmatpush1.msra.mxu0 %v121
  %331 = vmatprep.subr.mxu0 %v126
  %332 = vmatpush1.msra.mxu0 %v125
  %333 = vmatprep.subr.mxu0 %v130
  %334 = vmatpush1.msra.mxu0 %v129
  %335 = vmatprep.subr.mxu0 %v134
  %336 = vmatpush1.msra.mxu0 %v133
  %337 = vmatprep.subr.mxu0 %v138
  %338 = vmatpush1.msra.mxu0 %v137
  %339 = vmatprep.subr.mxu0 %v142
  %340 = vmatpush1.msra.mxu0 %v141
  %341 = vmatprep.subr.mxu0 %v146
  %342 = vmatpush1.msra.mxu0 %v145
  %343 = vmatprep.subr.mxu0 %v150
  %344 = vmatpush1.msra.mxu0 %v149
  %345 = vmatprep.mubr.f32.mxu0 %v18
  %346 = vmatmul.mubr.f32.gmra.mrb[0].mxu0 %v17
  %v347 = vpop.f32.mrb[0].mxu0
  %v348 = vadd.f32 0.0, %v347
  %v349 = vpop.f32.mrb[0].mxu0
  %v350 = vadd.f32 0.0, %v349
  %351 = vmatprep.mubr.f32.mxu0 %v22
  %352 = vmatmul.mubr.f32.gmra.mrb[0].mxu0 %v21
  %v353 = vpop.f32.mrb[0].mxu0
  %v354 = vadd.f32 0.0, %v353
  %v355 = vpop.f32.mrb[0].mxu0
  %v356 = vadd.f32 0.0, %v355
  %357 = vdwg.mxu0
  %358 = vmatprep.subr.mxu0 %v154
  %359 = vmatpush1.msra.mxu0 %v153
  %360 = vmatprep.subr.mxu0 %v158
  %361 = vmatpush1.msra.mxu0 %v157
  %362 = vmatprep.subr.mxu0 %v162
  %363 = vmatpush1.msra.mxu0 %v161
  %364 = vmatprep.subr.mxu0 %v166
  %365 = vmatpush1.msra.mxu0 %v165
  %366 = vmatprep.subr.mxu0 %v170
  %367 = vmatpush1.msra.mxu0 %v169
  %368 = vmatprep.subr.mxu0 %v174
  %369 = vmatpush1.msra.mxu0 %v173
  %370 = vmatprep.subr.mxu0 %v178
  %371 = vmatpush1.msra.mxu0 %v177
  %372 = vmatprep.subr.mxu0 %v182
  %373 = vmatpush1.msra.mxu0 %v181
  %374 = vmatprep.subr.mxu0 %v186
  %375 = vmatpush1.msra.mxu0 %v185
  %376 = vmatprep.subr.mxu0 %v190
  %377 = vmatpush1.msra.mxu0 %v189
  %378 = vmatprep.subr.mxu0 %v194
  %379 = vmatpush1.msra.mxu0 %v193
  %380 = vmatprep.subr.mxu0 %v198
  %381 = vmatpush1.msra.mxu0 %v197
  %382 = vmatprep.subr.mxu0 %v202
  %383 = vmatpush1.msra.mxu0 %v201
  %384 = vmatprep.subr.mxu0 %v206
  %385 = vmatpush1.msra.mxu0 %v205
  %386 = vmatprep.subr.mxu0 %v210
  %387 = vmatpush1.msra.mxu0 %v209
  %388 = vmatprep.subr.mxu0 %v214
  %389 = vmatpush1.msra.mxu0 %v213
  %390 = vmatprep.subr.mxu0 %v218
  %391 = vmatpush1.msra.mxu0 %v217
  %392 = vmatprep.subr.mxu0 %v222
  %393 = vmatpush1.msra.mxu0 %v221
  %394 = vmatprep.subr.mxu0 %v226
  %395 = vmatpush1.msra.mxu0 %v225
  %396 = vmatprep.subr.mxu0 %v230
  %397 = vmatpush1.msra.mxu0 %v229
  %398 = vmatprep.subr.mxu0 %v234
  %399 = vmatpush1.msra.mxu0 %v233
  %400 = vmatprep.subr.mxu0 %v238
  %401 = vmatpush1.msra.mxu0 %v237
  %402 = vmatprep.subr.mxu0 %v242
  %403 = vmatpush1.msra.mxu0 %v241
  %404 = vmatprep.subr.mxu0 %v246
  %405 = vmatpush1.msra.mxu0 %v245
  %406 = vmatprep.subr.mxu0 %v250
  %407 = vmatpush1.msra.mxu0 %v249
  %408 = vmatprep.subr.mxu0 %v254
  %409 = vmatpush1.msra.mxu0 %v253
  %410 = vmatprep.subr.mxu0 %v258
  %411 = vmatpush1.msra.mxu0 %v257
  %412 = vmatprep.subr.mxu0 %v262
  %413 = vmatpush1.msra.mxu0 %v261
  %414 = vmatprep.subr.mxu0 %v266
  %415 = vmatpush1.msra.mxu0 %v265
  %416 = vmatprep.subr.mxu0 %v270
  %417 = vmatpush1.msra.mxu0 %v269
  %418 = vmatprep.subr.mxu0 %v274
  %419 = vmatpush1.msra.mxu0 %v273
  %420 = vmatprep.subr.mxu0 %v278
  %421 = vmatpush1.msra.mxu0 %v277
  %422 = vmatprep.mubr.f32.mxu0 %v20
  %423 = vmatmul.mubr.f32.gmra.mrb[0].mxu0 %v19
  %v424 = vpop.f32.mrb[0].mxu0
  %v425 = vadd.f32 %v348, %v424
  %v426 = vpop.f32.mrb[0].mxu0
  %v427 = vadd.f32 %v350, %v426
  %428 = vmatprep.mubr.f32.mxu0 %v24
  %429 = vmatmul.mubr.f32.gmra.mrb[0].mxu0 %v23
  %v430 = vpop.f32.mrb[0].mxu0
  %v431 = vadd.f32 %v354, %v430
  %v432 = vpop.f32.mrb[0].mxu0
  %v433 = vadd.f32 %v356, %v432
  %434 = vdwg.mxu0
  %435 = vmatprep.subr.mxu0 %v28
  %436 = vmatpush1.msra.mxu0 %v27
  %437 = vmatprep.subr.mxu0 %v32
  %438 = vmatpush1.msra.mxu0 %v31
  %439 = vmatprep.subr.mxu0 %v36
  %440 = vmatpush1.msra.mxu0 %v35
  %441 = vmatprep.subr.mxu0 %v40
  %442 = vmatpush1.msra.mxu0 %v39
  %443 = vmatprep.subr.mxu0 %v44
  %444 = vmatpush1.msra.mxu0 %v43
  %445 = vmatprep.subr.mxu0 %v48
  %446 = vmatpush1.msra.mxu0 %v47
  %447 = vmatprep.subr.mxu0 %v52
  %448 = vmatpush1.msra.mxu0 %v51
  %449 = vmatprep.subr.mxu0 %v56
  %450 = vmatpush1.msra.mxu0 %v55
  %451 = vmatprep.subr.mxu0 %v60
  %452 = vmatpush1.msra.mxu0 %v59
  %453 = vmatprep.subr.mxu0 %v64
  %454 = vmatpush1.msra.mxu0 %v63
  %455 = vmatprep.subr.mxu0 %v68
  %456 = vmatpush1.msra.mxu0 %v67
  %457 = vmatprep.subr.mxu0 %v72
  %458 = vmatpush1.msra.mxu0 %v71
  %459 = vmatprep.subr.mxu0 %v76
  %460 = vmatpush1.msra.mxu0 %v75
  %461 = vmatprep.subr.mxu0 %v80
  %462 = vmatpush1.msra.mxu0 %v79
  %463 = vmatprep.subr.mxu0 %v84
  %464 = vmatpush1.msra.mxu0 %v83
  %465 = vmatprep.subr.mxu0 %v88
  %466 = vmatpush1.msra.mxu0 %v87
  %467 = vmatprep.subr.mxu0 %v92
  %468 = vmatpush1.msra.mxu0 %v91
  %469 = vmatprep.subr.mxu0 %v96
  %470 = vmatpush1.msra.mxu0 %v95
  %471 = vmatprep.subr.mxu0 %v100
  %472 = vmatpush1.msra.mxu0 %v99
  %473 = vmatprep.subr.mxu0 %v104
  %474 = vmatpush1.msra.mxu0 %v103
  %475 = vmatprep.subr.mxu0 %v108
  %476 = vmatpush1.msra.mxu0 %v107
  %477 = vmatprep.subr.mxu0 %v112
  %478 = vmatpush1.msra.mxu0 %v111
  %479 = vmatprep.subr.mxu0 %v116
  %480 = vmatpush1.msra.mxu0 %v115
  %481 = vmatprep.subr.mxu0 %v120
  %482 = vmatpush1.msra.mxu0 %v119
  %483 = vmatprep.subr.mxu0 %v124
  %484 = vmatpush1.msra.mxu0 %v123
  %485 = vmatprep.subr.mxu0 %v128
  %486 = vmatpush1.msra.mxu0 %v127
  %487 = vmatprep.subr.mxu0 %v132
  %488 = vmatpush1.msra.mxu0 %v131
  %489 = vmatprep.subr.mxu0 %v136
  %490 = vmatpush1.msra.mxu0 %v135
  %491 = vmatprep.subr.mxu0 %v140
  %492 = vmatpush1.msra.mxu0 %v139
  %493 = vmatprep.subr.mxu0 %v144
  %494 = vmatpush1.msra.mxu0 %v143
  %495 = vmatprep.subr.mxu0 %v148
  %496 = vmatpush1.msra.mxu0 %v147
  %497 = vmatprep.subr.mxu0 %v152
  %498 = vmatpush1.msra.mxu0 %v151
  %499 = vmatprep.mubr.f32.mxu0 %v18
  %500 = vmatmul.mubr.f32.gmra.mrb[0].mxu0 %v17
  %v501 = vpop.f32.mrb[0].mxu0
  %v502 = vadd.f32 0.0, %v501
  %v503 = vpop.f32.mrb[0].mxu0
  %v504 = vadd.f32 0.0, %v503
  %505 = vmatprep.mubr.f32.mxu0 %v22
  %506 = vmatmul.mubr.f32.gmra.mrb[0].mxu0 %v21
  %v507 = vpop.f32.mrb[0].mxu0
  %v508 = vadd.f32 0.0, %v507
  %v509 = vpop.f32.mrb[0].mxu0
  %v510 = vadd.f32 0.0, %v509
  %511 = vdwg.mxu0
  %512 = vmatprep.subr.mxu0 %v156
  %513 = vmatpush1.msra.mxu0 %v155
  %514 = vmatprep.subr.mxu0 %v160
  %515 = vmatpush1.msra.mxu0 %v159
  %516 = vmatprep.subr.mxu0 %v164
  %517 = vmatpush1.msra.mxu0 %v163
  %518 = vmatprep.subr.mxu0 %v168
  %519 = vmatpush1.msra.mxu0 %v167
  %520 = vmatprep.subr.mxu0 %v172
  %521 = vmatpush1.msra.mxu0 %v171
  %522 = vmatprep.subr.mxu0 %v176
  %523 = vmatpush1.msra.mxu0 %v175
  %524 = vmatprep.subr.mxu0 %v180
  %525 = vmatpush1.msra.mxu0 %v179
  %526 = vmatprep.subr.mxu0 %v184
  %527 = vmatpush1.msra.mxu0 %v183
  %528 = vmatprep.subr.mxu0 %v188
  %529 = vmatpush1.msra.mxu0 %v187
  %530 = vmatprep.subr.mxu0 %v192
  %531 = vmatpush1.msra.mxu0 %v191
  %532 = vmatprep.subr.mxu0 %v196
  %533 = vmatpush1.msra.mxu0 %v195
  %534 = vmatprep.subr.mxu0 %v200
  %535 = vmatpush1.msra.mxu0 %v199
  %536 = vmatprep.subr.mxu0 %v204
  %537 = vmatpush1.msra.mxu0 %v203
  %538 = vmatprep.subr.mxu0 %v208
  %539 = vmatpush1.msra.mxu0 %v207
  %540 = vmatprep.subr.mxu0 %v212
  %541 = vmatpush1.msra.mxu0 %v211
  %542 = vmatprep.subr.mxu0 %v216
  %543 = vmatpush1.msra.mxu0 %v215
  %544 = vmatprep.subr.mxu0 %v220
  %545 = vmatpush1.msra.mxu0 %v219
  %546 = vmatprep.subr.mxu0 %v224
  %547 = vmatpush1.msra.mxu0 %v223
  %548 = vmatprep.subr.mxu0 %v228
  %549 = vmatpush1.msra.mxu0 %v227
  %550 = vmatprep.subr.mxu0 %v232
  %551 = vmatpush1.msra.mxu0 %v231
  %552 = vmatprep.subr.mxu0 %v236
  %553 = vmatpush1.msra.mxu0 %v235
  %554 = vmatprep.subr.mxu0 %v240
  %555 = vmatpush1.msra.mxu0 %v239
  %556 = vmatprep.subr.mxu0 %v244
  %557 = vmatpush1.msra.mxu0 %v243
  %558 = vmatprep.subr.mxu0 %v248
  %559 = vmatpush1.msra.mxu0 %v247
  %560 = vmatprep.subr.mxu0 %v252
  %561 = vmatpush1.msra.mxu0 %v251
  %562 = vmatprep.subr.mxu0 %v256
  %563 = vmatpush1.msra.mxu0 %v255
  %564 = vmatprep.subr.mxu0 %v260
  %565 = vmatpush1.msra.mxu0 %v259
  %566 = vmatprep.subr.mxu0 %v264
  %567 = vmatpush1.msra.mxu0 %v263
  %568 = vmatprep.subr.mxu0 %v268
  %569 = vmatpush1.msra.mxu0 %v267
  %570 = vmatprep.subr.mxu0 %v272
  %571 = vmatpush1.msra.mxu0 %v271
  %572 = vmatprep.subr.mxu0 %v276
  %573 = vmatpush1.msra.mxu0 %v275
  %574 = vmatprep.subr.mxu0 %v280
  %575 = vmatpush1.msra.mxu0 %v279
  %576 = vmatprep.mubr.f32.mxu0 %v20
  %577 = vmatmul.mubr.f32.gmra.mrb[0].mxu0 %v19
  %v578 = vpop.f32.mrb[0].mxu0
  %v579 = vadd.f32 %v502, %v578
  %v580 = vpop.f32.mrb[0].mxu0
  %v581 = vadd.f32 %v504, %v580
  %582 = vmatprep.mubr.f32.mxu0 %v24
  %583 = vmatmul.mubr.f32.gmra.mrb[0].mxu0 %v23
  %v584 = vpop.f32.mrb[0].mxu0
  %v585 = vadd.f32 %v508, %v584
  %v586 = vpop.f32.mrb[0].mxu0
  %v587 = vadd.f32 %v510, %v586
  %588 = vdwg.mxu0
  %v589 = vadd.f32 %v425, %v427
  %v590 = vadd.f32 %v589, %v579
  %v591 = vadd.f32 %v590, %v581
  %592 = vadd.xlane.f32.xlu0 %v591
  %v593 = vpop.xlane.xlu0 %592
  %v594 = vadd.f32 %v431, %v433
  %v595 = vadd.f32 %v594, %v585
  %v596 = vadd.f32 %v595, %v587
  %597 = vadd.xlane.f32.xlu0 %v596
  %v598 = vpop.xlane.xlu0 %597
  %v599 = vrcp.pop 512.0
  %v600 = vmul.f32 %v593, %v599
  %v601 = vmul.f32 %v598, %v599
  %v602 = vsub.f32 %v425, %v600
  %v603 = vsub.f32 %v427, %v600
  %v604 = vsub.f32 %v579, %v600
  %v605 = vsub.f32 %v581, %v600
  %v606 = vsub.f32 %v431, %v601
  %v607 = vsub.f32 %v433, %v601
  %v608 = vsub.f32 %v585, %v601
  %v609 = vsub.f32 %v587, %v601
  %v610 = vmul.f32 %v602, %v602
  %v611 = vmul.f32 %v603, %v603
  %v612 = vmul.f32 %v604, %v604
  %v613 = vmul.f32 %v605, %v605
  %v614 = vmul.f32 %v606, %v606
  %v615 = vmul.f32 %v607, %v607
  %v616 = vmul.f32 %v608, %v608
  %v617 = vmul.f32 %v609, %v609
  %v618 = vadd.f32 %v610, %v611
  %v619 = vadd.f32 %v618, %v612
  %v620 = vadd.f32 %v619, %v613
  %621 = vadd.xlane.f32.xlu0 %v620
  %v622 = vpop.xlane.xlu0 %621
  %v623 = vadd.f32 %v614, %v615
  %v624 = vadd.f32 %v623, %v616
  %v625 = vadd.f32 %v624, %v617
  %626 = vadd.xlane.f32.xlu0 %v625
  %v627 = vpop.xlane.xlu0 %626
  %v628 = vmul.f32 %v622, %v599
  %v629 = vmul.f32 %v627, %v599
  %v630 = vld [vmem:[%s2] sm:$0xff]
  %v631 = vld [vmem:[%s2 + $0x8] sm:$0xff]
  %v632 = vadd.f32 %v628, 1e-05
  %v633 = vadd.f32 %v629, 1e-05
  %v634 = vrsqrt.pop %v632
  %v635 = vrsqrt.pop %v633
  %v636 = vmul.f32 %v630, %v634
  %v637 = vmul.f32 %v631, %v635
  %639 = vset.pattern.permute.xlu0 0
  %640 = vperm.xlu0 %639, %v636
  %v641 = vpop.permute.xlu0 %640
  %644 = vset.pattern.permute.xlu0 0
  %645 = vperm.xlu0 %644, %v637
  %v646 = vpop.permute.xlu0 %645
  %v648 = vmul.f32 %v602, %v641
  %v649 = vmul.f32 %v603, %v641
  %v650 = vmul.f32 %v604, %v641
  %v651 = vmul.f32 %v605, %v641
  %v652 = vmul.f32 %v606, %v646
  %v653 = vmul.f32 %v607, %v646
  %v654 = vmul.f32 %v608, %v646
  %v655 = vmul.f32 %v609, %v646
  %v656 = vld [vmem:[%s3] sm:$0xff]
  %v657 = vld [vmem:[%s3 + $0x8] sm:$0xff]
  %659 = vset.pattern.permute.xlu0 0
  %660 = vperm.xlu0 %659, %v656
  %v661 = vpop.permute.xlu0 %660
  %664 = vset.pattern.permute.xlu0 0
  %665 = vperm.xlu0 %664, %v657
  %v666 = vpop.permute.xlu0 %665
  %v668 = vadd.f32 %v648, %v661
  %v669 = vadd.f32 %v649, %v661
  %v670 = vadd.f32 %v650, %v661
  %v671 = vadd.f32 %v651, %v661
  %v672 = vadd.f32 %v652, %v666
  %v673 = vadd.f32 %v653, %v666
  %v674 = vadd.f32 %v654, %v666
  %v675 = vadd.f32 %v655, %v666
  %v676 = vmax.f32 %v668, 0.0
  %v677 = vmax.f32 %v669, 0.0
  %v678 = vmax.f32 %v670, 0.0
  %v679 = vmax.f32 %v671, 0.0
  %v680 = vmax.f32 %v672, 0.0
  %v681 = vmax.f32 %v673, 0.0
  %v682 = vmax.f32 %v674, 0.0
  %v683 = vmax.f32 %v675, 0.0
  %684 = vst [vmem:[%s4] sm:$0xff] %v676
  %685 = vst [vmem:[%s4 + $0x8] sm:$0xff] %v677
  %686 = vst [vmem:[%s4 + $0x10] sm:$0xff] %v678
  %687 = vst [vmem:[%s4 + $0x18] sm:$0xff] %v679
  %688 = vst [vmem:[%s4 + $0x20] sm:$0xff] %v680
  %689 = vst [vmem:[%s4 + $0x28] sm:$0xff] %v681
  %690 = vst [vmem:[%s4 + $0x30] sm:$0xff] %v682
  %691 = vst [vmem:[%s4 + $0x38] sm:$0xff] %v683
  // Predicated region
  $region18: #{generator_forward.7} parent=0 // pred_check
    _
  $region19: #{generator_forward.7} parent=0 // pred_check_branch
    %693 = sbr.rel (0) target = $region21
  $region20: #{generator_forward.7} parent=0 // pred_region
    _
  $region21: #{generator_forward.7} parent=0 // pred_fallthru
    _
  // Predicated region
  $region22: #{generator_forward.7} parent=0 // pred_check
    _
  $region23: #{generator_forward.7} parent=0 // pred_check_branch
    %695 = sbr.rel (0) target = $region25
  $region24: #{generator_forward.7} parent=0 // pred_region
    _
  $region25: #{generator_forward.7} parent=0 // pred_fallthru
    _

// kernel: generator_forward.8
$region0: #{generator_forward.8}
  #allocation0 [shape = 'u32[]', space=smem, size = 0x4, offset = 0x4, fixed_abs, tag = 'smem constant byte address 0x4 - core index']
  #allocation1 [shape = 'u32[144,128]{1,0:T(1,128)}', space=vmem, size = 0x12000, scoped, tag = 'internal scratch']
  %s0 = inlined_call_operand.vmem [shape: f32[256,2048], index: 0, kind: input, shape index: {}]
  %s1 = inlined_call_operand.vmem [shape: f32[8,256], index: 1, kind: input, shape index: {}]
  %s2 = inlined_call_operand.vmem [shape: f32[8,1], index: 2, kind: input, shape index: {}]
  %s3 = inlined_call_operand.vmem [shape: f32[8,1], index: 3, kind: input, shape index: {}]
  %s4 = inlined_call_operand.vmem [shape: f32[8,2048], index: 4, kind: output, shape index: {}]
  %s5 = sld [smem:[#allocation0]]
  $region26: #{generator_forward.8} parent=0
    _
  %s7 = ssub.s32 1, %s5
  %s8 = scalar_select 0, %s7, %s5
  // Predicated region
  $region2: #{generator_forward.8} parent=0 // pred_check
    _
  $region3: #{generator_forward.8} parent=0 // pred_check_branch
    %10 = sbr.rel (0) target = $region5
  $region4: #{generator_forward.8} parent=0 // pred_region
    _
  $region5: #{generator_forward.8} parent=0 // pred_fallthru
    _
  // Predicated region
  $region6: #{generator_forward.8} parent=0 // pred_check
    _
  $region7: #{generator_forward.8} parent=0 // pred_check_branch
    %12 = sbr.rel (0) target = $region9
  $region8: #{generator_forward.8} parent=0 // pred_region
    _
  $region9: #{generator_forward.8} parent=0 // pred_fallthru
    _
  // Predicated region
  $region10: #{generator_forward.8} parent=0 // pred_check
    _
  $region11: #{generator_forward.8} parent=0 // pred_check_branch
    %14 = sbr.rel (0) target = $region13
  $region12: #{generator_forward.8} parent=0 // pred_region
    _
  $region13: #{generator_forward.8} parent=0 // pred_fallthru
    _
  // Predicated region
  $region14: #{generator_forward.8} parent=0 // pred_check
    _
  $region15: #{generator_forward.8} parent=0 // pred_check_branch
    %16 = sbr.rel (0) target = $region17
  $region16: #{generator_forward.8} parent=0 // pred_region
    _
  $region17: #{generator_forward.8} parent=0 // pred_fallthru
    _
  %v17 = vld [vmem:[%s1] sm:$0xff]
  %v18 = vld [vmem:[%s1 + $0x8] sm:$0xff]
  %v19 = vld [vmem:[%s0] sm:$0xff]
  %v20 = vld [vmem:[%s0 + $0x8] sm:$0xff]
  %v21 = vld [vmem:[%s0 + $0x10] sm:$0xff]
  %v22 = vld [vmem:[%s0 + $0x18] sm:$0xff]
  %v23 = vld [vmem:[%s0 + $0x20] sm:$0xff]
  %v24 = vld [vmem:[%s0 + $0x28] sm:$0xff]
  %v25 = vld [vmem:[%s0 + $0x30] sm:$0xff]
  %v26 = vld [vmem:[%s0 + $0x38] sm:$0xff]
  %v27 = vld [vmem:[%s0 + $0x40] sm:$0xff]
  %v28 = vld [vmem:[%s0 + $0x48] sm:$0xff]
  %v29 = vld [vmem:[%s0 + $0x50] sm:$0xff]
  %v30 = vld [vmem:[%s0 + $0x58] sm:$0xff]
  %v31 = vld [vmem:[%s0 + $0x60] sm:$0xff]
  %v32 = vld [vmem:[%s0 + $0x68] sm:$0xff]
  %v33 = vld [vmem:[%s0 + $0x70] sm:$0xff]
  %v34 = vld [vmem:[%s0 + $0x78] sm:$0xff]
  %v35 = vld [vmem:[%s0 + $0x80] sm:$0xff]
  %v36 = vld [vmem:[%s0 + $0x88] sm:$0xff]
  %v37 = vld [vmem:[%s0 + $0x90] sm:$0xff]
  %v38 = vld [vmem:[%s0 + $0x98] sm:$0xff]
  %v39 = vld [vmem:[%s0 + $0xa0] sm:$0xff]
  %v40 = vld [vmem:[%s0 + $0xa8] sm:$0xff]
  %v41 = vld [vmem:[%s0 + $0xb0] sm:$0xff]
  %v42 = vld [vmem:[%s0 + $0xb8] sm:$0xff]
  %v43 = vld [vmem:[%s0 + $0xc0] sm:$0xff]
  %v44 = vld [vmem:[%s0 + $0xc8] sm:$0xff]
  %v45 = vld [vmem:[%s0 + $0xd0] sm:$0xff]
  %v46 = vld [vmem:[%s0 + $0xd8] sm:$0xff]
  %v47 = vld [vmem:[%s0 + $0xe0] sm:$0xff]
  %v48 = vld [vmem:[%s0 + $0xe8] sm:$0xff]
  %v49 = vld [vmem:[%s0 + $0xf0] sm:$0xff]
  %v50 = vld [vmem:[%s0 + $0xf8] sm:$0xff]
  %v51 = vld [vmem:[%s0 + $0x100] sm:$0xff]
  %v52 = vld [vmem:[%s0 + $0x108] sm:$0xff]
  %v53 = vld [vmem:[%s0 + $0x110] sm:$0xff]
  %v54 = vld [vmem:[%s0 + $0x118] sm:$0xff]
  %v55 = vld [vmem:[%s0 + $0x120] sm:$0xff]
  %v56 = vld [vmem:[%s0 + $0x128] sm:$0xff]
  %v57 = vld [vmem:[%s0 + $0x130] sm:$0xff]
  %v58 = vld [vmem:[%s0 + $0x138] sm:$0xff]
  %v59 = vld [vmem:[%s0 + $0x140] sm:$0xff]
  %v60 = vld [vmem:[%s0 + $0x148] sm:$0xff]
  %v61 = vld [vmem:[%s0 + $0x150] sm:$0xff]
  %v62 = vld [vmem:[%s0 + $0x158] sm:$0xff]
  %v63 = vld [vmem:[%s0 + $0x160] sm:$0xff]
  %v64 = vld [vmem:[%s0 + $0x168] sm:$0xff]
  %v65 = vld [vmem:[%s0 + $0x170] sm:$0xff]
  %v66 = vld [vmem:[%s0 + $0x178] sm:$0xff]
  %v67 = vld [vmem:[%s0 + $0x180] sm:$0xff]
  %v68 = vld [vmem:[%s0 + $0x188] sm:$0xff]
  %v69 = vld [vmem:[%s0 + $0x190] sm:$0xff]
  %v70 = vld [vmem:[%s0 + $0x198] sm:$0xff]
  %v71 = vld [vmem:[%s0 + $0x1a0] sm:$0xff]
  %v72 = vld [vmem:[%s0 + $0x1a8] sm:$0xff]
  %v73 = vld [vmem:[%s0 + $0x1b0] sm:$0xff]
  %v74 = vld [vmem:[%s0 + $0x1b8] sm:$0xff]
  %v75 = vld [vmem:[%s0 + $0x1c0] sm:$0xff]
  %v76 = vld [vmem:[%s0 + $0x1c8] sm:$0xff]
  %v77 = vld [vmem:[%s0 + $0x1d0] sm:$0xff]
  %v78 = vld [vmem:[%s0 + $0x1d8] sm:$0xff]
  %v79 = vld [vmem:[%s0 + $0x1e0] sm:$0xff]
  %v80 = vld [vmem:[%s0 + $0x1e8] sm:$0xff]
  %v81 = vld [vmem:[%s0 + $0x1f0] sm:$0xff]
  %v82 = vld [vmem:[%s0 + $0x1f8] sm:$0xff]
  %v83 = vld [vmem:[%s0 + $0x200] sm:$0xff]
  %v84 = vld [vmem:[%s0 + $0x208] sm:$0xff]
  %v85 = vld [vmem:[%s0 + $0x210] sm:$0xff]
  %v86 = vld [vmem:[%s0 + $0x218] sm:$0xff]
  %v87 = vld [vmem:[%s0 + $0x220] sm:$0xff]
  %v88 = vld [vmem:[%s0 + $0x228] sm:$0xff]
  %v89 = vld [vmem:[%s0 + $0x230] sm:$0xff]
  %v90 = vld [vmem:[%s0 + $0x238] sm:$0xff]
  %v91 = vld [vmem:[%s0 + $0x240] sm:$0xff]
  %v92 = vld [vmem:[%s0 + $0x248] sm:$0xff]
  %v93 = vld [vmem:[%s0 + $0x250] sm:$0xff]
  %v94 = vld [vmem:[%s0 + $0x258] sm:$0xff]
  %v95 = vld [vmem:[%s0 + $0x260] sm:$0xff]
  %v96 = vld [vmem:[%s0 + $0x268] sm:$0xff]
  %v97 = vld [vmem:[%s0 + $0x270] sm:$0xff]
  %v98 = vld [vmem:[%s0 + $0x278] sm:$0xff]
  %v99 = vld [vmem:[%s0 + $0x280] sm:$0xff]
  %v100 = vld [vmem:[%s0 + $0x288] sm:$0xff]
  %v101 = vld [vmem:[%s0 + $0x290] sm:$0xff]
  %v102 = vld [vmem:[%s0 + $0x298] sm:$0xff]
  %v103 = vld [vmem:[%s0 + $0x2a0] sm:$0xff]
  %v104 = vld [vmem:[%s0 + $0x2a8] sm:$0xff]
  %v105 = vld [vmem:[%s0 + $0x2b0] sm:$0xff]
  %v106 = vld [vmem:[%s0 + $0x2b8] sm:$0xff]
  %v107 = vld [vmem:[%s0 + $0x2c0] sm:$0xff]
  %v108 = vld [vmem:[%s0 + $0x2c8] sm:$0xff]
  %v109 = vld [vmem:[%s0 + $0x2d0] sm:$0xff]
  %v110 = vld [vmem:[%s0 + $0x2d8] sm:$0xff]
  %v111 = vld [vmem:[%s0 + $0x2e0] sm:$0xff]
  %v112 = vld [vmem:[%s0 + $0x2e8] sm:$0xff]
  %v113 = vld [vmem:[%s0 + $0x2f0] sm:$0xff]
  %v114 = vld [vmem:[%s0 + $0x2f8] sm:$0xff]
  %v115 = vld [vmem:[%s0 + $0x300] sm:$0xff]
  %v116 = vld [vmem:[%s0 + $0x308] sm:$0xff]
  %v117 = vld [vmem:[%s0 + $0x310] sm:$0xff]
  %v118 = vld [vmem:[%s0 + $0x318] sm:$0xff]
  %v119 = vld [vmem:[%s0 + $0x320] sm:$0xff]
  %v120 = vld [vmem:[%s0 + $0x328] sm:$0xff]
  %v121 = vld [vmem:[%s0 + $0x330] sm:$0xff]
  %v122 = vld [vmem:[%s0 + $0x338] sm:$0xff]
  %v123 = vld [vmem:[%s0 + $0x340] sm:$0xff]
  %v124 = vld [vmem:[%s0 + $0x348] sm:$0xff]
  %v125 = vld [vmem:[%s0 + $0x350] sm:$0xff]
  %v126 = vld [vmem:[%s0 + $0x358] sm:$0xff]
  %v127 = vld [vmem:[%s0 + $0x360] sm:$0xff]
  %v128 = vld [vmem:[%s0 + $0x368] sm:$0xff]
  %v129 = vld [vmem:[%s0 + $0x370] sm:$0xff]
  %v130 = vld [vmem:[%s0 + $0x378] sm:$0xff]
  %v131 = vld [vmem:[%s0 + $0x380] sm:$0xff]
  %v132 = vld [vmem:[%s0 + $0x388] sm:$0xff]
  %v133 = vld [vmem:[%s0 + $0x390] sm:$0xff]
  %v134 = vld [vmem:[%s0 + $0x398] sm:$0xff]
  %v135 = vld [vmem:[%s0 + $0x3a0] sm:$0xff]
  %v136 = vld [vmem:[%s0 + $0x3a8] sm:$0xff]
  %v137 = vld [vmem:[%s0 + $0x3b0] sm:$0xff]
  %v138 = vld [vmem:[%s0 + $0x3b8] sm:$0xff]
  %v139 = vld [vmem:[%s0 + $0x3c0] sm:$0xff]
  %v140 = vld [vmem:[%s0 + $0x3c8] sm:$0xff]
  %v141 = vld [vmem:[%s0 + $0x3d0] sm:$0xff]
  %v142 = vld [vmem:[%s0 + $0x3d8] sm:$0xff]
  %v143 = vld [vmem:[%s0 + $0x3e0] sm:$0xff]
  %v144 = vld [vmem:[%s0 + $0x3e8] sm:$0xff]
  %v145 = vld [vmem:[%s0 + $0x3f0] sm:$0xff]
  %v146 = vld [vmem:[%s0 + $0x3f8] sm:$0xff]
  %v147 = vld [vmem:[%s0 + $0x400] sm:$0xff]
  %v148 = vld [vmem:[%s0 + $0x408] sm:$0xff]
  %v149 = vld [vmem:[%s0 + $0x410] sm:$0xff]
  %v150 = vld [vmem:[%s0 + $0x418] sm:$0xff]
  %v151 = vld [vmem:[%s0 + $0x420] sm:$0xff]
  %v152 = vld [vmem:[%s0 + $0x428] sm:$0xff]
  %v153 = vld [vmem:[%s0 + $0x430] sm:$0xff]
  %v154 = vld [vmem:[%s0 + $0x438] sm:$0xff]
  %v155 = vld [vmem:[%s0 + $0x440] sm:$0xff]
  %v156 = vld [vmem:[%s0 + $0x448] sm:$0xff]
  %v157 = vld [vmem:[%s0 + $0x450] sm:$0xff]
  %v158 = vld [vmem:[%s0 + $0x458] sm:$0xff]
  %v159 = vld [vmem:[%s0 + $0x460] sm:$0xff]
  %v160 = vld [vmem:[%s0 + $0x468] sm:$0xff]
  %v161 = vld [vmem:[%s0 + $0x470] sm:$0xff]
  %v162 = vld [vmem:[%s0 + $0x478] sm:$0xff]
  %v163 = vld [vmem:[%s0 + $0x480] sm:$0xff]
  %v164 = vld [vmem:[%s0 + $0x488] sm:$0xff]
  %v165 = vld [vmem:[%s0 + $0x490] sm:$0xff]
  %v166 = vld [vmem:[%s0 + $0x498] sm:$0xff]
  %v167 = vld [vmem:[%s0 + $0x4a0] sm:$0xff]
  %v168 = vld [vmem:[%s0 + $0x4a8] sm:$0xff]
  %v169 = vld [vmem:[%s0 + $0x4b0] sm:$0xff]
  %v170 = vld [vmem:[%s0 + $0x4b8] sm:$0xff]
  %v171 = vld [vmem:[%s0 + $0x4c0] sm:$0xff]
  %v172 = vld [vmem:[%s0 + $0x4c8] sm:$0xff]
  %v173 = vld [vmem:[%s0 + $0x4d0] sm:$0xff]
  %v174 = vld [vmem:[%s0 + $0x4d8] sm:$0xff]
  %v175 = vld [vmem:[%s0 + $0x4e0] sm:$0xff]
  %v176 = vld [vmem:[%s0 + $0x4e8] sm:$0xff]
  %v177 = vld [vmem:[%s0 + $0x4f0] sm:$0xff]
  %v178 = vld [vmem:[%s0 + $0x4f8] sm:$0xff]
  %v179 = vld [vmem:[%s0 + $0x500] sm:$0xff]
  %v180 = vld [vmem:[%s0 + $0x508] sm:$0xff]
  %v181 = vld [vmem:[%s0 + $0x510] sm:$0xff]
  %v182 = vld [vmem:[%s0 + $0x518] sm:$0xff]
  %v183 = vld [vmem:[%s0 + $0x520] sm:$0xff]
  %v184 = vld [vmem:[%s0 + $0x528] sm:$0xff]
  %v185 = vld [vmem:[%s0 + $0x530] sm:$0xff]
  %v186 = vld [vmem:[%s0 + $0x538] sm:$0xff]
  %v187 = vld [vmem:[%s0 + $0x540] sm:$0xff]
  %v188 = vld [vmem:[%s0 + $0x548] sm:$0xff]
  %v189 = vld [vmem:[%s0 + $0x550] sm:$0xff]
  %v190 = vld [vmem:[%s0 + $0x558] sm:$0xff]
  %v191 = vld [vmem:[%s0 + $0x560] sm:$0xff]
  %v192 = vld [vmem:[%s0 + $0x568] sm:$0xff]
  %v193 = vld [vmem:[%s0 + $0x570] sm:$0xff]
  %v194 = vld [vmem:[%s0 + $0x578] sm:$0xff]
  %v195 = vld [vmem:[%s0 + $0x580] sm:$0xff]
  %v196 = vld [vmem:[%s0 + $0x588] sm:$0xff]
  %v197 = vld [vmem:[%s0 + $0x590] sm:$0xff]
  %v198 = vld [vmem:[%s0 + $0x598] sm:$0xff]
  %v199 = vld [vmem:[%s0 + $0x5a0] sm:$0xff]
  %v200 = vld [vmem:[%s0 + $0x5a8] sm:$0xff]
  %v201 = vld [vmem:[%s0 + $0x5b0] sm:$0xff]
  %v202 = vld [vmem:[%s0 + $0x5b8] sm:$0xff]
  %v203 = vld [vmem:[%s0 + $0x5c0] sm:$0xff]
  %v204 = vld [vmem:[%s0 + $0x5c8] sm:$0xff]
  %v205 = vld [vmem:[%s0 + $0x5d0] sm:$0xff]
  %v206 = vld [vmem:[%s0 + $0x5d8] sm:$0xff]
  %v207 = vld [vmem:[%s0 + $0x5e0] sm:$0xff]
  %v208 = vld [vmem:[%s0 + $0x5e8] sm:$0xff]
  %v209 = vld [vmem:[%s0 + $0x5f0] sm:$0xff]
  %v210 = vld [vmem:[%s0 + $0x5f8] sm:$0xff]
  %v211 = vld [vmem:[%s0 + $0x600] sm:$0xff]
  %v212 = vld [vmem:[%s0 + $0x608] sm:$0xff]
  %v213 = vld [vmem:[%s0 + $0x610] sm:$0xff]
  %v214 = vld [vmem:[%s0 + $0x618] sm:$0xff]
  %v215 = vld [vmem:[%s0 + $0x620] sm:$0xff]
  %v216 = vld [vmem:[%s0 + $0x628] sm:$0xff]
  %v217 = vld [vmem:[%s0 + $0x630] sm:$0xff]
  %v218 = vld [vmem:[%s0 + $0x638] sm:$0xff]
  %v219 = vld [vmem:[%s0 + $0x640] sm:$0xff]
  %v220 = vld [vmem:[%s0 + $0x648] sm:$0xff]
  %v221 = vld [vmem:[%s0 + $0x650] sm:$0xff]
  %v222 = vld [vmem:[%s0 + $0x658] sm:$0xff]
  %v223 = vld [vmem:[%s0 + $0x660] sm:$0xff]
  %v224 = vld [vmem:[%s0 + $0x668] sm:$0xff]
  %v225 = vld [vmem:[%s0 + $0x670] sm:$0xff]
  %v226 = vld [vmem:[%s0 + $0x678] sm:$0xff]
  %v227 = vld [vmem:[%s0 + $0x680] sm:$0xff]
  %v228 = vld [vmem:[%s0 + $0x688] sm:$0xff]
  %v229 = vld [vmem:[%s0 + $0x690] sm:$0xff]
  %v230 = vld [vmem:[%s0 + $0x698] sm:$0xff]
  %v231 = vld [vmem:[%s0 + $0x6a0] sm:$0xff]
  %v232 = vld [vmem:[%s0 + $0x6a8] sm:$0xff]
  %v233 = vld [vmem:[%s0 + $0x6b0] sm:$0xff]
  %v234 = vld [vmem:[%s0 + $0x6b8] sm:$0xff]
  %v235 = vld [vmem:[%s0 + $0x6c0] sm:$0xff]
  %v236 = vld [vmem:[%s0 + $0x6c8] sm:$0xff]
  %v237 = vld [vmem:[%s0 + $0x6d0] sm:$0xff]
  %v238 = vld [vmem:[%s0 + $0x6d8] sm:$0xff]
  %v239 = vld [vmem:[%s0 + $0x6e0] sm:$0xff]
  %v240 = vld [vmem:[%s0 + $0x6e8] sm:$0xff]
  %v241 = vld [vmem:[%s0 + $0x6f0] sm:$0xff]
  %v242 = vld [vmem:[%s0 + $0x6f8] sm:$0xff]
  %v243 = vld [vmem:[%s0 + $0x700] sm:$0xff]
  %v244 = vld [vmem:[%s0 + $0x708] sm:$0xff]
  %v245 = vld [vmem:[%s0 + $0x710] sm:$0xff]
  %v246 = vld [vmem:[%s0 + $0x718] sm:$0xff]
  %v247 = vld [vmem:[%s0 + $0x720] sm:$0xff]
  %v248 = vld [vmem:[%s0 + $0x728] sm:$0xff]
  %v249 = vld [vmem:[%s0 + $0x730] sm:$0xff]
  %v250 = vld [vmem:[%s0 + $0x738] sm:$0xff]
  %v251 = vld [vmem:[%s0 + $0x740] sm:$0xff]
  %v252 = vld [vmem:[%s0 + $0x748] sm:$0xff]
  %v253 = vld [vmem:[%s0 + $0x750] sm:$0xff]
  %v254 = vld [vmem:[%s0 + $0x758] sm:$0xff]
  %v255 = vld [vmem:[%s0 + $0x760] sm:$0xff]
  %v256 = vld [vmem:[%s0 + $0x768] sm:$0xff]
  %v257 = vld [vmem:[%s0 + $0x770] sm:$0xff]
  %v258 = vld [vmem:[%s0 + $0x778] sm:$0xff]
  %v259 = vld [vmem:[%s0 + $0x780] sm:$0xff]
  %v260 = vld [vmem:[%s0 + $0x788] sm:$0xff]
  %v261 = vld [vmem:[%s0 + $0x790] sm:$0xff]
  %v262 = vld [vmem:[%s0 + $0x798] sm:$0xff]
  %v263 = vld [vmem:[%s0 + $0x7a0] sm:$0xff]
  %v264 = vld [vmem:[%s0 + $0x7a8] sm:$0xff]
  %v265 = vld [vmem:[%s0 + $0x7b0] sm:$0xff]
  %v266 = vld [vmem:[%s0 + $0x7b8] sm:$0xff]
  %v267 = vld [vmem:[%s0 + $0x7c0] sm:$0xff]
  %v268 = vld [vmem:[%s0 + $0x7c8] sm:$0xff]
  %v269 = vld [vmem:[%s0 + $0x7d0] sm:$0xff]
  %v270 = vld [vmem:[%s0 + $0x7d8] sm:$0xff]
  %v271 = vld [vmem:[%s0 + $0x7e0] sm:$0xff]
  %v272 = vld [vmem:[%s0 + $0x7e8] sm:$0xff]
  %v273 = vld [vmem:[%s0 + $0x7f0] sm:$0xff]
  %v274 = vld [vmem:[%s0 + $0x7f8] sm:$0xff]
  %v275 = vld [vmem:[%s0 + $0x800] sm:$0xff]
  %v276 = vld [vmem:[%s0 + $0x808] sm:$0xff]
  %v277 = vld [vmem:[%s0 + $0x810] sm:$0xff]
  %v278 = vld [vmem:[%s0 + $0x818] sm:$0xff]
  %v279 = vld [vmem:[%s0 + $0x820] sm:$0xff]
  %v280 = vld [vmem:[%s0 + $0x828] sm:$0xff]
  %v281 = vld [vmem:[%s0 + $0x830] sm:$0xff]
  %v282 = vld [vmem:[%s0 + $0x838] sm:$0xff]
  %v283 = vld [vmem:[%s0 + $0x840] sm:$0xff]
  %v284 = vld [vmem:[%s0 + $0x848] sm:$0xff]
  %v285 = vld [vmem:[%s0 + $0x850] sm:$0xff]
  %v286 = vld [vmem:[%s0 + $0x858] sm:$0xff]
  %v287 = vld [vmem:[%s0 + $0x860] sm:$0xff]
  %v288 = vld [vmem:[%s0 + $0x868] sm:$0xff]
  %v289 = vld [vmem:[%s0 + $0x870] sm:$0xff]
  %v290 = vld [vmem:[%s0 + $0x878] sm:$0xff]
  %v291 = vld [vmem:[%s0 + $0x880] sm:$0xff]
  %v292 = vld [vmem:[%s0 + $0x888] sm:$0xff]
  %v293 = vld [vmem:[%s0 + $0x890] sm:$0xff]
  %v294 = vld [vmem:[%s0 + $0x898] sm:$0xff]
  %v295 = vld [vmem:[%s0 + $0x8a0] sm:$0xff]
  %v296 = vld [vmem:[%s0 + $0x8a8] sm:$0xff]
  %v297 = vld [vmem:[%s0 + $0x8b0] sm:$0xff]
  %v298 = vld [vmem:[%s0 + $0x8b8] sm:$0xff]
  %v299 = vld [vmem:[%s0 + $0x8c0] sm:$0xff]
  %v300 = vld [vmem:[%s0 + $0x8c8] sm:$0xff]
  %v301 = vld [vmem:[%s0 + $0x8d0] sm:$0xff]
  %v302 = vld [vmem:[%s0 + $0x8d8] sm:$0xff]
  %v303 = vld [vmem:[%s0 + $0x8e0] sm:$0xff]
  %v304 = vld [vmem:[%s0 + $0x8e8] sm:$0xff]
  %v305 = vld [vmem:[%s0 + $0x8f0] sm:$0xff]
  %v306 = vld [vmem:[%s0 + $0x8f8] sm:$0xff]
  %v307 = vld [vmem:[%s0 + $0x900] sm:$0xff]
  %v308 = vld [vmem:[%s0 + $0x908] sm:$0xff]
  %v309 = vld [vmem:[%s0 + $0x910] sm:$0xff]
  %v310 = vld [vmem:[%s0 + $0x918] sm:$0xff]
  %v311 = vld [vmem:[%s0 + $0x920] sm:$0xff]
  %v312 = vld [vmem:[%s0 + $0x928] sm:$0xff]
  %v313 = vld [vmem:[%s0 + $0x930] sm:$0xff]
  %v314 = vld [vmem:[%s0 + $0x938] sm:$0xff]
  %v315 = vld [vmem:[%s0 + $0x940] sm:$0xff]
  %v316 = vld [vmem:[%s0 + $0x948] sm:$0xff]
  %v317 = vld [vmem:[%s0 + $0x950] sm:$0xff]
  %v318 = vld [vmem:[%s0 + $0x958] sm:$0xff]
  %v319 = vld [vmem:[%s0 + $0x960] sm:$0xff]
  %v320 = vld [vmem:[%s0 + $0x968] sm:$0xff]
  %v321 = vld [vmem:[%s0 + $0x970] sm:$0xff]
  %v322 = vld [vmem:[%s0 + $0x978] sm:$0xff]
  %v323 = vld [vmem:[%s0 + $0x980] sm:$0xff]
  %v324 = vld [vmem:[%s0 + $0x988] sm:$0xff]
  %v325 = vld [vmem:[%s0 + $0x990] sm:$0xff]
  %v326 = vld [vmem:[%s0 + $0x998] sm:$0xff]
  %v327 = vld [vmem:[%s0 + $0x9a0] sm:$0xff]
  %v328 = vld [vmem:[%s0 + $0x9a8] sm:$0xff]
  %v329 = vld [vmem:[%s0 + $0x9b0] sm:$0xff]
  %v330 = vld [vmem:[%s0 + $0x9b8] sm:$0xff]
  %v331 = vld [vmem:[%s0 + $0x9c0] sm:$0xff]
  %v332 = vld [vmem:[%s0 + $0x9c8] sm:$0xff]
  %v333 = vld [vmem:[%s0 + $0x9d0] sm:$0xff]
  %v334 = vld [vmem:[%s0 + $0x9d8] sm:$0xff]
  %v335 = vld [vmem:[%s0 + $0x9e0] sm:$0xff]
  %v336 = vld [vmem:[%s0 + $0x9e8] sm:$0xff]
  %v337 = vld [vmem:[%s0 + $0x9f0] sm:$0xff]
  %v338 = vld [vmem:[%s0 + $0x9f8] sm:$0xff]
  %v339 = vld [vmem:[%s0 + $0xa00] sm:$0xff]
  %v340 = vld [vmem:[%s0 + $0xa08] sm:$0xff]
  %v341 = vld [vmem:[%s0 + $0xa10] sm:$0xff]
  %v342 = vld [vmem:[%s0 + $0xa18] sm:$0xff]
  %v343 = vld [vmem:[%s0 + $0xa20] sm:$0xff]
  %v344 = vld [vmem:[%s0 + $0xa28] sm:$0xff]
  %v345 = vld [vmem:[%s0 + $0xa30] sm:$0xff]
  %v346 = vld [vmem:[%s0 + $0xa38] sm:$0xff]
  %v347 = vld [vmem:[%s0 + $0xa40] sm:$0xff]
  %v348 = vld [vmem:[%s0 + $0xa48] sm:$0xff]
  %v349 = vld [vmem:[%s0 + $0xa50] sm:$0xff]
  %v350 = vld [vmem:[%s0 + $0xa58] sm:$0xff]
  %v351 = vld [vmem:[%s0 + $0xa60] sm:$0xff]
  %v352 = vld [vmem:[%s0 + $0xa68] sm:$0xff]
  %v353 = vld [vmem:[%s0 + $0xa70] sm:$0xff]
  %v354 = vld [vmem:[%s0 + $0xa78] sm:$0xff]
  %v355 = vld [vmem:[%s0 + $0xa80] sm:$0xff]
  %v356 = vld [vmem:[%s0 + $0xa88] sm:$0xff]
  %v357 = vld [vmem:[%s0 + $0xa90] sm:$0xff]
  %v358 = vld [vmem:[%s0 + $0xa98] sm:$0xff]
  %v359 = vld [vmem:[%s0 + $0xaa0] sm:$0xff]
  %v360 = vld [vmem:[%s0 + $0xaa8] sm:$0xff]
  %v361 = vld [vmem:[%s0 + $0xab0] sm:$0xff]
  %v362 = vld [vmem:[%s0 + $0xab8] sm:$0xff]
  %v363 = vld [vmem:[%s0 + $0xac0] sm:$0xff]
  %v364 = vld [vmem:[%s0 + $0xac8] sm:$0xff]
  %v365 = vld [vmem:[%s0 + $0xad0] sm:$0xff]
  %v366 = vld [vmem:[%s0 + $0xad8] sm:$0xff]
  %v367 = vld [vmem:[%s0 + $0xae0] sm:$0xff]
  %v368 = vld [vmem:[%s0 + $0xae8] sm:$0xff]
  %v369 = vld [vmem:[%s0 + $0xaf0] sm:$0xff]
  %v370 = vld [vmem:[%s0 + $0xaf8] sm:$0xff]
  %v371 = vld [vmem:[%s0 + $0xb00] sm:$0xff]
  %v372 = vld [vmem:[%s0 + $0xb08] sm:$0xff]
  %v373 = vld [vmem:[%s0 + $0xb10] sm:$0xff]
  %v374 = vld [vmem:[%s0 + $0xb18] sm:$0xff]
  %v375 = vld [vmem:[%s0 + $0xb20] sm:$0xff]
  %v376 = vld [vmem:[%s0 + $0xb28] sm:$0xff]
  %v377 = vld [vmem:[%s0 + $0xb30] sm:$0xff]
  %v378 = vld [vmem:[%s0 + $0xb38] sm:$0xff]
  %v379 = vld [vmem:[%s0 + $0xb40] sm:$0xff]
  %v380 = vld [vmem:[%s0 + $0xb48] sm:$0xff]
  %v381 = vld [vmem:[%s0 + $0xb50] sm:$0xff]
  %v382 = vld [vmem:[%s0 + $0xb58] sm:$0xff]
  %v383 = vld [vmem:[%s0 + $0xb60] sm:$0xff]
  %v384 = vld [vmem:[%s0 + $0xb68] sm:$0xff]
  %v385 = vld [vmem:[%s0 + $0xb70] sm:$0xff]
  %v386 = vld [vmem:[%s0 + $0xb78] sm:$0xff]
  %v387 = vld [vmem:[%s0 + $0xb80] sm:$0xff]
  %v388 = vld [vmem:[%s0 + $0xb88] sm:$0xff]
  %v389 = vld [vmem:[%s0 + $0xb90] sm:$0xff]
  %v390 = vld [vmem:[%s0 + $0xb98] sm:$0xff]
  %v391 = vld [vmem:[%s0 + $0xba0] sm:$0xff]
  %v392 = vld [vmem:[%s0 + $0xba8] sm:$0xff]
  %v393 = vld [vmem:[%s0 + $0xbb0] sm:$0xff]
  %v394 = vld [vmem:[%s0 + $0xbb8] sm:$0xff]
  %v395 = vld [vmem:[%s0 + $0xbc0] sm:$0xff]
  %v396 = vld [vmem:[%s0 + $0xbc8] sm:$0xff]
  %v397 = vld [vmem:[%s0 + $0xbd0] sm:$0xff]
  %v398 = vld [vmem:[%s0 + $0xbd8] sm:$0xff]
  %v399 = vld [vmem:[%s0 + $0xbe0] sm:$0xff]
  %v400 = vld [vmem:[%s0 + $0xbe8] sm:$0xff]
  %v401 = vld [vmem:[%s0 + $0xbf0] sm:$0xff]
  %v402 = vld [vmem:[%s0 + $0xbf8] sm:$0xff]
  %v403 = vld [vmem:[%s0 + $0xc00] sm:$0xff]
  %v404 = vld [vmem:[%s0 + $0xc08] sm:$0xff]
  %v405 = vld [vmem:[%s0 + $0xc10] sm:$0xff]
  %v406 = vld [vmem:[%s0 + $0xc18] sm:$0xff]
  %v407 = vld [vmem:[%s0 + $0xc20] sm:$0xff]
  %v408 = vld [vmem:[%s0 + $0xc28] sm:$0xff]
  %v409 = vld [vmem:[%s0 + $0xc30] sm:$0xff]
  %v410 = vld [vmem:[%s0 + $0xc38] sm:$0xff]
  %v411 = vld [vmem:[%s0 + $0xc40] sm:$0xff]
  %v412 = vld [vmem:[%s0 + $0xc48] sm:$0xff]
  %v413 = vld [vmem:[%s0 + $0xc50] sm:$0xff]
  %v414 = vld [vmem:[%s0 + $0xc58] sm:$0xff]
  %v415 = vld [vmem:[%s0 + $0xc60] sm:$0xff]
  %v416 = vld [vmem:[%s0 + $0xc68] sm:$0xff]
  %v417 = vld [vmem:[%s0 + $0xc70] sm:$0xff]
  %v418 = vld [vmem:[%s0 + $0xc78] sm:$0xff]
  %v419 = vld [vmem:[%s0 + $0xc80] sm:$0xff]
  %v420 = vld [vmem:[%s0 + $0xc88] sm:$0xff]
  %v421 = vld [vmem:[%s0 + $0xc90] sm:$0xff]
  %v422 = vld [vmem:[%s0 + $0xc98] sm:$0xff]
  %v423 = vld [vmem:[%s0 + $0xca0] sm:$0xff]
  %v424 = vld [vmem:[%s0 + $0xca8] sm:$0xff]
  %v425 = vld [vmem:[%s0 + $0xcb0] sm:$0xff]
  %v426 = vld [vmem:[%s0 + $0xcb8] sm:$0xff]
  %v427 = vld [vmem:[%s0 + $0xcc0] sm:$0xff]
  %v428 = vld [vmem:[%s0 + $0xcc8] sm:$0xff]
  %v429 = vld [vmem:[%s0 + $0xcd0] sm:$0xff]
  %v430 = vld [vmem:[%s0 + $0xcd8] sm:$0xff]
  %v431 = vld [vmem:[%s0 + $0xce0] sm:$0xff]
  %v432 = vld [vmem:[%s0 + $0xce8] sm:$0xff]
  %v433 = vld [vmem:[%s0 + $0xcf0] sm:$0xff]
  %v434 = vld [vmem:[%s0 + $0xcf8] sm:$0xff]
  %v435 = vld [vmem:[%s0 + $0xd00] sm:$0xff]
  %v436 = vld [vmem:[%s0 + $0xd08] sm:$0xff]
  %v437 = vld [vmem:[%s0 + $0xd10] sm:$0xff]
  %v438 = vld [vmem:[%s0 + $0xd18] sm:$0xff]
  %v439 = vld [vmem:[%s0 + $0xd20] sm:$0xff]
  %v440 = vld [vmem:[%s0 + $0xd28] sm:$0xff]
  %v441 = vld [vmem:[%s0 + $0xd30] sm:$0xff]
  %v442 = vld [vmem:[%s0 + $0xd38] sm:$0xff]
  %v443 = vld [vmem:[%s0 + $0xd40] sm:$0xff]
  %v444 = vld [vmem:[%s0 + $0xd48] sm:$0xff]
  %v445 = vld [vmem:[%s0 + $0xd50] sm:$0xff]
  %v446 = vld [vmem:[%s0 + $0xd58] sm:$0xff]
  %v447 = vld [vmem:[%s0 + $0xd60] sm:$0xff]
  %v448 = vld [vmem:[%s0 + $0xd68] sm:$0xff]
  %v449 = vld [vmem:[%s0 + $0xd70] sm:$0xff]
  %v450 = vld [vmem:[%s0 + $0xd78] sm:$0xff]
  %v451 = vld [vmem:[%s0 + $0xd80] sm:$0xff]
  %v452 = vld [vmem:[%s0 + $0xd88] sm:$0xff]
  %v453 = vld [vmem:[%s0 + $0xd90] sm:$0xff]
  %v454 = vld [vmem:[%s0 + $0xd98] sm:$0xff]
  %v455 = vld [vmem:[%s0 + $0xda0] sm:$0xff]
  %v456 = vld [vmem:[%s0 + $0xda8] sm:$0xff]
  %v457 = vld [vmem:[%s0 + $0xdb0] sm:$0xff]
  %v458 = vld [vmem:[%s0 + $0xdb8] sm:$0xff]
  %v459 = vld [vmem:[%s0 + $0xdc0] sm:$0xff]
  %v460 = vld [vmem:[%s0 + $0xdc8] sm:$0xff]
  %v461 = vld [vmem:[%s0 + $0xdd0] sm:$0xff]
  %v462 = vld [vmem:[%s0 + $0xdd8] sm:$0xff]
  %v463 = vld [vmem:[%s0 + $0xde0] sm:$0xff]
  %v464 = vld [vmem:[%s0 + $0xde8] sm:$0xff]
  %v465 = vld [vmem:[%s0 + $0xdf0] sm:$0xff]
  %v466 = vld [vmem:[%s0 + $0xdf8] sm:$0xff]
  %v467 = vld [vmem:[%s0 + $0xe00] sm:$0xff]
  %v468 = vld [vmem:[%s0 + $0xe08] sm:$0xff]
  %v469 = vld [vmem:[%s0 + $0xe10] sm:$0xff]
  %v470 = vld [vmem:[%s0 + $0xe18] sm:$0xff]
  %v471 = vld [vmem:[%s0 + $0xe20] sm:$0xff]
  %v472 = vld [vmem:[%s0 + $0xe28] sm:$0xff]
  %v473 = vld [vmem:[%s0 + $0xe30] sm:$0xff]
  %v474 = vld [vmem:[%s0 + $0xe38] sm:$0xff]
  %v475 = vld [vmem:[%s0 + $0xe40] sm:$0xff]
  %v476 = vld [vmem:[%s0 + $0xe48] sm:$0xff]
  %v477 = vld [vmem:[%s0 + $0xe50] sm:$0xff]
  %v478 = vld [vmem:[%s0 + $0xe58] sm:$0xff]
  %v479 = vld [vmem:[%s0 + $0xe60] sm:$0xff]
  %v480 = vld [vmem:[%s0 + $0xe68] sm:$0xff]
  %v481 = vld [vmem:[%s0 + $0xe70] sm:$0xff]
  %v482 = vld [vmem:[%s0 + $0xe78] sm:$0xff]
  %v483 = vld [vmem:[%s0 + $0xe80] sm:$0xff]
  %v484 = vld [vmem:[%s0 + $0xe88] sm:$0xff]
  %v485 = vld [vmem:[%s0 + $0xe90] sm:$0xff]
  %v486 = vld [vmem:[%s0 + $0xe98] sm:$0xff]
  %v487 = vld [vmem:[%s0 + $0xea0] sm:$0xff]
  %v488 = vld [vmem:[%s0 + $0xea8] sm:$0xff]
  %v489 = vld [vmem:[%s0 + $0xeb0] sm:$0xff]
  %v490 = vld [vmem:[%s0 + $0xeb8] sm:$0xff]
  %v491 = vld [vmem:[%s0 + $0xec0] sm:$0xff]
  %v492 = vld [vmem:[%s0 + $0xec8] sm:$0xff]
  %v493 = vld [vmem:[%s0 + $0xed0] sm:$0xff]
  %v494 = vld [vmem:[%s0 + $0xed8] sm:$0xff]
  %v495 = vld [vmem:[%s0 + $0xee0] sm:$0xff]
  %v496 = vld [vmem:[%s0 + $0xee8] sm:$0xff]
  %v497 = vld [vmem:[%s0 + $0xef0] sm:$0xff]
  %v498 = vld [vmem:[%s0 + $0xef8] sm:$0xff]
  %v499 = vld [vmem:[%s0 + $0xf00] sm:$0xff]
  %v500 = vld [vmem:[%s0 + $0xf08] sm:$0xff]
  %v501 = vld [vmem:[%s0 + $0xf10] sm:$0xff]
  %v502 = vld [vmem:[%s0 + $0xf18] sm:$0xff]
  %v503 = vld [vmem:[%s0 + $0xf20] sm:$0xff]
  %v504 = vld [vmem:[%s0 + $0xf28] sm:$0xff]
  %v505 = vld [vmem:[%s0 + $0xf30] sm:$0xff]
  %v506 = vld [vmem:[%s0 + $0xf38] sm:$0xff]
  %v507 = vld [vmem:[%s0 + $0xf40] sm:$0xff]
  %v508 = vld [vmem:[%s0 + $0xf48] sm:$0xff]
  %v509 = vld [vmem:[%s0 + $0xf50] sm:$0xff]
  %v510 = vld [vmem:[%s0 + $0xf58] sm:$0xff]
  %v511 = vld [vmem:[%s0 + $0xf60] sm:$0xff]
  %v512 = vld [vmem:[%s0 + $0xf68] sm:$0xff]
  %v513 = vld [vmem:[%s0 + $0xf70] sm:$0xff]
  %v514 = vld [vmem:[%s0 + $0xf78] sm:$0xff]
  %v515 = vld [vmem:[%s0 + $0xf80] sm:$0xff]
  %v516 = vld [vmem:[%s0 + $0xf88] sm:$0xff]
  %v517 = vld [vmem:[%s0 + $0xf90] sm:$0xff]
  %v518 = vld [vmem:[%s0 + $0xf98] sm:$0xff]
  %v519 = vld [vmem:[%s0 + $0xfa0] sm:$0xff]
  %v520 = vld [vmem:[%s0 + $0xfa8] sm:$0xff]
  %v521 = vld [vmem:[%s0 + $0xfb0] sm:$0xff]
  %v522 = vld [vmem:[%s0 + $0xfb8] sm:$0xff]
  %v523 = vld [vmem:[%s0 + $0xfc0] sm:$0xff]
  %v524 = vld [vmem:[%s0 + $0xfc8] sm:$0xff]
  %v525 = vld [vmem:[%s0 + $0xfd0] sm:$0xff]
  %v526 = vld [vmem:[%s0 + $0xfd8] sm:$0xff]
  %v527 = vld [vmem:[%s0 + $0xfe0] sm:$0xff]
  %v528 = vld [vmem:[%s0 + $0xfe8] sm:$0xff]
  %v529 = vld [vmem:[%s0 + $0xff0] sm:$0xff]
  %v530 = vld [vmem:[%s0 + $0xff8] sm:$0xff]
  %531 = vmatprep.subr.mxu0 %v20
  %532 = vmatpush1.msra.mxu0 %v19
  %533 = vmatprep.subr.mxu0 %v36
  %534 = vmatpush1.msra.mxu0 %v35
  %535 = vmatprep.subr.mxu0 %v52
  %536 = vmatpush1.msra.mxu0 %v51
  %537 = vmatprep.subr.mxu0 %v68
  %538 = vmatpush1.msra.mxu0 %v67
  %539 = vmatprep.subr.mxu0 %v84
  %540 = vmatpush1.msra.mxu0 %v83
  %541 = vmatprep.subr.mxu0 %v100
  %542 = vmatpush1.msra.mxu0 %v99
  %543 = vmatprep.subr.mxu0 %v116
  %544 = vmatpush1.msra.mxu0 %v115
  %545 = vmatprep.subr.mxu0 %v132
  %546 = vmatpush1.msra.mxu0 %v131
  %547 = vmatprep.subr.mxu0 %v148
  %548 = vmatpush1.msra.mxu0 %v147
  %549 = vmatprep.subr.mxu0 %v164
  %550 = vmatpush1.msra.mxu0 %v163
  %551 = vmatprep.subr.mxu0 %v180
  %552 = vmatpush1.msra.mxu0 %v179
  %553 = vmatprep.subr.mxu0 %v196
  %554 = vmatpush1.msra.mxu0 %v195
  %555 = vmatprep.subr.mxu0 %v212
  %556 = vmatpush1.msra.mxu0 %v211
  %557 = vmatprep.subr.mxu0 %v228
  %558 = vmatpush1.msra.mxu0 %v227
  %559 = vmatprep.subr.mxu0 %v244
  %560 = vmatpush1.msra.mxu0 %v243
  %561 = vmatprep.subr.mxu0 %v260
  %562 = vmatpush1.msra.mxu0 %v259
  %563 = vmatprep.subr.mxu0 %v276
  %564 = vmatpush1.msra.mxu0 %v275
  %565 = vmatprep.subr.mxu0 %v292
  %566 = vmatpush1.msra.mxu0 %v291
  %567 = vmatprep.subr.mxu0 %v308
  %568 = vmatpush1.msra.mxu0 %v307
  %569 = vmatprep.subr.mxu0 %v324
  %570 = vmatpush1.msra.mxu0 %v323
  %571 = vmatprep.subr.mxu0 %v340
  %572 = vmatpush1.msra.mxu0 %v339
  %573 = vmatprep.subr.mxu0 %v356
  %574 = vmatpush1.msra.mxu0 %v355
  %575 = vmatprep.subr.mxu0 %v372
  %576 = vmatpush1.msra.mxu0 %v371
  %577 = vmatprep.subr.mxu0 %v388
  %578 = vmatpush1.msra.mxu0 %v387
  %579 = vmatprep.subr.mxu0 %v404
  %580 = vmatpush1.msra.mxu0 %v403
  %581 = vmatprep.subr.mxu0 %v420
  %582 = vmatpush1.msra.mxu0 %v419
  %583 = vmatprep.subr.mxu0 %v436
  %584 = vmatpush1.msra.mxu0 %v435
  %585 = vmatprep.subr.mxu0 %v452
  %586 = vmatpush1.msra.mxu0 %v451
  %587 = vmatprep.subr.mxu0 %v468
  %588 = vmatpush1.msra.mxu0 %v467
  %589 = vmatprep.subr.mxu0 %v484
  %590 = vmatpush1.msra.mxu0 %v483
  %591 = vmatprep.subr.mxu0 %v500
  %592 = vmatpush1.msra.mxu0 %v499
  %593 = vmatprep.subr.mxu0 %v516
  %594 = vmatpush1.msra.mxu0 %v515
  %595 = vmatprep.mubr.f32.mxu0 %v18
  %596 = vmatmul.mubr.f32.gmra.mrb[0].mxu0 %v17
  %v597 = vpop.f32.mrb[0].mxu0
  %v598 = vadd.f32 0.0, %v597
  %v599 = vpop.f32.mrb[0].mxu0
  %v600 = vadd.f32 0.0, %v599
  %601 = vdwg.mxu0
  %602 = vmatprep.subr.mxu0 %v22
  %603 = vmatpush1.msra.mxu0 %v21
  %604 = vmatprep.subr.mxu0 %v38
  %605 = vmatpush1.msra.mxu0 %v37
  %606 = vmatprep.subr.mxu0 %v54
  %607 = vmatpush1.msra.mxu0 %v53
  %608 = vmatprep.subr.mxu0 %v70
  %609 = vmatpush1.msra.mxu0 %v69
  %610 = vmatprep.subr.mxu0 %v86
  %611 = vmatpush1.msra.mxu0 %v85
  %612 = vmatprep.subr.mxu0 %v102
  %613 = vmatpush1.msra.mxu0 %v101
  %614 = vmatprep.subr.mxu0 %v118
  %615 = vmatpush1.msra.mxu0 %v117
  %616 = vmatprep.subr.mxu0 %v134
  %617 = vmatpush1.msra.mxu0 %v133
  %618 = vmatprep.subr.mxu0 %v150
  %619 = vmatpush1.msra.mxu0 %v149
  %620 = vmatprep.subr.mxu0 %v166
  %621 = vmatpush1.msra.mxu0 %v165
  %622 = vmatprep.subr.mxu0 %v182
  %623 = vmatpush1.msra.mxu0 %v181
  %624 = vmatprep.subr.mxu0 %v198
  %625 = vmatpush1.msra.mxu0 %v197
  %626 = vmatprep.subr.mxu0 %v214
  %627 = vmatpush1.msra.mxu0 %v213
  %628 = vmatprep.subr.mxu0 %v230
  %629 = vmatpush1.msra.mxu0 %v229
  %630 = vmatprep.subr.mxu0 %v246
  %631 = vmatpush1.msra.mxu0 %v245
  %632 = vmatprep.subr.mxu0 %v262
  %633 = vmatpush1.msra.mxu0 %v261
  %634 = vmatprep.subr.mxu0 %v278
  %635 = vmatpush1.msra.mxu0 %v277
  %636 = vmatprep.subr.mxu0 %v294
  %637 = vmatpush1.msra.mxu0 %v293
  %638 = vmatprep.subr.mxu0 %v310
  %639 = vmatpush1.msra.mxu0 %v309
  %640 = vmatprep.subr.mxu0 %v326
  %641 = vmatpush1.msra.mxu0 %v325
  %642 = vmatprep.subr.mxu0 %v342
  %643 = vmatpush1.msra.mxu0 %v341
  %644 = vmatprep.subr.mxu0 %v358
  %645 = vmatpush1.msra.mxu0 %v357
  %646 = vmatprep.subr.mxu0 %v374
  %647 = vmatpush1.msra.mxu0 %v373
  %648 = vmatprep.subr.mxu0 %v390
  %649 = vmatpush1.msra.mxu0 %v389
  %650 = vmatprep.subr.mxu0 %v406
  %651 = vmatpush1.msra.mxu0 %v405
  %652 = vmatprep.subr.mxu0 %v422
  %653 = vmatpush1.msra.mxu0 %v421
  %654 = vmatprep.subr.mxu0 %v438
  %655 = vmatpush1.msra.mxu0 %v437
  %656 = vmatprep.subr.mxu0 %v454
  %657 = vmatpush1.msra.mxu0 %v453
  %658 = vmatprep.subr.mxu0 %v470
  %659 = vmatpush1.msra.mxu0 %v469
  %660 = vmatprep.subr.mxu0 %v486
  %661 = vmatpush1.msra.mxu0 %v485
  %662 = vmatprep.subr.mxu0 %v502
  %663 = vmatpush1.msra.mxu0 %v501
  %664 = vmatprep.subr.mxu0 %v518
  %665 = vmatpush1.msra.mxu0 %v517
  %666 = vmatprep.mubr.f32.mxu0 %v18
  %667 = vmatmul.mubr.f32.gmra.mrb[0].mxu0 %v17
  %v668 = vpop.f32.mrb[0].mxu0
  %v669 = vadd.f32 0.0, %v668
  %v670 = vpop.f32.mrb[0].mxu0
  %v671 = vadd.f32 0.0, %v670
  %672 = vdwg.mxu0
  %673 = vmatprep.subr.mxu0 %v24
  %674 = vmatpush1.msra.mxu0 %v23
  %675 = vmatprep.subr.mxu0 %v40
  %676 = vmatpush1.msra.mxu0 %v39
  %677 = vmatprep.subr.mxu0 %v56
  %678 = vmatpush1.msra.mxu0 %v55
  %679 = vmatprep.subr.mxu0 %v72
  %680 = vmatpush1.msra.mxu0 %v71
  %681 = vmatprep.subr.mxu0 %v88
  %682 = vmatpush1.msra.mxu0 %v87
  %683 = vmatprep.subr.mxu0 %v104
  %684 = vmatpush1.msra.mxu0 %v103
  %685 = vmatprep.subr.mxu0 %v120
  %686 = vmatpush1.msra.mxu0 %v119
  %687 = vmatprep.subr.mxu0 %v136
  %688 = vmatpush1.msra.mxu0 %v135
  %689 = vmatprep.subr.mxu0 %v152
  %690 = vmatpush1.msra.mxu0 %v151
  %691 = vmatprep.subr.mxu0 %v168
  %692 = vmatpush1.msra.mxu0 %v167
  %693 = vmatprep.subr.mxu0 %v184
  %694 = vmatpush1.msra.mxu0 %v183
  %695 = vmatprep.subr.mxu0 %v200
  %696 = vmatpush1.msra.mxu0 %v199
  %697 = vmatprep.subr.mxu0 %v216
  %698 = vmatpush1.msra.mxu0 %v215
  %699 = vmatprep.subr.mxu0 %v232
  %700 = vmatpush1.msra.mxu0 %v231
  %701 = vmatprep.subr.mxu0 %v248
  %702 = vmatpush1.msra.mxu0 %v247
  %703 = vmatprep.subr.mxu0 %v264
  %704 = vmatpush1.msra.mxu0 %v263
  %705 = vmatprep.subr.mxu0 %v280
  %706 = vmatpush1.msra.mxu0 %v279
  %707 = vmatprep.subr.mxu0 %v296
  %708 = vmatpush1.msra.mxu0 %v295
  %709 = vmatprep.subr.mxu0 %v312
  %710 = vmatpush1.msra.mxu0 %v311
  %711 = vmatprep.subr.mxu0 %v328
  %712 = vmatpush1.msra.mxu0 %v327
  %713 = vmatprep.subr.mxu0 %v344
  %714 = vmatpush1.msra.mxu0 %v343
  %715 = vmatprep.subr.mxu0 %v360
  %716 = vmatpush1.msra.mxu0 %v359
  %717 = vmatprep.subr.mxu0 %v376
  %718 = vmatpush1.msra.mxu0 %v375
  %719 = vmatprep.subr.mxu0 %v392
  %720 = vmatpush1.msra.mxu0 %v391
  %721 = vmatprep.subr.mxu0 %v408
  %722 = vmatpush1.msra.mxu0 %v407
  %723 = vmatprep.subr.mxu0 %v424
  %724 = vmatpush1.msra.mxu0 %v423
  %725 = vmatprep.subr.mxu0 %v440
  %726 = vmatpush1.msra.mxu0 %v439
  %727 = vmatprep.subr.mxu0 %v456
  %728 = vmatpush1.msra.mxu0 %v455
  %729 = vmatprep.subr.mxu0 %v472
  %730 = vmatpush1.msra.mxu0 %v471
  %731 = vmatprep.subr.mxu0 %v488
  %732 = vmatpush1.msra.mxu0 %v487
  %733 = vmatprep.subr.mxu0 %v504
  %734 = vmatpush1.msra.mxu0 %v503
  %735 = vmatprep.subr.mxu0 %v520
  %736 = vmatpush1.msra.mxu0 %v519
  %737 = vmatprep.mubr.f32.mxu0 %v18
  %738 = vmatmul.mubr.f32.gmra.mrb[0].mxu0 %v17
  %v739 = vpop.f32.mrb[0].mxu0
  %v740 = vadd.f32 0.0, %v739
  %v741 = vpop.f32.mrb[0].mxu0
  %v742 = vadd.f32 0.0, %v741
  %743 = vdwg.mxu0
  %744 = vmatprep.subr.mxu0 %v26
  %745 = vmatpush1.msra.mxu0 %v25
  %746 = vmatprep.subr.mxu0 %v42
  %747 = vmatpush1.msra.mxu0 %v41
  %748 = vmatprep.subr.mxu0 %v58
  %749 = vmatpush1.msra.mxu0 %v57
  %750 = vmatprep.subr.mxu0 %v74
  %751 = vmatpush1.msra.mxu0 %v73
  %752 = vmatprep.subr.mxu0 %v90
  %753 = vmatpush1.msra.mxu0 %v89
  %754 = vmatprep.subr.mxu0 %v106
  %755 = vmatpush1.msra.mxu0 %v105
  %756 = vmatprep.subr.mxu0 %v122
  %757 = vmatpush1.msra.mxu0 %v121
  %758 = vmatprep.subr.mxu0 %v138
  %759 = vmatpush1.msra.mxu0 %v137
  %760 = vmatprep.subr.mxu0 %v154
  %761 = vmatpush1.msra.mxu0 %v153
  %762 = vmatprep.subr.mxu0 %v170
  %763 = vmatpush1.msra.mxu0 %v169
  %764 = vmatprep.subr.mxu0 %v186
  %765 = vmatpush1.msra.mxu0 %v185
  %766 = vmatprep.subr.mxu0 %v202
  %767 = vmatpush1.msra.mxu0 %v201
  %768 = vmatprep.subr.mxu0 %v218
  %769 = vmatpush1.msra.mxu0 %v217
  %770 = vmatprep.subr.mxu0 %v234
  %771 = vmatpush1.msra.mxu0 %v233
  %772 = vmatprep.subr.mxu0 %v250
  %773 = vmatpush1.msra.mxu0 %v249
  %774 = vmatprep.subr.mxu0 %v266
  %775 = vmatpush1.msra.mxu0 %v265
  %776 = vmatprep.subr.mxu0 %v282
  %777 = vmatpush1.msra.mxu0 %v281
  %778 = vmatprep.subr.mxu0 %v298
  %779 = vmatpush1.msra.mxu0 %v297
  %780 = vmatprep.subr.mxu0 %v314
  %781 = vmatpush1.msra.mxu0 %v313
  %782 = vmatprep.subr.mxu0 %v330
  %783 = vmatpush1.msra.mxu0 %v329
  %784 = vmatprep.subr.mxu0 %v346
  %785 = vmatpush1.msra.mxu0 %v345
  %786 = vmatprep.subr.mxu0 %v362
  %787 = vmatpush1.msra.mxu0 %v361
  %788 = vmatprep.subr.mxu0 %v378
  %789 = vmatpush1.msra.mxu0 %v377
  %790 = vmatprep.subr.mxu0 %v394
  %791 = vmatpush1.msra.mxu0 %v393
  %792 = vmatprep.subr.mxu0 %v410
  %793 = vmatpush1.msra.mxu0 %v409
  %794 = vmatprep.subr.mxu0 %v426
  %795 = vmatpush1.msra.mxu0 %v425
  %796 = vmatprep.subr.mxu0 %v442
  %797 = vmatpush1.msra.mxu0 %v441
  %798 = vmatprep.subr.mxu0 %v458
  %799 = vmatpush1.msra.mxu0 %v457
  %800 = vmatprep.subr.mxu0 %v474
  %801 = vmatpush1.msra.mxu0 %v473
  %802 = vmatprep.subr.mxu0 %v490
  %803 = vmatpush1.msra.mxu0 %v489
  %804 = vmatprep.subr.mxu0 %v506
  %805 = vmatpush1.msra.mxu0 %v505
  %806 = vmatprep.subr.mxu0 %v522
  %807 = vmatpush1.msra.mxu0 %v521
  %808 = vmatprep.mubr.f32.mxu0 %v18
  %809 = vmatmul.mubr.f32.gmra.mrb[0].mxu0 %v17
  %v810 = vpop.f32.mrb[0].mxu0
  %v811 = vadd.f32 0.0, %v810
  %v812 = vpop.f32.mrb[0].mxu0
  %v813 = vadd.f32 0.0, %v812
  %814 = vdwg.mxu0
  %815 = vmatprep.subr.mxu0 %v28
  %816 = vmatpush1.msra.mxu0 %v27
  %817 = vmatprep.subr.mxu0 %v44
  %818 = vmatpush1.msra.mxu0 %v43
  %819 = vmatprep.subr.mxu0 %v60
  %820 = vmatpush1.msra.mxu0 %v59
  %821 = vmatprep.subr.mxu0 %v76
  %822 = vmatpush1.msra.mxu0 %v75
  %823 = vmatprep.subr.mxu0 %v92
  %824 = vmatpush1.msra.mxu0 %v91
  %825 = vmatprep.subr.mxu0 %v108
  %826 = vmatpush1.msra.mxu0 %v107
  %827 = vmatprep.subr.mxu0 %v124
  %828 = vmatpush1.msra.mxu0 %v123
  %829 = vmatprep.subr.mxu0 %v140
  %830 = vmatpush1.msra.mxu0 %v139
  %831 = vmatprep.subr.mxu0 %v156
  %832 = vmatpush1.msra.mxu0 %v155
  %833 = vmatprep.subr.mxu0 %v172
  %834 = vmatpush1.msra.mxu0 %v171
  %835 = vmatprep.subr.mxu0 %v188
  %836 = vmatpush1.msra.mxu0 %v187
  %837 = vmatprep.subr.mxu0 %v204
  %838 = vmatpush1.msra.mxu0 %v203
  %839 = vmatprep.subr.mxu0 %v220
  %840 = vmatpush1.msra.mxu0 %v219
  %841 = vmatprep.subr.mxu0 %v236
  %842 = vmatpush1.msra.mxu0 %v235
  %843 = vmatprep.subr.mxu0 %v252
  %844 = vmatpush1.msra.mxu0 %v251
  %845 = vmatprep.subr.mxu0 %v268
  %846 = vmatpush1.msra.mxu0 %v267
  %847 = vmatprep.subr.mxu0 %v284
  %848 = vmatpush1.msra.mxu0 %v283
  %849 = vmatprep.subr.mxu0 %v300
  %850 = vmatpush1.msra.mxu0 %v299
  %851 = vmatprep.subr.mxu0 %v316
  %852 = vmatpush1.msra.mxu0 %v315
  %853 = vmatprep.subr.mxu0 %v332
  %854 = vmatpush1.msra.mxu0 %v331
  %855 = vmatprep.subr.mxu0 %v348
  %856 = vmatpush1.msra.mxu0 %v347
  %857 = vmatprep.subr.mxu0 %v364
  %858 = vmatpush1.msra.mxu0 %v363
  %859 = vmatprep.subr.mxu0 %v380
  %860 = vmatpush1.msra.mxu0 %v379
  %861 = vmatprep.subr.mxu0 %v396
  %862 = vmatpush1.msra.mxu0 %v395
  %863 = vmatprep.subr.mxu0 %v412
  %864 = vmatpush1.msra.mxu0 %v411
  %865 = vmatprep.subr.mxu0 %v428
  %866 = vmatpush1.msra.mxu0 %v427
  %867 = vmatprep.subr.mxu0 %v444
  %868 = vmatpush1.msra.mxu0 %v443
  %869 = vmatprep.subr.mxu0 %v460
  %870 = vmatpush1.msra.mxu0 %v459
  %871 = vmatprep.subr.mxu0 %v476
  %872 = vmatpush1.msra.mxu0 %v475
  %873 = vmatprep.subr.mxu0 %v492
  %874 = vmatpush1.msra.mxu0 %v491
  %875 = vmatprep.subr.mxu0 %v508
  %876 = vmatpush1.msra.mxu0 %v507
  %877 = vmatprep.subr.mxu0 %v524
  %878 = vmatpush1.msra.mxu0 %v523
  %879 = vmatprep.mubr.f32.mxu0 %v18
  %880 = vmatmul.mubr.f32.gmra.mrb[0].mxu0 %v17
  %v881 = vpop.f32.mrb[0].mxu0
  %v882 = vadd.f32 0.0, %v881
  %v883 = vpop.f32.mrb[0].mxu0
  %v884 = vadd.f32 0.0, %v883
  %885 = vdwg.mxu0
  %886 = vmatprep.subr.mxu0 %v30
  %887 = vmatpush1.msra.mxu0 %v29
  %888 = vmatprep.subr.mxu0 %v46
  %889 = vmatpush1.msra.mxu0 %v45
  %890 = vmatprep.subr.mxu0 %v62
  %891 = vmatpush1.msra.mxu0 %v61
  %892 = vmatprep.subr.mxu0 %v78
  %893 = vmatpush1.msra.mxu0 %v77
  %894 = vmatprep.subr.mxu0 %v94
  %895 = vmatpush1.msra.mxu0 %v93
  %896 = vmatprep.subr.mxu0 %v110
  %897 = vmatpush1.msra.mxu0 %v109
  %898 = vmatprep.subr.mxu0 %v126
  %899 = vmatpush1.msra.mxu0 %v125
  %900 = vmatprep.subr.mxu0 %v142
  %901 = vmatpush1.msra.mxu0 %v141
  %902 = vmatprep.subr.mxu0 %v158
  %903 = vmatpush1.msra.mxu0 %v157
  %904 = vmatprep.subr.mxu0 %v174
  %905 = vmatpush1.msra.mxu0 %v173
  %906 = vmatprep.subr.mxu0 %v190
  %907 = vmatpush1.msra.mxu0 %v189
  %908 = vmatprep.subr.mxu0 %v206
  %909 = vmatpush1.msra.mxu0 %v205
  %910 = vmatprep.subr.mxu0 %v222
  %911 = vmatpush1.msra.mxu0 %v221
  %912 = vmatprep.subr.mxu0 %v238
  %913 = vmatpush1.msra.mxu0 %v237
  %914 = vmatprep.subr.mxu0 %v254
  %915 = vmatpush1.msra.mxu0 %v253
  %916 = vmatprep.subr.mxu0 %v270
  %917 = vmatpush1.msra.mxu0 %v269
  %918 = vmatprep.subr.mxu0 %v286
  %919 = vmatpush1.msra.mxu0 %v285
  %920 = vmatprep.subr.mxu0 %v302
  %921 = vmatpush1.msra.mxu0 %v301
  %922 = vmatprep.subr.mxu0 %v318
  %923 = vmatpush1.msra.mxu0 %v317
  %924 = vmatprep.subr.mxu0 %v334
  %925 = vmatpush1.msra.mxu0 %v333
  %926 = vmatprep.subr.mxu0 %v350
  %927 = vmatpush1.msra.mxu0 %v349
  %928 = vmatprep.subr.mxu0 %v366
  %929 = vmatpush1.msra.mxu0 %v365
  %930 = vmatprep.subr.mxu0 %v382
  %931 = vmatpush1.msra.mxu0 %v381
  %932 = vmatprep.subr.mxu0 %v398
  %933 = vmatpush1.msra.mxu0 %v397
  %934 = vmatprep.subr.mxu0 %v414
  %935 = vmatpush1.msra.mxu0 %v413
  %936 = vmatprep.subr.mxu0 %v430
  %937 = vmatpush1.msra.mxu0 %v429
  %938 = vmatprep.subr.mxu0 %v446
  %939 = vmatpush1.msra.mxu0 %v445
  %940 = vmatprep.subr.mxu0 %v462
  %941 = vmatpush1.msra.mxu0 %v461
  %942 = vmatprep.subr.mxu0 %v478
  %943 = vmatpush1.msra.mxu0 %v477
  %944 = vmatprep.subr.mxu0 %v494
  %945 = vmatpush1.msra.mxu0 %v493
  %946 = vmatprep.subr.mxu0 %v510
  %947 = vmatpush1.msra.mxu0 %v509
  %948 = vmatprep.subr.mxu0 %v526
  %949 = vmatpush1.msra.mxu0 %v525
  %950 = vmatprep.mubr.f32.mxu0 %v18
  %951 = vmatmul.mubr.f32.gmra.mrb[0].mxu0 %v17
  %v952 = vpop.f32.mrb[0].mxu0
  %v953 = vadd.f32 0.0, %v952
  %v954 = vpop.f32.mrb[0].mxu0
  %v955 = vadd.f32 0.0, %v954
  %956 = vdwg.mxu0
  %957 = vmatprep.subr.mxu0 %v32
  %958 = vmatpush1.msra.mxu0 %v31
  %959 = vmatprep.subr.mxu0 %v48
  %960 = vmatpush1.msra.mxu0 %v47
  %961 = vmatprep.subr.mxu0 %v64
  %962 = vmatpush1.msra.mxu0 %v63
  %963 = vmatprep.subr.mxu0 %v80
  %964 = vmatpush1.msra.mxu0 %v79
  %965 = vmatprep.subr.mxu0 %v96
  %966 = vmatpush1.msra.mxu0 %v95
  %967 = vmatprep.subr.mxu0 %v112
  %968 = vmatpush1.msra.mxu0 %v111
  %969 = vmatprep.subr.mxu0 %v128
  %970 = vmatpush1.msra.mxu0 %v127
  %971 = vmatprep.subr.mxu0 %v144
  %972 = vmatpush1.msra.mxu0 %v143
  %973 = vmatprep.subr.mxu0 %v160
  %974 = vmatpush1.msra.mxu0 %v159
  %975 = vmatprep.subr.mxu0 %v176
  %976 = vmatpush1.msra.mxu0 %v175
  %977 = vmatprep.subr.mxu0 %v192
  %978 = vmatpush1.msra.mxu0 %v191
  %979 = vmatprep.subr.mxu0 %v208
  %980 = vmatpush1.msra.mxu0 %v207
  %981 = vmatprep.subr.mxu0 %v224
  %982 = vmatpush1.msra.mxu0 %v223
  %983 = vmatprep.subr.mxu0 %v240
  %984 = vmatpush1.msra.mxu0 %v239
  %985 = vmatprep.subr.mxu0 %v256
  %986 = vmatpush1.msra.mxu0 %v255
  %987 = vmatprep.subr.mxu0 %v272
  %988 = vmatpush1.msra.mxu0 %v271
  %989 = vmatprep.subr.mxu0 %v288
  %990 = vmatpush1.msra.mxu0 %v287
  %991 = vmatprep.subr.mxu0 %v304
  %992 = vmatpush1.msra.mxu0 %v303
  %993 = vmatprep.subr.mxu0 %v320
  %994 = vmatpush1.msra.mxu0 %v319
  %995 = vmatprep.subr.mxu0 %v336
  %996 = vmatpush1.msra.mxu0 %v335
  %997 = vmatprep.subr.mxu0 %v352
  %998 = vmatpush1.msra.mxu0 %v351
  %999 = vmatprep.subr.mxu0 %v368
  %1000 = vmatpush1.msra.mxu0 %v367
  %1001 = vmatprep.subr.mxu0 %v384
  %1002 = vmatpush1.msra.mxu0 %v383
  %1003 = vmatprep.subr.mxu0 %v400
  %1004 = vmatpush1.msra.mxu0 %v399
  %1005 = vmatprep.subr.mxu0 %v416
  %1006 = vmatpush1.msra.mxu0 %v415
  %1007 = vmatprep.subr.mxu0 %v432
  %1008 = vmatpush1.msra.mxu0 %v431
  %1009 = vmatprep.subr.mxu0 %v448
  %1010 = vmatpush1.msra.mxu0 %v447
  %1011 = vmatprep.subr.mxu0 %v464
  %1012 = vmatpush1.msra.mxu0 %v463
  %1013 = vmatprep.subr.mxu0 %v480
  %1014 = vmatpush1.msra.mxu0 %v479
  %1015 = vmatprep.subr.mxu0 %v496
  %1016 = vmatpush1.msra.mxu0 %v495
  %1017 = vmatprep.subr.mxu0 %v512
  %1018 = vmatpush1.msra.mxu0 %v511
  %1019 = vmatprep.subr.mxu0 %v528
  %1020 = vmatpush1.msra.mxu0 %v527
  %1021 = vmatprep.mubr.f32.mxu0 %v18
  %1022 = vmatmul.mubr.f32.gmra.mrb[0].mxu0 %v17
  %v1023 = vpop.f32.mrb[0].mxu0
  %v1024 = vadd.f32 0.0, %v1023
  %v1025 = vpop.f32.mrb[0].mxu0
  %v1026 = vadd.f32 0.0, %v1025
  %1027 = vdwg.mxu0
  %1028 = vmatprep.subr.mxu0 %v34
  %1029 = vmatpush1.msra.mxu0 %v33
  %1030 = vmatprep.subr.mxu0 %v50
  %1031 = vmatpush1.msra.mxu0 %v49
  %1032 = vmatprep.subr.mxu0 %v66
  %1033 = vmatpush1.msra.mxu0 %v65
  %1034 = vmatprep.subr.mxu0 %v82
  %1035 = vmatpush1.msra.mxu0 %v81
  %1036 = vmatprep.subr.mxu0 %v98
  %1037 = vmatpush1.msra.mxu0 %v97
  %1038 = vmatprep.subr.mxu0 %v114
  %1039 = vmatpush1.msra.mxu0 %v113
  %1040 = vmatprep.subr.mxu0 %v130
  %1041 = vmatpush1.msra.mxu0 %v129
  %1042 = vmatprep.subr.mxu0 %v146
  %1043 = vmatpush1.msra.mxu0 %v145
  %1044 = vmatprep.subr.mxu0 %v162
  %1045 = vmatpush1.msra.mxu0 %v161
  %1046 = vmatprep.subr.mxu0 %v178
  %1047 = vmatpush1.msra.mxu0 %v177
  %1048 = vmatprep.subr.mxu0 %v194
  %1049 = vmatpush1.msra.mxu0 %v193
  %1050 = vmatprep.subr.mxu0 %v210
  %1051 = vmatpush1.msra.mxu0 %v209
  %1052 = vmatprep.subr.mxu0 %v226
  %1053 = vmatpush1.msra.mxu0 %v225
  %1054 = vmatprep.subr.mxu0 %v242
  %1055 = vmatpush1.msra.mxu0 %v241
  %1056 = vmatprep.subr.mxu0 %v258
  %1057 = vmatpush1.msra.mxu0 %v257
  %1058 = vmatprep.subr.mxu0 %v274
  %1059 = vmatpush1.msra.mxu0 %v273
  %1060 = vmatprep.subr.mxu0 %v290
  %1061 = vmatpush1.msra.mxu0 %v289
  %1062 = vmatprep.subr.mxu0 %v306
  %1063 = vmatpush1.msra.mxu0 %v305
  %1064 = vmatprep.subr.mxu0 %v322
  %1065 = vmatpush1.msra.mxu0 %v321
  %1066 = vmatprep.subr.mxu0 %v338
  %1067 = vmatpush1.msra.mxu0 %v337
  %1068 = vmatprep.subr.mxu0 %v354
  %1069 = vmatpush1.msra.mxu0 %v353
  %1070 = vmatprep.subr.mxu0 %v370
  %1071 = vmatpush1.msra.mxu0 %v369
  %1072 = vmatprep.subr.mxu0 %v386
  %1073 = vmatpush1.msra.mxu0 %v385
  %1074 = vmatprep.subr.mxu0 %v402
  %1075 = vmatpush1.msra.mxu0 %v401
  %1076 = vmatprep.subr.mxu0 %v418
  %1077 = vmatpush1.msra.mxu0 %v417
  %1078 = vmatprep.subr.mxu0 %v434
  %1079 = vmatpush1.msra.mxu0 %v433
  %1080 = vmatprep.subr.mxu0 %v450
  %1081 = vmatpush1.msra.mxu0 %v449
  %1082 = vmatprep.subr.mxu0 %v466
  %1083 = vmatpush1.msra.mxu0 %v465
  %1084 = vmatprep.subr.mxu0 %v482
  %1085 = vmatpush1.msra.mxu0 %v481
  %1086 = vmatprep.subr.mxu0 %v498
  %1087 = vmatpush1.msra.mxu0 %v497
  %1088 = vmatprep.subr.mxu0 %v514
  %1089 = vmatpush1.msra.mxu0 %v513
  %1090 = vmatprep.subr.mxu0 %v530
  %1091 = vmatpush1.msra.mxu0 %v529
  %1092 = vmatprep.mubr.f32.mxu0 %v18
  %1093 = vmatmul.mubr.f32.gmra.mrb[0].mxu0 %v17
  %v1094 = vpop.f32.mrb[0].mxu0
  %v1095 = vadd.f32 0.0, %v1094
  %v1096 = vpop.f32.mrb[0].mxu0
  %v1097 = vadd.f32 0.0, %v1096
  %1098 = vdwg.mxu0
  %v1099 = vadd.f32 %v598, %v600
  %v1100 = vadd.f32 %v1099, %v669
  %v1101 = vadd.f32 %v1100, %v671
  %v1102 = vadd.f32 %v1101, %v740
  %v1103 = vadd.f32 %v1102, %v742
  %v1104 = vadd.f32 %v1103, %v811
  %v1105 = vadd.f32 %v1104, %v813
  %v1106 = vadd.f32 %v1105, %v882
  %v1107 = vadd.f32 %v1106, %v884
  %v1108 = vadd.f32 %v1107, %v953
  %v1109 = vadd.f32 %v1108, %v955
  %v1110 = vadd.f32 %v1109, %v1024
  %v1111 = vadd.f32 %v1110, %v1026
  %v1112 = vadd.f32 %v1111, %v1095
  %v1113 = vadd.f32 %v1112, %v1097
  %1114 = vadd.xlane.f32.xlu0 %v1113
  %v1115 = vpop.xlane.xlu0 %1114
  %v1116 = vrcp.pop 2048.0
  %v1117 = vmul.f32 %v1115, %v1116
  %v1118 = vsub.f32 %v598, %v1117
  %v1119 = vsub.f32 %v600, %v1117
  %v1120 = vsub.f32 %v669, %v1117
  %v1121 = vsub.f32 %v671, %v1117
  %v1122 = vsub.f32 %v740, %v1117
  %v1123 = vsub.f32 %v742, %v1117
  %v1124 = vsub.f32 %v811, %v1117
  %v1125 = vsub.f32 %v813, %v1117
  %v1126 = vsub.f32 %v882, %v1117
  %v1127 = vsub.f32 %v884, %v1117
  %v1128 = vsub.f32 %v953, %v1117
  %v1129 = vsub.f32 %v955, %v1117
  %v1130 = vsub.f32 %v1024, %v1117
  %v1131 = vsub.f32 %v1026, %v1117
  %v1132 = vsub.f32 %v1095, %v1117
  %v1133 = vsub.f32 %v1097, %v1117
  %v1134 = vmul.f32 %v1118, %v1118
  %v1135 = vmul.f32 %v1119, %v1119
  %v1136 = vmul.f32 %v1120, %v1120
  %v1137 = vmul.f32 %v1121, %v1121
  %v1138 = vmul.f32 %v1122, %v1122
  %v1139 = vmul.f32 %v1123, %v1123
  %v1140 = vmul.f32 %v1124, %v1124
  %v1141 = vmul.f32 %v1125, %v1125
  %v1142 = vmul.f32 %v1126, %v1126
  %v1143 = vmul.f32 %v1127, %v1127
  %v1144 = vmul.f32 %v1128, %v1128
  %v1145 = vmul.f32 %v1129, %v1129
  %v1146 = vmul.f32 %v1130, %v1130
  %v1147 = vmul.f32 %v1131, %v1131
  %v1148 = vmul.f32 %v1132, %v1132
  %v1149 = vmul.f32 %v1133, %v1133
  %v1150 = vadd.f32 %v1134, %v1135
  %v1151 = vadd.f32 %v1150, %v1136
  %v1152 = vadd.f32 %v1151, %v1137
  %v1153 = vadd.f32 %v1152, %v1138
  %v1154 = vadd.f32 %v1153, %v1139
  %v1155 = vadd.f32 %v1154, %v1140
  %v1156 = vadd.f32 %v1155, %v1141
  %v1157 = vadd.f32 %v1156, %v1142
  %v1158 = vadd.f32 %v1157, %v1143
  %v1159 = vadd.f32 %v1158, %v1144
  %v1160 = vadd.f32 %v1159, %v1145
  %v1161 = vadd.f32 %v1160, %v1146
  %v1162 = vadd.f32 %v1161, %v1147
  %v1163 = vadd.f32 %v1162, %v1148
  %v1164 = vadd.f32 %v1163, %v1149
  %1165 = vadd.xlane.f32.xlu0 %v1164
  %v1166 = vpop.xlane.xlu0 %1165
  %v1167 = vmul.f32 %v1166, %v1116
  %v1168 = vld [vmem:[%s2] sm:$0xff]
  %v1169 = vadd.f32 %v1167, 1e-05
  %v1170 = vrsqrt.pop %v1169
  %v1171 = vmul.f32 %v1168, %v1170
  %1173 = vset.pattern.permute.xlu0 0
  %1174 = vperm.xlu0 %1173, %v1171
  %v1175 = vpop.permute.xlu0 %1174
  %v1177 = vmul.f32 %v1118, %v1175
  %v1178 = vmul.f32 %v1119, %v1175
  %v1179 = vmul.f32 %v1120, %v1175
  %v1180 = vmul.f32 %v1121, %v1175
  %v1181 = vmul.f32 %v1122, %v1175
  %v1182 = vmul.f32 %v1123, %v1175
  %v1183 = vmul.f32 %v1124, %v1175
  %v1184 = vmul.f32 %v1125, %v1175
  %v1185 = vmul.f32 %v1126, %v1175
  %v1186 = vmul.f32 %v1127, %v1175
  %v1187 = vmul.f32 %v1128, %v1175
  %v1188 = vmul.f32 %v1129, %v1175
  %v1189 = vmul.f32 %v1130, %v1175
  %v1190 = vmul.f32 %v1131, %v1175
  %v1191 = vmul.f32 %v1132, %v1175
  %v1192 = vmul.f32 %v1133, %v1175
  %v1193 = vld [vmem:[%s3] sm:$0xff]
  %1195 = vset.pattern.permute.xlu0 0
  %1196 = vperm.xlu0 %1195, %v1193
  %v1197 = vpop.permute.xlu0 %1196
  %v1199 = vadd.f32 %v1177, %v1197
  %v1200 = vadd.f32 %v1178, %v1197
  %v1201 = vadd.f32 %v1179, %v1197
  %v1202 = vadd.f32 %v1180, %v1197
  %v1203 = vadd.f32 %v1181, %v1197
  %v1204 = vadd.f32 %v1182, %v1197
  %v1205 = vadd.f32 %v1183, %v1197
  %v1206 = vadd.f32 %v1184, %v1197
  %v1207 = vadd.f32 %v1185, %v1197
  %v1208 = vadd.f32 %v1186, %v1197
  %v1209 = vadd.f32 %v1187, %v1197
  %v1210 = vadd.f32 %v1188, %v1197
  %v1211 = vadd.f32 %v1189, %v1197
  %v1212 = vadd.f32 %v1190, %v1197
  %v1213 = vadd.f32 %v1191, %v1197
  %v1214 = vadd.f32 %v1192, %v1197
  %v1215 = vmax.f32 %v1199, 0.0
  %v1216 = vmax.f32 %v1200, 0.0
  %v1217 = vmax.f32 %v1201, 0.0
  %v1218 = vmax.f32 %v1202, 0.0
  %v1219 = vmax.f32 %v1203, 0.0
  %v1220 = vmax.f32 %v1204, 0.0
  %v1221 = vmax.f32 %v1205, 0.0
  %v1222 = vmax.f32 %v1206, 0.0
  %v1223 = vmax.f32 %v1207, 0.0
  %v1224 = vmax.f32 %v1208, 0.0
  %v1225 = vmax.f32 %v1209, 0.0
  %v1226 = vmax.f32 %v1210, 0.0
  %v1227 = vmax.f32 %v1211, 0.0
  %v1228 = vmax.f32 %v1212, 0.0
  %v1229 = vmax.f32 %v1213, 0.0
  %v1230 = vmax.f32 %v1214, 0.0
  %1231 = vst [vmem:[%s4] sm:$0xff] %v1215
  %1232 = vst [vmem:[%s4 + $0x8] sm:$0xff] %v1216
  %1233 = vst [vmem:[%s4 + $0x10] sm:$0xff] %v1217
  %1234 = vst [vmem:[%s4 + $0x18] sm:$0xff] %v1218
  %1235 = vst [vmem:[%s4 + $0x20] sm:$0xff] %v1219
  %1236 = vst [vmem:[%s4 + $0x28] sm:$0xff] %v1220
  %1237 = vst [vmem:[%s4 + $0x30] sm:$0xff] %v1221
  %1238 = vst [vmem:[%s4 + $0x38] sm:$0xff] %v1222
  %1239 = vst [vmem:[%s4 + $0x40] sm:$0xff] %v1223
  %1240 = vst [vmem:[%s4 + $0x48] sm:$0xff] %v1224
  %1241 = vst [vmem:[%s4 + $0x50] sm:$0xff] %v1225
  %1242 = vst [vmem:[%s4 + $0x58] sm:$0xff] %v1226
  %1243 = vst [vmem:[%s4 + $0x60] sm:$0xff] %v1227
  %1244 = vst [vmem:[%s4 + $0x68] sm:$0xff] %v1228
  %1245 = vst [vmem:[%s4 + $0x70] sm:$0xff] %v1229
  %1246 = vst [vmem:[%s4 + $0x78] sm:$0xff] %v1230
  // Predicated region
  $region18: #{generator_forward.8} parent=0 // pred_check
    _
  $region19: #{generator_forward.8} parent=0 // pred_check_branch
    %1248 = sbr.rel (0) target = $region21
  $region20: #{generator_forward.8} parent=0 // pred_region
    _
  $region21: #{generator_forward.8} parent=0 // pred_fallthru
    _
  // Predicated region
  $region22: #{generator_forward.8} parent=0 // pred_check
    _
  $region23: #{generator_forward.8} parent=0 // pred_check_branch
    %1250 = sbr.rel (0) target = $region25
  $region24: #{generator_forward.8} parent=0 // pred_region
    _
  $region25: #{generator_forward.8} parent=0 // pred_fallthru
    _

// kernel: generator_forward.9
$region0: #{generator_forward.9}
  #allocation0 [shape = 'u32[]', space=smem, size = 0x4, offset = 0x4, fixed_abs, tag = 'smem constant byte address 0x4 - core index']
  #allocation1 [shape = 'u32[144,128]{1,0:T(1,128)}', space=vmem, size = 0x12000, scoped, tag = 'internal scratch']
  %s0 = inlined_call_operand.vmem [shape: f32[128,8192], index: 0, kind: input, shape index: {}]
  %s1 = inlined_call_operand.vmem [shape: f32[3,128], index: 1, kind: input, shape index: {}]
  %s2 = inlined_call_operand.vmem [shape: f32[3,8192], index: 2, kind: output, shape index: {}]
  %s3 = sld [smem:[#allocation0]]
  $region64: #{generator_forward.9} parent=0
    _
  %s5 = ssub.s32 1, %s3
  %s6 = scalar_select 0, %s5, %s3
  $region1: #{generator_forward.9} parent=0
    #allocation2 [shape = 'u8[2097152]{0}', space=vmem, size = 0x200000, scoped, tag = 'input window, operand 0']
    loop: start=0, step=1, limit=6
    $region2: #{generator_forward.9} parent=1 // loop_pre_header
      _
    $region3: #{generator_forward.9} parent=1 // loop_header
      %s8 = sphi 0, %s12
      %p9 = scmp.ge.s32.totalorder %s8, 6
      %s18 = sphi 0, %s20
      %s21 = sphi 0, %s18
      %s22 = sphi 0, %s21
      %s38 = sphi 0, %s22
      %s42 = sphi 0, %s42
      %s44 = sphi 0, %s42
      %s45 = sphi 0, %s44
      %s59 = sphi 0, %s45
      %s65 = sphi 0, %s67
      %s68 = sphi 0, %s65
      %s69 = sphi 0, %s68
      %s85 = sphi 0, %s69
    $region4: #{generator_forward.9} parent=1 // loop_header_branch
      %11 = sbr.rel (%p9) target = $region8
    $region5: #{generator_forward.9} parent=1 // loop_body
      %s13 = ssub.s32 %s8, 1
      %s14 = ssub.s32 %s8, 2
      %s15 = sadd.s32 %s8, 1
      %s16 = ssub.s32 %s8, %s15
      %p17 = scmp.eq.s32.totalorder %s16, 0
      %s19 = sadd.s32 %s18, 1
      %s20 = scalar_select %p17, %s18, %s19
      %p23 = pneg %p17
      %p24 = scmp.eq.s32.totalorder %s8, 3
      %p25 = por %p23, %p24
      %p26 = scmp.ne.s32.totalorder %s18, %s21
      %p27 = scmp.eq.s32.totalorder %s8, 0
      %p28 = por %p26, %p27
      %p29 = scmp.ne.s32.totalorder %s18, %s21
      %p30 = scmp.eq.s32.totalorder %s13, 3
      %p31 = por %p29, %p30
      %p32 = scmp.ne.s32.totalorder %s21, %s22
      %p33 = scmp.eq.s32.totalorder %s13, 0
      %p34 = por %p32, %p33
      %p35 = scmp.ne.s32.totalorder %s21, %s22
      %p36 = scmp.eq.s32.totalorder %s14, 3
      %p37 = por %p35, %p36
      %p39 = scmp.ne.s32.totalorder %s22, %s38
      %p40 = scmp.eq.s32.totalorder %s14, 0
      %p41 = por %p39, %p40
      %s43 = sadd.s32 %s42, 1
      %p46 = scmp.eq.s32.totalorder %s8, 3
      %p47 = scmp.ne.s32.totalorder %s42, %s44
      %p48 = scmp.eq.s32.totalorder %s8, 0
      %p49 = por %p47, %p48
      %p50 = scmp.ne.s32.totalorder %s42, %s44
      %p51 = scmp.eq.s32.totalorder %s13, 3
      %p52 = por %p50, %p51
      %p53 = scmp.ne.s32.totalorder %s44, %s45
      %p54 = scmp.eq.s32.totalorder %s13, 0
      %p55 = por %p53, %p54
      %p56 = scmp.ne.s32.totalorder %s44, %s45
      %p57 = scmp.eq.s32.totalorder %s14, 3
      %p58 = por %p56, %p57
      %p60 = scmp.ne.s32.totalorder %s45, %s59
      %p61 = scmp.eq.s32.totalorder %s14, 0
      %p62 = por %p60, %p61
      %s63 = ssub.s32 %s8, %s15
      %p64 = scmp.eq.s32.totalorder %s63, 0
      %s66 = sadd.s32 %s65, 1
      %s67 = scalar_select %p64, %s65, %s66
      %p70 = pneg %p64
      %p71 = scmp.eq.s32.totalorder %s8, 3
      %p72 = por %p70, %p71
      %p73 = scmp.ne.s32.totalorder %s65, %s68
      %p74 = scmp.eq.s32.totalorder %s8, 0
      %p75 = por %p73, %p74
      %p76 = scmp.ne.s32.totalorder %s65, %s68
      %p77 = scmp.eq.s32.totalorder %s13, 3
      %p78 = por %p76, %p77
      %p79 = scmp.ne.s32.totalorder %s68, %s69
      %p80 = scmp.eq.s32.totalorder %s13, 0
      %p81 = por %p79, %p80
      %p82 = scmp.ne.s32.totalorder %s68, %s69
      %p83 = scmp.eq.s32.totalorder %s14, 3
      %p84 = por %p82, %p83
      %p86 = scmp.ne.s32.totalorder %s69, %s85
      %p87 = scmp.eq.s32.totalorder %s14, 0
      %p88 = por %p86, %p87
      %p89 = scmp.le.s32.totalorder 1, %s8
      %p90 = scmp.lt.s32.totalorder %s8, 5
      %p91 = pnand %p89, %p90
      %p92 = pneg %p91
      // Predicated region
      $region9: #{generator_forward.9} parent=5 // pred_check
        _
      $region10: #{generator_forward.9} parent=5 // pred_check_branch
        %94 = sbr.rel (%p91) target = $region12
      $region11: #{generator_forward.9} parent=5 // pred_region
        %s95 = ssub.s32 %s8, 1
        // Predicated region
        $region13: #{generator_forward.9} parent=11 // pred_check
          %p96 = pneg %p55
        $region14: #{generator_forward.9} parent=11 // pred_check_branch
          %98 = sbr.rel (%p96) target = $region16
        $region15: #{generator_forward.9} parent=11 // pred_region
          _
        $region16: #{generator_forward.9} parent=11 // pred_fallthru
          _
      $region12: #{generator_forward.9} parent=5 // pred_fallthru
        _
      %p99 = scmp.lt.s32.totalorder %s8, 4
      // Predicated region
      $region17: #{generator_forward.9} parent=5 // pred_check
        %p100 = pneg %p99
      $region18: #{generator_forward.9} parent=5 // pred_check_branch
        %102 = sbr.rel (%p100) target = $region20
      $region19: #{generator_forward.9} parent=5 // pred_region
        // Predicated region
        $region21: #{generator_forward.9} parent=19 // pred_check
          %p103 = pneg %p28
        $region22: #{generator_forward.9} parent=19 // pred_check_branch
          %105 = sbr.rel (%p103) target = $region24
        $region23: #{generator_forward.9} parent=19 // pred_region
          %s106 = sand.u32 %s18, 1
          %s107 = sand.u32 %s18, 1
          %s108 = smul.addr %s107, 2048
          %s109 = scalar_lea.vmem [#allocation2], %s108
          %s110 = smul.u32 16, %s8
          %s111 = smul.addr %s110, 8
          %s112 = scalar_lea.vmem %s0, %s111
          // Predicated region
          $region25: #{generator_forward.9} parent=23 // pred_check
            _
          $region26: #{generator_forward.9} parent=23 // pred_check_branch
            %114 = sbr.rel (0) target = $region28
          $region27: #{generator_forward.9} parent=23 // pred_region
            // Predicated region
            $region29: #{generator_forward.9} parent=27 // pred_check
              _
            $region30: #{generator_forward.9} parent=27 // pred_check_branch
              %116 = sbr.rel (0) target = $region32
            $region31: #{generator_forward.9} parent=27 // pred_region
              loop: start=0, step=1, limit=1
              $region33: #{generator_forward.9} parent=31 // loop_pre_header
                _
              $region34: #{generator_forward.9} parent=31 // loop_header
                %s118 = sphi 0, %s122
                %p119 = scmp.ge.s32.totalorder %s118, 1
                %s123 = sphi %s112, %s112
                %s124 = sphi %s109, %s109
              $region35: #{generator_forward.9} parent=31 // loop_header_branch
                %121 = sbr.rel (%p119) target = $region39
              $region36: #{generator_forward.9} parent=31 // loop_body
                %v125 = vld [vmem:[%s123] sm:$0xff]
                %126 = vst [vmem:[%s124] sm:$0xff] %v125
                %v127 = vld [vmem:[%s123 + $0x8] sm:$0xff]
                %128 = vst [vmem:[%s124 + $0x8] sm:$0xff] %v127
                %v129 = vld [vmem:[%s123 + $0x10] sm:$0xff]
                %130 = vst [vmem:[%s124 + $0x10] sm:$0xff] %v129
                %v131 = vld [vmem:[%s123 + $0x18] sm:$0xff]
                %132 = vst [vmem:[%s124 + $0x18] sm:$0xff] %v131
                %v133 = vld [vmem:[%s123 + $0x20] sm:$0xff]
                %134 = vst [vmem:[%s124 + $0x20] sm:$0xff] %v133
                %v135 = vld [vmem:[%s123 + $0x28] sm:$0xff]
                %136 = vst [vmem:[%s124 + $0x28] sm:$0xff] %v135
                %v137 = vld [vmem:[%s123 + $0x30] sm:$0xff]
                %138 = vst [vmem:[%s124 + $0x30] sm:$0xff] %v137
                %v139 = vld [vmem:[%s123 + $0x38] sm:$0xff]
                %140 = vst [vmem:[%s124 + $0x38] sm:$0xff] %v139
                %v141 = vld [vmem:[%s123 + $0x40] sm:$0xff]
                %142 = vst [vmem:[%s124 + $0x40] sm:$0xff] %v141
                %v143 = vld [vmem:[%s123 + $0x48] sm:$0xff]
                %144 = vst [vmem:[%s124 + $0x48] sm:$0xff] %v143
                %v145 = vld [vmem:[%s123 + $0x50] sm:$0xff]
                %146 = vst [vmem:[%s124 + $0x50] sm:$0xff] %v145
                %v147 = vld [vmem:[%s123 + $0x58] sm:$0xff]
                %148 = vst [vmem:[%s124 + $0x58] sm:$0xff] %v147
                %v149 = vld [vmem:[%s123 + $0x60] sm:$0xff]
                %150 = vst [vmem:[%s124 + $0x60] sm:$0xff] %v149
                %v151 = vld [vmem:[%s123 + $0x68] sm:$0xff]
                %152 = vst [vmem:[%s124 + $0x68] sm:$0xff] %v151
                %v153 = vld [vmem:[%s123 + $0x70] sm:$0xff]
                %154 = vst [vmem:[%s124 + $0x70] sm:$0xff] %v153
                %v155 = vld [vmem:[%s123 + $0x78] sm:$0xff]
                %156 = vst [vmem:[%s124 + $0x78] sm:$0xff] %v155
                %v157 = vld [vmem:[%s123 + $0x200] sm:$0xff]
                %158 = vst [vmem:[%s124 + $0x80] sm:$0xff] %v157
                %v159 = vld [vmem:[%s123 + $0x208] sm:$0xff]
                %160 = vst [vmem:[%s124 + $0x88] sm:$0xff] %v159
                %v161 = vld [vmem:[%s123 + $0x210] sm:$0xff]
                %162 = vst [vmem:[%s124 + $0x90] sm:$0xff] %v161
                %v163 = vld [vmem:[%s123 + $0x218] sm:$0xff]
                %164 = vst [vmem:[%s124 + $0x98] sm:$0xff] %v163
                %v165 = vld [vmem:[%s123 + $0x220] sm:$0xff]
                %166 = vst [vmem:[%s124 + $0xa0] sm:$0xff] %v165
                %v167 = vld [vmem:[%s123 + $0x228] sm:$0xff]
                %168 = vst [vmem:[%s124 + $0xa8] sm:$0xff] %v167
                %v169 = vld [vmem:[%s123 + $0x230] sm:$0xff]
                %170 = vst [vmem:[%s124 + $0xb0] sm:$0xff] %v169
                %v171 = vld [vmem:[%s123 + $0x238] sm:$0xff]
                %172 = vst [vmem:[%s124 + $0xb8] sm:$0xff] %v171
                %v173 = vld [vmem:[%s123 + $0x240] sm:$0xff]
                %174 = vst [vmem:[%s124 + $0xc0] sm:$0xff] %v173
                %v175 = vld [vmem:[%s123 + $0x248] sm:$0xff]
                %176 = vst [vmem:[%s124 + $0xc8] sm:$0xff] %v175
                %v177 = vld [vmem:[%s123 + $0x250] sm:$0xff]
                %178 = vst [vmem:[%s124 + $0xd0] sm:$0xff] %v177
                %v179 = vld [vmem:[%s123 + $0x258] sm:$0xff]
                %180 = vst [vmem:[%s124 + $0xd8] sm:$0xff] %v179
                %v181 = vld [vmem:[%s123 + $0x260] sm:$0xff]
                %182 = vst [vmem:[%s124 + $0xe0] sm:$0xff] %v181
                %v183 = vld [vmem:[%s123 + $0x268] sm:$0xff]
                %184 = vst [vmem:[%s124 + $0xe8] sm:$0xff] %v183
                %v185 = vld [vmem:[%s123 + $0x270] sm:$0xff]
                %186 = vst [vmem:[%s124 + $0xf0] sm:$0xff] %v185
                %v187 = vld [vmem:[%s123 + $0x278] sm:$0xff]
                %188 = vst [vmem:[%s124 + $0xf8] sm:$0xff] %v187
                %v189 = vld [vmem:[%s123 + $0x400] sm:$0xff]
                %190 = vst [vmem:[%s124 + $0x100] sm:$0xff] %v189
                %v191 = vld [vmem:[%s123 + $0x408] sm:$0xff]
                %192 = vst [vmem:[%s124 + $0x108] sm:$0xff] %v191
                %v193 = vld [vmem:[%s123 + $0x410] sm:$0xff]
                %194 = vst [vmem:[%s124 + $0x110] sm:$0xff] %v193
                %v195 = vld [vmem:[%s123 + $0x418] sm:$0xff]
                %196 = vst [vmem:[%s124 + $0x118] sm:$0xff] %v195
                %v197 = vld [vmem:[%s123 + $0x420] sm:$0xff]
                %198 = vst [vmem:[%s124 + $0x120] sm:$0xff] %v197
                %v199 = vld [vmem:[%s123 + $0x428] sm:$0xff]
                %200 = vst [vmem:[%s124 + $0x128] sm:$0xff] %v199
                %v201 = vld [vmem:[%s123 + $0x430] sm:$0xff]
                %202 = vst [vmem:[%s124 + $0x130] sm:$0xff] %v201
                %v203 = vld [vmem:[%s123 + $0x438] sm:$0xff]
                %204 = vst [vmem:[%s124 + $0x138] sm:$0xff] %v203
                %v205 = vld [vmem:[%s123 + $0x440] sm:$0xff]
                %206 = vst [vmem:[%s124 + $0x140] sm:$0xff] %v205
                %v207 = vld [vmem:[%s123 + $0x448] sm:$0xff]
                %208 = vst [vmem:[%s124 + $0x148] sm:$0xff] %v207
                %v209 = vld [vmem:[%s123 + $0x450] sm:$0xff]
                %210 = vst [vmem:[%s124 + $0x150] sm:$0xff] %v209
                %v211 = vld [vmem:[%s123 + $0x458] sm:$0xff]
                %212 = vst [vmem:[%s124 + $0x158] sm:$0xff] %v211
                %v213 = vld [vmem:[%s123 + $0x460] sm:$0xff]
                %214 = vst [vmem:[%s124 + $0x160] sm:$0xff] %v213
                %v215 = vld [vmem:[%s123 + $0x468] sm:$0xff]
                %216 = vst [vmem:[%s124 + $0x168] sm:$0xff] %v215
                %v217 = vld [vmem:[%s123 + $0x470] sm:$0xff]
                %218 = vst [vmem:[%s124 + $0x170] sm:$0xff] %v217
                %v219 = vld [vmem:[%s123 + $0x478] sm:$0xff]
                %220 = vst [vmem:[%s124 + $0x178] sm:$0xff] %v219
                %v221 = vld [vmem:[%s123 + $0x600] sm:$0xff]
                %222 = vst [vmem:[%s124 + $0x180] sm:$0xff] %v221
                %v223 = vld [vmem:[%s123 + $0x608] sm:$0xff]
                %224 = vst [vmem:[%s124 + $0x188] sm:$0xff] %v223
                %v225 = vld [vmem:[%s123 + $0x610] sm:$0xff]
                %226 = vst [vmem:[%s124 + $0x190] sm:$0xff] %v225
                %v227 = vld [vmem:[%s123 + $0x618] sm:$0xff]
                %228 = vst [vmem:[%s124 + $0x198] sm:$0xff] %v227
                %v229 = vld [vmem:[%s123 + $0x620] sm:$0xff]
                %230 = vst [vmem:[%s124 + $0x1a0] sm:$0xff] %v229
                %v231 = vld [vmem:[%s123 + $0x628] sm:$0xff]
                %232 = vst [vmem:[%s124 + $0x1a8] sm:$0xff] %v231
                %v233 = vld [vmem:[%s123 + $0x630] sm:$0xff]
                %234 = vst [vmem:[%s124 + $0x1b0] sm:$0xff] %v233
                %v235 = vld [vmem:[%s123 + $0x638] sm:$0xff]
                %236 = vst [vmem:[%s124 + $0x1b8] sm:$0xff] %v235
                %v237 = vld [vmem:[%s123 + $0x640] sm:$0xff]
                %238 = vst [vmem:[%s124 + $0x1c0] sm:$0xff] %v237
                %v239 = vld [vmem:[%s123 + $0x648] sm:$0xff]
                %240 = vst [vmem:[%s124 + $0x1c8] sm:$0xff] %v239
                %v241 = vld [vmem:[%s123 + $0x650] sm:$0xff]
                %242 = vst [vmem:[%s124 + $0x1d0] sm:$0xff] %v241
                %v243 = vld [vmem:[%s123 + $0x658] sm:$0xff]
                %244 = vst [vmem:[%s124 + $0x1d8] sm:$0xff] %v243
                %v245 = vld [vmem:[%s123 + $0x660] sm:$0xff]
                %246 = vst [vmem:[%s124 + $0x1e0] sm:$0xff] %v245
                %v247 = vld [vmem:[%s123 + $0x668] sm:$0xff]
                %248 = vst [vmem:[%s124 + $0x1e8] sm:$0xff] %v247
                %v249 = vld [vmem:[%s123 + $0x670] sm:$0xff]
                %250 = vst [vmem:[%s124 + $0x1f0] sm:$0xff] %v249
                %v251 = vld [vmem:[%s123 + $0x678] sm:$0xff]
                %252 = vst [vmem:[%s124 + $0x1f8] sm:$0xff] %v251
                %v253 = vld [vmem:[%s123 + $0x800] sm:$0xff]
                %254 = vst [vmem:[%s124 + $0x200] sm:$0xff] %v253
                %v255 = vld [vmem:[%s123 + $0x808] sm:$0xff]
                %256 = vst [vmem:[%s124 + $0x208] sm:$0xff] %v255
                %v257 = vld [vmem:[%s123 + $0x810] sm:$0xff]
                %258 = vst [vmem:[%s124 + $0x210] sm:$0xff] %v257
                %v259 = vld [vmem:[%s123 + $0x818] sm:$0xff]
                %260 = vst [vmem:[%s124 + $0x218] sm:$0xff] %v259
                %v261 = vld [vmem:[%s123 + $0x820] sm:$0xff]
                %262 = vst [vmem:[%s124 + $0x220] sm:$0xff] %v261
                %v263 = vld [vmem:[%s123 + $0x828] sm:$0xff]
                %264 = vst [vmem:[%s124 + $0x228] sm:$0xff] %v263
                %v265 = vld [vmem:[%s123 + $0x830] sm:$0xff]
                %266 = vst [vmem:[%s124 + $0x230] sm:$0xff] %v265
                %v267 = vld [vmem:[%s123 + $0x838] sm:$0xff]
                %268 = vst [vmem:[%s124 + $0x238] sm:$0xff] %v267
                %v269 = vld [vmem:[%s123 + $0x840] sm:$0xff]
                %270 = vst [vmem:[%s124 + $0x240] sm:$0xff] %v269
                %v271 = vld [vmem:[%s123 + $0x848] sm:$0xff]
                %272 = vst [vmem:[%s124 + $0x248] sm:$0xff] %v271
                %v273 = vld [vmem:[%s123 + $0x850] sm:$0xff]
                %274 = vst [vmem:[%s124 + $0x250] sm:$0xff] %v273
                %v275 = vld [vmem:[%s123 + $0x858] sm:$0xff]
                %276 = vst [vmem:[%s124 + $0x258] sm:$0xff] %v275
                %v277 = vld [vmem:[%s123 + $0x860] sm:$0xff]
                %278 = vst [vmem:[%s124 + $0x260] sm:$0xff] %v277
                %v279 = vld [vmem:[%s123 + $0x868] sm:$0xff]
                %280 = vst [vmem:[%s124 + $0x268] sm:$0xff] %v279
                %v281 = vld [vmem:[%s123 + $0x870] sm:$0xff]
                %282 = vst [vmem:[%s124 + $0x270] sm:$0xff] %v281
                %v283 = vld [vmem:[%s123 + $0x878] sm:$0xff]
                %284 = vst [vmem:[%s124 + $0x278] sm:$0xff] %v283
                %v285 = vld [vmem:[%s123 + $0xa00] sm:$0xff]
                %286 = vst [vmem:[%s124 + $0x280] sm:$0xff] %v285
                %v287 = vld [vmem:[%s123 + $0xa08] sm:$0xff]
                %288 = vst [vmem:[%s124 + $0x288] sm:$0xff] %v287
                %v289 = vld [vmem:[%s123 + $0xa10] sm:$0xff]
                %290 = vst [vmem:[%s124 + $0x290] sm:$0xff] %v289
                %v291 = vld [vmem:[%s123 + $0xa18] sm:$0xff]
                %292 = vst [vmem:[%s124 + $0x298] sm:$0xff] %v291
                %v293 = vld [vmem:[%s123 + $0xa20] sm:$0xff]
                %294 = vst [vmem:[%s124 + $0x2a0] sm:$0xff] %v293
                %v295 = vld [vmem:[%s123 + $0xa28] sm:$0xff]
                %296 = vst [vmem:[%s124 + $0x2a8] sm:$0xff] %v295
                %v297 = vld [vmem:[%s123 + $0xa30] sm:$0xff]
                %298 = vst [vmem:[%s124 + $0x2b0] sm:$0xff] %v297
                %v299 = vld [vmem:[%s123 + $0xa38] sm:$0xff]
                %300 = vst [vmem:[%s124 + $0x2b8] sm:$0xff] %v299
                %v301 = vld [vmem:[%s123 + $0xa40] sm:$0xff]
                %302 = vst [vmem:[%s124 + $0x2c0] sm:$0xff] %v301
                %v303 = vld [vmem:[%s123 + $0xa48] sm:$0xff]
                %304 = vst [vmem:[%s124 + $0x2c8] sm:$0xff] %v303
                %v305 = vld [vmem:[%s123 + $0xa50] sm:$0xff]
                %306 = vst [vmem:[%s124 + $0x2d0] sm:$0xff] %v305
                %v307 = vld [vmem:[%s123 + $0xa58] sm:$0xff]
                %308 = vst [vmem:[%s124 + $0x2d8] sm:$0xff] %v307
                %v309 = vld [vmem:[%s123 + $0xa60] sm:$0xff]
                %310 = vst [vmem:[%s124 + $0x2e0] sm:$0xff] %v309
                %v311 = vld [vmem:[%s123 + $0xa68] sm:$0xff]
                %312 = vst [vmem:[%s124 + $0x2e8] sm:$0xff] %v311
                %v313 = vld [vmem:[%s123 + $0xa70] sm:$0xff]
                %314 = vst [vmem:[%s124 + $0x2f0] sm:$0xff] %v313
                %v315 = vld [vmem:[%s123 + $0xa78] sm:$0xff]
                %316 = vst [vmem:[%s124 + $0x2f8] sm:$0xff] %v315
                %v317 = vld [vmem:[%s123 + $0xc00] sm:$0xff]
                %318 = vst [vmem:[%s124 + $0x300] sm:$0xff] %v317
                %v319 = vld [vmem:[%s123 + $0xc08] sm:$0xff]
                %320 = vst [vmem:[%s124 + $0x308] sm:$0xff] %v319
                %v321 = vld [vmem:[%s123 + $0xc10] sm:$0xff]
                %322 = vst [vmem:[%s124 + $0x310] sm:$0xff] %v321
                %v323 = vld [vmem:[%s123 + $0xc18] sm:$0xff]
                %324 = vst [vmem:[%s124 + $0x318] sm:$0xff] %v323
                %v325 = vld [vmem:[%s123 + $0xc20] sm:$0xff]
                %326 = vst [vmem:[%s124 + $0x320] sm:$0xff] %v325
                %v327 = vld [vmem:[%s123 + $0xc28] sm:$0xff]
                %328 = vst [vmem:[%s124 + $0x328] sm:$0xff] %v327
                %v329 = vld [vmem:[%s123 + $0xc30] sm:$0xff]
                %330 = vst [vmem:[%s124 + $0x330] sm:$0xff] %v329
                %v331 = vld [vmem:[%s123 + $0xc38] sm:$0xff]
                %332 = vst [vmem:[%s124 + $0x338] sm:$0xff] %v331
                %v333 = vld [vmem:[%s123 + $0xc40] sm:$0xff]
                %334 = vst [vmem:[%s124 + $0x340] sm:$0xff] %v333
                %v335 = vld [vmem:[%s123 + $0xc48] sm:$0xff]
                %336 = vst [vmem:[%s124 + $0x348] sm:$0xff] %v335
                %v337 = vld [vmem:[%s123 + $0xc50] sm:$0xff]
                %338 = vst [vmem:[%s124 + $0x350] sm:$0xff] %v337
                %v339 = vld [vmem:[%s123 + $0xc58] sm:$0xff]
                %340 = vst [vmem:[%s124 + $0x358] sm:$0xff] %v339
                %v341 = vld [vmem:[%s123 + $0xc60] sm:$0xff]
                %342 = vst [vmem:[%s124 + $0x360] sm:$0xff] %v341
                %v343 = vld [vmem:[%s123 + $0xc68] sm:$0xff]
                %344 = vst [vmem:[%s124 + $0x368] sm:$0xff] %v343
                %v345 = vld [vmem:[%s123 + $0xc70] sm:$0xff]
                %346 = vst [vmem:[%s124 + $0x370] sm:$0xff] %v345
                %v347 = vld [vmem:[%s123 + $0xc78] sm:$0xff]
                %348 = vst [vmem:[%s124 + $0x378] sm:$0xff] %v347
                %v349 = vld [vmem:[%s123 + $0xe00] sm:$0xff]
                %350 = vst [vmem:[%s124 + $0x380] sm:$0xff] %v349
                %v351 = vld [vmem:[%s123 + $0xe08] sm:$0xff]
                %352 = vst [vmem:[%s124 + $0x388] sm:$0xff] %v351
                %v353 = vld [vmem:[%s123 + $0xe10] sm:$0xff]
                %354 = vst [vmem:[%s124 + $0x390] sm:$0xff] %v353
                %v355 = vld [vmem:[%s123 + $0xe18] sm:$0xff]
                %356 = vst [vmem:[%s124 + $0x398] sm:$0xff] %v355
                %v357 = vld [vmem:[%s123 + $0xe20] sm:$0xff]
                %358 = vst [vmem:[%s124 + $0x3a0] sm:$0xff] %v357
                %v359 = vld [vmem:[%s123 + $0xe28] sm:$0xff]
                %360 = vst [vmem:[%s124 + $0x3a8] sm:$0xff] %v359
                %v361 = vld [vmem:[%s123 + $0xe30] sm:$0xff]
                %362 = vst [vmem:[%s124 + $0x3b0] sm:$0xff] %v361
                %v363 = vld [vmem:[%s123 + $0xe38] sm:$0xff]
                %364 = vst [vmem:[%s124 + $0x3b8] sm:$0xff] %v363
                %v365 = vld [vmem:[%s123 + $0xe40] sm:$0xff]
                %366 = vst [vmem:[%s124 + $0x3c0] sm:$0xff] %v365
                %v367 = vld [vmem:[%s123 + $0xe48] sm:$0xff]
                %368 = vst [vmem:[%s124 + $0x3c8] sm:$0xff] %v367
                %v369 = vld [vmem:[%s123 + $0xe50] sm:$0xff]
                %370 = vst [vmem:[%s124 + $0x3d0] sm:$0xff] %v369
                %v371 = vld [vmem:[%s123 + $0xe58] sm:$0xff]
                %372 = vst [vmem:[%s124 + $0x3d8] sm:$0xff] %v371
                %v373 = vld [vmem:[%s123 + $0xe60] sm:$0xff]
                %374 = vst [vmem:[%s124 + $0x3e0] sm:$0xff] %v373
                %v375 = vld [vmem:[%s123 + $0xe68] sm:$0xff]
                %376 = vst [vmem:[%s124 + $0x3e8] sm:$0xff] %v375
                %v377 = vld [vmem:[%s123 + $0xe70] sm:$0xff]
                %378 = vst [vmem:[%s124 + $0x3f0] sm:$0xff] %v377
                %v379 = vld [vmem:[%s123 + $0xe78] sm:$0xff]
                %380 = vst [vmem:[%s124 + $0x3f8] sm:$0xff] %v379
                %v381 = vld [vmem:[%s123 + $0x1000] sm:$0xff]
                %382 = vst [vmem:[%s124 + $0x400] sm:$0xff] %v381
                %v383 = vld [vmem:[%s123 + $0x1008] sm:$0xff]
                %384 = vst [vmem:[%s124 + $0x408] sm:$0xff] %v383
                %v385 = vld [vmem:[%s123 + $0x1010] sm:$0xff]
                %386 = vst [vmem:[%s124 + $0x410] sm:$0xff] %v385
                %v387 = vld [vmem:[%s123 + $0x1018] sm:$0xff]
                %388 = vst [vmem:[%s124 + $0x418] sm:$0xff] %v387
                %v389 = vld [vmem:[%s123 + $0x1020] sm:$0xff]
                %390 = vst [vmem:[%s124 + $0x420] sm:$0xff] %v389
                %v391 = vld [vmem:[%s123 + $0x1028] sm:$0xff]
                %392 = vst [vmem:[%s124 + $0x428] sm:$0xff] %v391
                %v393 = vld [vmem:[%s123 + $0x1030] sm:$0xff]
                %394 = vst [vmem:[%s124 + $0x430] sm:$0xff] %v393
                %v395 = vld [vmem:[%s123 + $0x1038] sm:$0xff]
                %396 = vst [vmem:[%s124 + $0x438] sm:$0xff] %v395
                %v397 = vld [vmem:[%s123 + $0x1040] sm:$0xff]
                %398 = vst [vmem:[%s124 + $0x440] sm:$0xff] %v397
                %v399 = vld [vmem:[%s123 + $0x1048] sm:$0xff]
                %400 = vst [vmem:[%s124 + $0x448] sm:$0xff] %v399
                %v401 = vld [vmem:[%s123 + $0x1050] sm:$0xff]
                %402 = vst [vmem:[%s124 + $0x450] sm:$0xff] %v401
                %v403 = vld [vmem:[%s123 + $0x1058] sm:$0xff]
                %404 = vst [vmem:[%s124 + $0x458] sm:$0xff] %v403
                %v405 = vld [vmem:[%s123 + $0x1060] sm:$0xff]
                %406 = vst [vmem:[%s124 + $0x460] sm:$0xff] %v405
                %v407 = vld [vmem:[%s123 + $0x1068] sm:$0xff]
                %408 = vst [vmem:[%s124 + $0x468] sm:$0xff] %v407
                %v409 = vld [vmem:[%s123 + $0x1070] sm:$0xff]
                %410 = vst [vmem:[%s124 + $0x470] sm:$0xff] %v409
                %v411 = vld [vmem:[%s123 + $0x1078] sm:$0xff]
                %412 = vst [vmem:[%s124 + $0x478] sm:$0xff] %v411
                %v413 = vld [vmem:[%s123 + $0x1200] sm:$0xff]
                %414 = vst [vmem:[%s124 + $0x480] sm:$0xff] %v413
                %v415 = vld [vmem:[%s123 + $0x1208] sm:$0xff]
                %416 = vst [vmem:[%s124 + $0x488] sm:$0xff] %v415
                %v417 = vld [vmem:[%s123 + $0x1210] sm:$0xff]
                %418 = vst [vmem:[%s124 + $0x490] sm:$0xff] %v417
                %v419 = vld [vmem:[%s123 + $0x1218] sm:$0xff]
                %420 = vst [vmem:[%s124 + $0x498] sm:$0xff] %v419
                %v421 = vld [vmem:[%s123 + $0x1220] sm:$0xff]
                %422 = vst [vmem:[%s124 + $0x4a0] sm:$0xff] %v421
                %v423 = vld [vmem:[%s123 + $0x1228] sm:$0xff]
                %424 = vst [vmem:[%s124 + $0x4a8] sm:$0xff] %v423
                %v425 = vld [vmem:[%s123 + $0x1230] sm:$0xff]
                %426 = vst [vmem:[%s124 + $0x4b0] sm:$0xff] %v425
                %v427 = vld [vmem:[%s123 + $0x1238] sm:$0xff]
                %428 = vst [vmem:[%s124 + $0x4b8] sm:$0xff] %v427
                %v429 = vld [vmem:[%s123 + $0x1240] sm:$0xff]
                %430 = vst [vmem:[%s124 + $0x4c0] sm:$0xff] %v429
                %v431 = vld [vmem:[%s123 + $0x1248] sm:$0xff]
                %432 = vst [vmem:[%s124 + $0x4c8] sm:$0xff] %v431
                %v433 = vld [vmem:[%s123 + $0x1250] sm:$0xff]
                %434 = vst [vmem:[%s124 + $0x4d0] sm:$0xff] %v433
                %v435 = vld [vmem:[%s123 + $0x1258] sm:$0xff]
                %436 = vst [vmem:[%s124 + $0x4d8] sm:$0xff] %v435
                %v437 = vld [vmem:[%s123 + $0x1260] sm:$0xff]
                %438 = vst [vmem:[%s124 + $0x4e0] sm:$0xff] %v437
                %v439 = vld [vmem:[%s123 + $0x1268] sm:$0xff]
                %440 = vst [vmem:[%s124 + $0x4e8] sm:$0xff] %v439
                %v441 = vld [vmem:[%s123 + $0x1270] sm:$0xff]
                %442 = vst [vmem:[%s124 + $0x4f0] sm:$0xff] %v441
                %v443 = vld [vmem:[%s123 + $0x1278] sm:$0xff]
                %444 = vst [vmem:[%s124 + $0x4f8] sm:$0xff] %v443
                %v445 = vld [vmem:[%s123 + $0x1400] sm:$0xff]
                %446 = vst [vmem:[%s124 + $0x500] sm:$0xff] %v445
                %v447 = vld [vmem:[%s123 + $0x1408] sm:$0xff]
                %448 = vst [vmem:[%s124 + $0x508] sm:$0xff] %v447
                %v449 = vld [vmem:[%s123 + $0x1410] sm:$0xff]
                %450 = vst [vmem:[%s124 + $0x510] sm:$0xff] %v449
                %v451 = vld [vmem:[%s123 + $0x1418] sm:$0xff]
                %452 = vst [vmem:[%s124 + $0x518] sm:$0xff] %v451
                %v453 = vld [vmem:[%s123 + $0x1420] sm:$0xff]
                %454 = vst [vmem:[%s124 + $0x520] sm:$0xff] %v453
                %v455 = vld [vmem:[%s123 + $0x1428] sm:$0xff]
                %456 = vst [vmem:[%s124 + $0x528] sm:$0xff] %v455
                %v457 = vld [vmem:[%s123 + $0x1430] sm:$0xff]
                %458 = vst [vmem:[%s124 + $0x530] sm:$0xff] %v457
                %v459 = vld [vmem:[%s123 + $0x1438] sm:$0xff]
                %460 = vst [vmem:[%s124 + $0x538] sm:$0xff] %v459
                %v461 = vld [vmem:[%s123 + $0x1440] sm:$0xff]
                %462 = vst [vmem:[%s124 + $0x540] sm:$0xff] %v461
                %v463 = vld [vmem:[%s123 + $0x1448] sm:$0xff]
                %464 = vst [vmem:[%s124 + $0x548] sm:$0xff] %v463
                %v465 = vld [vmem:[%s123 + $0x1450] sm:$0xff]
                %466 = vst [vmem:[%s124 + $0x550] sm:$0xff] %v465
                %v467 = vld [vmem:[%s123 + $0x1458] sm:$0xff]
                %468 = vst [vmem:[%s124 + $0x558] sm:$0xff] %v467
                %v469 = vld [vmem:[%s123 + $0x1460] sm:$0xff]
                %470 = vst [vmem:[%s124 + $0x560] sm:$0xff] %v469
                %v471 = vld [vmem:[%s123 + $0x1468] sm:$0xff]
                %472 = vst [vmem:[%s124 + $0x568] sm:$0xff] %v471
                %v473 = vld [vmem:[%s123 + $0x1470] sm:$0xff]
                %474 = vst [vmem:[%s124 + $0x570] sm:$0xff] %v473
                %v475 = vld [vmem:[%s123 + $0x1478] sm:$0xff]
                %476 = vst [vmem:[%s124 + $0x578] sm:$0xff] %v475
                %v477 = vld [vmem:[%s123 + $0x1600] sm:$0xff]
                %478 = vst [vmem:[%s124 + $0x580] sm:$0xff] %v477
                %v479 = vld [vmem:[%s123 + $0x1608] sm:$0xff]
                %480 = vst [vmem:[%s124 + $0x588] sm:$0xff] %v479
                %v481 = vld [vmem:[%s123 + $0x1610] sm:$0xff]
                %482 = vst [vmem:[%s124 + $0x590] sm:$0xff] %v481
                %v483 = vld [vmem:[%s123 + $0x1618] sm:$0xff]
                %484 = vst [vmem:[%s124 + $0x598] sm:$0xff] %v483
                %v485 = vld [vmem:[%s123 + $0x1620] sm:$0xff]
                %486 = vst [vmem:[%s124 + $0x5a0] sm:$0xff] %v485
                %v487 = vld [vmem:[%s123 + $0x1628] sm:$0xff]
                %488 = vst [vmem:[%s124 + $0x5a8] sm:$0xff] %v487
                %v489 = vld [vmem:[%s123 + $0x1630] sm:$0xff]
                %490 = vst [vmem:[%s124 + $0x5b0] sm:$0xff] %v489
                %v491 = vld [vmem:[%s123 + $0x1638] sm:$0xff]
                %492 = vst [vmem:[%s124 + $0x5b8] sm:$0xff] %v491
                %v493 = vld [vmem:[%s123 + $0x1640] sm:$0xff]
                %494 = vst [vmem:[%s124 + $0x5c0] sm:$0xff] %v493
                %v495 = vld [vmem:[%s123 + $0x1648] sm:$0xff]
                %496 = vst [vmem:[%s124 + $0x5c8] sm:$0xff] %v495
                %v497 = vld [vmem:[%s123 + $0x1650] sm:$0xff]
                %498 = vst [vmem:[%s124 + $0x5d0] sm:$0xff] %v497
                %v499 = vld [vmem:[%s123 + $0x1658] sm:$0xff]
                %500 = vst [vmem:[%s124 + $0x5d8] sm:$0xff] %v499
                %v501 = vld [vmem:[%s123 + $0x1660] sm:$0xff]
                %502 = vst [vmem:[%s124 + $0x5e0] sm:$0xff] %v501
                %v503 = vld [vmem:[%s123 + $0x1668] sm:$0xff]
                %504 = vst [vmem:[%s124 + $0x5e8] sm:$0xff] %v503
                %v505 = vld [vmem:[%s123 + $0x1670] sm:$0xff]
                %506 = vst [vmem:[%s124 + $0x5f0] sm:$0xff] %v505
                %v507 = vld [vmem:[%s123 + $0x1678] sm:$0xff]
                %508 = vst [vmem:[%s124 + $0x5f8] sm:$0xff] %v507
                %v509 = vld [vmem:[%s123 + $0x1800] sm:$0xff]
                %510 = vst [vmem:[%s124 + $0x600] sm:$0xff] %v509
                %v511 = vld [vmem:[%s123 + $0x1808] sm:$0xff]
                %512 = vst [vmem:[%s124 + $0x608] sm:$0xff] %v511
                %v513 = vld [vmem:[%s123 + $0x1810] sm:$0xff]
                %514 = vst [vmem:[%s124 + $0x610] sm:$0xff] %v513
                %v515 = vld [vmem:[%s123 + $0x1818] sm:$0xff]
                %516 = vst [vmem:[%s124 + $0x618] sm:$0xff] %v515
                %v517 = vld [vmem:[%s123 + $0x1820] sm:$0xff]
                %518 = vst [vmem:[%s124 + $0x620] sm:$0xff] %v517
                %v519 = vld [vmem:[%s123 + $0x1828] sm:$0xff]
                %520 = vst [vmem:[%s124 + $0x628] sm:$0xff] %v519
                %v521 = vld [vmem:[%s123 + $0x1830] sm:$0xff]
                %522 = vst [vmem:[%s124 + $0x630] sm:$0xff] %v521
                %v523 = vld [vmem:[%s123 + $0x1838] sm:$0xff]
                %524 = vst [vmem:[%s124 + $0x638] sm:$0xff] %v523
                %v525 = vld [vmem:[%s123 + $0x1840] sm:$0xff]
                %526 = vst [vmem:[%s124 + $0x640] sm:$0xff] %v525
                %v527 = vld [vmem:[%s123 + $0x1848] sm:$0xff]
                %528 = vst [vmem:[%s124 + $0x648] sm:$0xff] %v527
                %v529 = vld [vmem:[%s123 + $0x1850] sm:$0xff]
                %530 = vst [vmem:[%s124 + $0x650] sm:$0xff] %v529
                %v531 = vld [vmem:[%s123 + $0x1858] sm:$0xff]
                %532 = vst [vmem:[%s124 + $0x658] sm:$0xff] %v531
                %v533 = vld [vmem:[%s123 + $0x1860] sm:$0xff]
                %534 = vst [vmem:[%s124 + $0x660] sm:$0xff] %v533
                %v535 = vld [vmem:[%s123 + $0x1868] sm:$0xff]
                %536 = vst [vmem:[%s124 + $0x668] sm:$0xff] %v535
                %v537 = vld [vmem:[%s123 + $0x1870] sm:$0xff]
                %538 = vst [vmem:[%s124 + $0x670] sm:$0xff] %v537
                %v539 = vld [vmem:[%s123 + $0x1878] sm:$0xff]
                %540 = vst [vmem:[%s124 + $0x678] sm:$0xff] %v539
                %v541 = vld [vmem:[%s123 + $0x1a00] sm:$0xff]
                %542 = vst [vmem:[%s124 + $0x680] sm:$0xff] %v541
                %v543 = vld [vmem:[%s123 + $0x1a08] sm:$0xff]
                %544 = vst [vmem:[%s124 + $0x688] sm:$0xff] %v543
                %v545 = vld [vmem:[%s123 + $0x1a10] sm:$0xff]
                %546 = vst [vmem:[%s124 + $0x690] sm:$0xff] %v545
                %v547 = vld [vmem:[%s123 + $0x1a18] sm:$0xff]
                %548 = vst [vmem:[%s124 + $0x698] sm:$0xff] %v547
                %v549 = vld [vmem:[%s123 + $0x1a20] sm:$0xff]
                %550 = vst [vmem:[%s124 + $0x6a0] sm:$0xff] %v549
                %v551 = vld [vmem:[%s123 + $0x1a28] sm:$0xff]
                %552 = vst [vmem:[%s124 + $0x6a8] sm:$0xff] %v551
                %v553 = vld [vmem:[%s123 + $0x1a30] sm:$0xff]
                %554 = vst [vmem:[%s124 + $0x6b0] sm:$0xff] %v553
                %v555 = vld [vmem:[%s123 + $0x1a38] sm:$0xff]
                %556 = vst [vmem:[%s124 + $0x6b8] sm:$0xff] %v555
                %v557 = vld [vmem:[%s123 + $0x1a40] sm:$0xff]
                %558 = vst [vmem:[%s124 + $0x6c0] sm:$0xff] %v557
                %v559 = vld [vmem:[%s123 + $0x1a48] sm:$0xff]
                %560 = vst [vmem:[%s124 + $0x6c8] sm:$0xff] %v559
                %v561 = vld [vmem:[%s123 + $0x1a50] sm:$0xff]
                %562 = vst [vmem:[%s124 + $0x6d0] sm:$0xff] %v561
                %v563 = vld [vmem:[%s123 + $0x1a58] sm:$0xff]
                %564 = vst [vmem:[%s124 + $0x6d8] sm:$0xff] %v563
                %v565 = vld [vmem:[%s123 + $0x1a60] sm:$0xff]
                %566 = vst [vmem:[%s124 + $0x6e0] sm:$0xff] %v565
                %v567 = vld [vmem:[%s123 + $0x1a68] sm:$0xff]
                %568 = vst [vmem:[%s124 + $0x6e8] sm:$0xff] %v567
                %v569 = vld [vmem:[%s123 + $0x1a70] sm:$0xff]
                %570 = vst [vmem:[%s124 + $0x6f0] sm:$0xff] %v569
                %v571 = vld [vmem:[%s123 + $0x1a78] sm:$0xff]
                %572 = vst [vmem:[%s124 + $0x6f8] sm:$0xff] %v571
                %v573 = vld [vmem:[%s123 + $0x1c00] sm:$0xff]
                %574 = vst [vmem:[%s124 + $0x700] sm:$0xff] %v573
                %v575 = vld [vmem:[%s123 + $0x1c08] sm:$0xff]
                %576 = vst [vmem:[%s124 + $0x708] sm:$0xff] %v575
                %v577 = vld [vmem:[%s123 + $0x1c10] sm:$0xff]
                %578 = vst [vmem:[%s124 + $0x710] sm:$0xff] %v577
                %v579 = vld [vmem:[%s123 + $0x1c18] sm:$0xff]
                %580 = vst [vmem:[%s124 + $0x718] sm:$0xff] %v579
                %v581 = vld [vmem:[%s123 + $0x1c20] sm:$0xff]
                %582 = vst [vmem:[%s124 + $0x720] sm:$0xff] %v581
                %v583 = vld [vmem:[%s123 + $0x1c28] sm:$0xff]
                %584 = vst [vmem:[%s124 + $0x728] sm:$0xff] %v583
                %v585 = vld [vmem:[%s123 + $0x1c30] sm:$0xff]
                %586 = vst [vmem:[%s124 + $0x730] sm:$0xff] %v585
                %v587 = vld [vmem:[%s123 + $0x1c38] sm:$0xff]
                %588 = vst [vmem:[%s124 + $0x738] sm:$0xff] %v587
                %v589 = vld [vmem:[%s123 + $0x1c40] sm:$0xff]
                %590 = vst [vmem:[%s124 + $0x740] sm:$0xff] %v589
                %v591 = vld [vmem:[%s123 + $0x1c48] sm:$0xff]
                %592 = vst [vmem:[%s124 + $0x748] sm:$0xff] %v591
                %v593 = vld [vmem:[%s123 + $0x1c50] sm:$0xff]
                %594 = vst [vmem:[%s124 + $0x750] sm:$0xff] %v593
                %v595 = vld [vmem:[%s123 + $0x1c58] sm:$0xff]
                %596 = vst [vmem:[%s124 + $0x758] sm:$0xff] %v595
                %v597 = vld [vmem:[%s123 + $0x1c60] sm:$0xff]
                %598 = vst [vmem:[%s124 + $0x760] sm:$0xff] %v597
                %v599 = vld [vmem:[%s123 + $0x1c68] sm:$0xff]
                %600 = vst [vmem:[%s124 + $0x768] sm:$0xff] %v599
                %v601 = vld [vmem:[%s123 + $0x1c70] sm:$0xff]
                %602 = vst [vmem:[%s124 + $0x770] sm:$0xff] %v601
                %v603 = vld [vmem:[%s123 + $0x1c78] sm:$0xff]
                %604 = vst [vmem:[%s124 + $0x778] sm:$0xff] %v603
                %v605 = vld [vmem:[%s123 + $0x1e00] sm:$0xff]
                %606 = vst [vmem:[%s124 + $0x780] sm:$0xff] %v605
                %v607 = vld [vmem:[%s123 + $0x1e08] sm:$0xff]
                %608 = vst [vmem:[%s124 + $0x788] sm:$0xff] %v607
                %v609 = vld [vmem:[%s123 + $0x1e10] sm:$0xff]
                %610 = vst [vmem:[%s124 + $0x790] sm:$0xff] %v609
                %v611 = vld [vmem:[%s123 + $0x1e18] sm:$0xff]
                %612 = vst [vmem:[%s124 + $0x798] sm:$0xff] %v611
                %v613 = vld [vmem:[%s123 + $0x1e20] sm:$0xff]
                %614 = vst [vmem:[%s124 + $0x7a0] sm:$0xff] %v613
                %v615 = vld [vmem:[%s123 + $0x1e28] sm:$0xff]
                %616 = vst [vmem:[%s124 + $0x7a8] sm:$0xff] %v615
                %v617 = vld [vmem:[%s123 + $0x1e30] sm:$0xff]
                %618 = vst [vmem:[%s124 + $0x7b0] sm:$0xff] %v617
                %v619 = vld [vmem:[%s123 + $0x1e38] sm:$0xff]
                %620 = vst [vmem:[%s124 + $0x7b8] sm:$0xff] %v619
                %v621 = vld [vmem:[%s123 + $0x1e40] sm:$0xff]
                %622 = vst [vmem:[%s124 + $0x7c0] sm:$0xff] %v621
                %v623 = vld [vmem:[%s123 + $0x1e48] sm:$0xff]
                %624 = vst [vmem:[%s124 + $0x7c8] sm:$0xff] %v623
                %v625 = vld [vmem:[%s123 + $0x1e50] sm:$0xff]
                %626 = vst [vmem:[%s124 + $0x7d0] sm:$0xff] %v625
                %v627 = vld [vmem:[%s123 + $0x1e58] sm:$0xff]
                %628 = vst [vmem:[%s124 + $0x7d8] sm:$0xff] %v627
                %v629 = vld [vmem:[%s123 + $0x1e60] sm:$0xff]
                %630 = vst [vmem:[%s124 + $0x7e0] sm:$0xff] %v629
                %v631 = vld [vmem:[%s123 + $0x1e68] sm:$0xff]
                %632 = vst [vmem:[%s124 + $0x7e8] sm:$0xff] %v631
                %v633 = vld [vmem:[%s123 + $0x1e70] sm:$0xff]
                %634 = vst [vmem:[%s124 + $0x7f0] sm:$0xff] %v633
                %v635 = vld [vmem:[%s123 + $0x1e78] sm:$0xff]
                %636 = vst [vmem:[%s124 + $0x7f8] sm:$0xff] %v635
              $region37: #{generator_forward.9} parent=31 // loop_footer
                %s122 = sadd.s32 1, %s118
              $region38: #{generator_forward.9} parent=31 // loop_footer_branch
                %117 = sbr.rel target = $region34
              $region39: #{generator_forward.9} parent=31 // loop_exit
                _
            $region32: #{generator_forward.9} parent=27 // pred_fallthru
              _
            // Predicated region
            $region40: #{generator_forward.9} parent=27 // pred_check
              _
            $region41: #{generator_forward.9} parent=27 // pred_check_branch
              %638 = sbr.rel target = $region43
            $region42: #{generator_forward.9} parent=27 // pred_region
              _
            $region43: #{generator_forward.9} parent=27 // pred_fallthru
              _
          $region28: #{generator_forward.9} parent=23 // pred_fallthru
            _
          %639 = vnop
        $region24: #{generator_forward.9} parent=19 // pred_fallthru
          _
      $region20: #{generator_forward.9} parent=5 // pred_fallthru
        _
      %p640 = scmp.le.s32.totalorder 1, %s8
      %p641 = scmp.lt.s32.totalorder %s8, 5
      %p642 = pnand %p640, %p641
      %p643 = pneg %p642
      // Predicated region
      $region44: #{generator_forward.9} parent=5 // pred_check
        _
      $region45: #{generator_forward.9} parent=5 // pred_check_branch
        %645 = sbr.rel (%p642) target = $region47
      $region46: #{generator_forward.9} parent=5 // pred_region
        %s646 = ssub.s32 %s8, 1
        %s647 = sand.u32 %s21, 1
        %s648 = sand.u32 %s21, 1
        %s649 = smul.addr %s648, 2048
        %s650 = scalar_lea.vmem [#allocation2], %s649
        // Predicated region
        $region48: #{generator_forward.9} parent=46 // pred_check
          %p651 = pneg %p34
        $region49: #{generator_forward.9} parent=46 // pred_check_branch
          %653 = sbr.rel (%p651) target = $region51
        $region50: #{generator_forward.9} parent=46 // pred_region
          _
        $region51: #{generator_forward.9} parent=46 // pred_fallthru
          _
        %s654 = sand.u32 %s21, 1
        %s655 = sand.u32 %s21, 1
        %s656 = smul.addr %s655, 2048
        %s657 = scalar_lea.vmem [#allocation2], %s656
        %p658 = pneg %p34
        %p659 = pneg %p31
        %p660 = pneg %p55
        %p661 = pneg %p52
        %p662 = pneg %p81
        %p663 = pneg %p78
        %s664 = smul.u32 16, %s13
        %p665 = scmp.lt.s32.totalorder %s664, 63
        %s666 = scalar_select %p665, %s664, 63
        %s667 = smul.addr %s666, 4
        %s668 = scalar_lea.vmem %s2, %s667
        %s669 = smul.u32 16, %s13
        %s670 = smul.u32 16, %s13
        %p671 = scmp.lt.s32.totalorder %s670, 63
        %s672 = scalar_select %p671, %s670, 63
        %s673 = smul.addr %s672, 4
        %s674 = scalar_lea.vmem %s2, %s673
        %s675 = smul.u32 16, %s13
        %v676 = vld [vmem:[%s1] sm:$0x7]
        %v677 = vld [vmem:[%s650] sm:$0xff]
        %v678 = vld [vmem:[%s650 + $0x8] sm:$0xff]
        %v679 = vld [vmem:[%s650 + $0x10] sm:$0xff]
        %v680 = vld [vmem:[%s650 + $0x18] sm:$0xff]
        %v681 = vld [vmem:[%s650 + $0x20] sm:$0xff]
        %v682 = vld [vmem:[%s650 + $0x28] sm:$0xff]
        %v683 = vld [vmem:[%s650 + $0x30] sm:$0xff]
        %v684 = vld [vmem:[%s650 + $0x38] sm:$0xff]
        %v685 = vld [vmem:[%s650 + $0x40] sm:$0xff]
        %v686 = vld [vmem:[%s650 + $0x48] sm:$0xff]
        %v687 = vld [vmem:[%s650 + $0x50] sm:$0xff]
        %v688 = vld [vmem:[%s650 + $0x58] sm:$0xff]
        %v689 = vld [vmem:[%s650 + $0x60] sm:$0xff]
        %v690 = vld [vmem:[%s650 + $0x68] sm:$0xff]
        %v691 = vld [vmem:[%s650 + $0x70] sm:$0xff]
        %v692 = vld [vmem:[%s650 + $0x78] sm:$0xff]
        %v693 = vld [vmem:[%s650 + $0x80] sm:$0xff]
        %v694 = vld [vmem:[%s650 + $0x88] sm:$0xff]
        %v695 = vld [vmem:[%s650 + $0x90] sm:$0xff]
        %v696 = vld [vmem:[%s650 + $0x98] sm:$0xff]
        %v697 = vld [vmem:[%s650 + $0xa0] sm:$0xff]
        %v698 = vld [vmem:[%s650 + $0xa8] sm:$0xff]
        %v699 = vld [vmem:[%s650 + $0xb0] sm:$0xff]
        %v700 = vld [vmem:[%s650 + $0xb8] sm:$0xff]
        %v701 = vld [vmem:[%s650 + $0xc0] sm:$0xff]
        %v702 = vld [vmem:[%s650 + $0xc8] sm:$0xff]
        %v703 = vld [vmem:[%s650 + $0xd0] sm:$0xff]
        %v704 = vld [vmem:[%s650 + $0xd8] sm:$0xff]
        %v705 = vld [vmem:[%s650 + $0xe0] sm:$0xff]
        %v706 = vld [vmem:[%s650 + $0xe8] sm:$0xff]
        %v707 = vld [vmem:[%s650 + $0xf0] sm:$0xff]
        %v708 = vld [vmem:[%s650 + $0xf8] sm:$0xff]
        %v709 = vld [vmem:[%s650 + $0x100] sm:$0xff]
        %v710 = vld [vmem:[%s650 + $0x108] sm:$0xff]
        %v711 = vld [vmem:[%s650 + $0x110] sm:$0xff]
        %v712 = vld [vmem:[%s650 + $0x118] sm:$0xff]
        %v713 = vld [vmem:[%s650 + $0x120] sm:$0xff]
        %v714 = vld [vmem:[%s650 + $0x128] sm:$0xff]
        %v715 = vld [vmem:[%s650 + $0x130] sm:$0xff]
        %v716 = vld [vmem:[%s650 + $0x138] sm:$0xff]
        %v717 = vld [vmem:[%s650 + $0x140] sm:$0xff]
        %v718 = vld [vmem:[%s650 + $0x148] sm:$0xff]
        %v719 = vld [vmem:[%s650 + $0x150] sm:$0xff]
        %v720 = vld [vmem:[%s650 + $0x158] sm:$0xff]
        %v721 = vld [vmem:[%s650 + $0x160] sm:$0xff]
        %v722 = vld [vmem:[%s650 + $0x168] sm:$0xff]
        %v723 = vld [vmem:[%s650 + $0x170] sm:$0xff]
        %v724 = vld [vmem:[%s650 + $0x178] sm:$0xff]
        %v725 = vld [vmem:[%s650 + $0x180] sm:$0xff]
        %v726 = vld [vmem:[%s650 + $0x188] sm:$0xff]
        %v727 = vld [vmem:[%s650 + $0x190] sm:$0xff]
        %v728 = vld [vmem:[%s650 + $0x198] sm:$0xff]
        %v729 = vld [vmem:[%s650 + $0x1a0] sm:$0xff]
        %v730 = vld [vmem:[%s650 + $0x1a8] sm:$0xff]
        %v731 = vld [vmem:[%s650 + $0x1b0] sm:$0xff]
        %v732 = vld [vmem:[%s650 + $0x1b8] sm:$0xff]
        %v733 = vld [vmem:[%s650 + $0x1c0] sm:$0xff]
        %v734 = vld [vmem:[%s650 + $0x1c8] sm:$0xff]
        %v735 = vld [vmem:[%s650 + $0x1d0] sm:$0xff]
        %v736 = vld [vmem:[%s650 + $0x1d8] sm:$0xff]
        %v737 = vld [vmem:[%s650 + $0x1e0] sm:$0xff]
        %v738 = vld [vmem:[%s650 + $0x1e8] sm:$0xff]
        %v739 = vld [vmem:[%s650 + $0x1f0] sm:$0xff]
        %v740 = vld [vmem:[%s650 + $0x1f8] sm:$0xff]
        %v741 = vld [vmem:[%s650 + $0x200] sm:$0xff]
        %v742 = vld [vmem:[%s650 + $0x208] sm:$0xff]
        %v743 = vld [vmem:[%s650 + $0x210] sm:$0xff]
        %v744 = vld [vmem:[%s650 + $0x218] sm:$0xff]
        %v745 = vld [vmem:[%s650 + $0x220] sm:$0xff]
        %v746 = vld [vmem:[%s650 + $0x228] sm:$0xff]
        %v747 = vld [vmem:[%s650 + $0x230] sm:$0xff]
        %v748 = vld [vmem:[%s650 + $0x238] sm:$0xff]
        %v749 = vld [vmem:[%s650 + $0x240] sm:$0xff]
        %v750 = vld [vmem:[%s650 + $0x248] sm:$0xff]
        %v751 = vld [vmem:[%s650 + $0x250] sm:$0xff]
        %v752 = vld [vmem:[%s650 + $0x258] sm:$0xff]
        %v753 = vld [vmem:[%s650 + $0x260] sm:$0xff]
        %v754 = vld [vmem:[%s650 + $0x268] sm:$0xff]
        %v755 = vld [vmem:[%s650 + $0x270] sm:$0xff]
        %v756 = vld [vmem:[%s650 + $0x278] sm:$0xff]
        %v757 = vld [vmem:[%s650 + $0x280] sm:$0xff]
        %v758 = vld [vmem:[%s650 + $0x288] sm:$0xff]
        %v759 = vld [vmem:[%s650 + $0x290] sm:$0xff]
        %v760 = vld [vmem:[%s650 + $0x298] sm:$0xff]
        %v761 = vld [vmem:[%s650 + $0x2a0] sm:$0xff]
        %v762 = vld [vmem:[%s650 + $0x2a8] sm:$0xff]
        %v763 = vld [vmem:[%s650 + $0x2b0] sm:$0xff]
        %v764 = vld [vmem:[%s650 + $0x2b8] sm:$0xff]
        %v765 = vld [vmem:[%s650 + $0x2c0] sm:$0xff]
        %v766 = vld [vmem:[%s650 + $0x2c8] sm:$0xff]
        %v767 = vld [vmem:[%s650 + $0x2d0] sm:$0xff]
        %v768 = vld [vmem:[%s650 + $0x2d8] sm:$0xff]
        %v769 = vld [vmem:[%s650 + $0x2e0] sm:$0xff]
        %v770 = vld [vmem:[%s650 + $0x2e8] sm:$0xff]
        %v771 = vld [vmem:[%s650 + $0x2f0] sm:$0xff]
        %v772 = vld [vmem:[%s650 + $0x2f8] sm:$0xff]
        %v773 = vld [vmem:[%s650 + $0x300] sm:$0xff]
        %v774 = vld [vmem:[%s650 + $0x308] sm:$0xff]
        %v775 = vld [vmem:[%s650 + $0x310] sm:$0xff]
        %v776 = vld [vmem:[%s650 + $0x318] sm:$0xff]
        %v777 = vld [vmem:[%s650 + $0x320] sm:$0xff]
        %v778 = vld [vmem:[%s650 + $0x328] sm:$0xff]
        %v779 = vld [vmem:[%s650 + $0x330] sm:$0xff]
        %v780 = vld [vmem:[%s650 + $0x338] sm:$0xff]
        %v781 = vld [vmem:[%s650 + $0x340] sm:$0xff]
        %v782 = vld [vmem:[%s650 + $0x348] sm:$0xff]
        %v783 = vld [vmem:[%s650 + $0x350] sm:$0xff]
        %v784 = vld [vmem:[%s650 + $0x358] sm:$0xff]
        %v785 = vld [vmem:[%s650 + $0x360] sm:$0xff]
        %v786 = vld [vmem:[%s650 + $0x368] sm:$0xff]
        %v787 = vld [vmem:[%s650 + $0x370] sm:$0xff]
        %v788 = vld [vmem:[%s650 + $0x378] sm:$0xff]
        %v789 = vld [vmem:[%s650 + $0x380] sm:$0xff]
        %v790 = vld [vmem:[%s650 + $0x388] sm:$0xff]
        %v791 = vld [vmem:[%s650 + $0x390] sm:$0xff]
        %v792 = vld [vmem:[%s650 + $0x398] sm:$0xff]
        %v793 = vld [vmem:[%s650 + $0x3a0] sm:$0xff]
        %v794 = vld [vmem:[%s650 + $0x3a8] sm:$0xff]
        %v795 = vld [vmem:[%s650 + $0x3b0] sm:$0xff]
        %v796 = vld [vmem:[%s650 + $0x3b8] sm:$0xff]
        %v797 = vld [vmem:[%s650 + $0x3c0] sm:$0xff]
        %v798 = vld [vmem:[%s650 + $0x3c8] sm:$0xff]
        %v799 = vld [vmem:[%s650 + $0x3d0] sm:$0xff]
        %v800 = vld [vmem:[%s650 + $0x3d8] sm:$0xff]
        %v801 = vld [vmem:[%s650 + $0x3e0] sm:$0xff]
        %v802 = vld [vmem:[%s650 + $0x3e8] sm:$0xff]
        %v803 = vld [vmem:[%s650 + $0x3f0] sm:$0xff]
        %v804 = vld [vmem:[%s650 + $0x3f8] sm:$0xff]
        %v805 = vld [vmem:[%s650 + $0x400] sm:$0xff]
        %v806 = vld [vmem:[%s650 + $0x408] sm:$0xff]
        %v807 = vld [vmem:[%s650 + $0x410] sm:$0xff]
        %v808 = vld [vmem:[%s650 + $0x418] sm:$0xff]
        %v809 = vld [vmem:[%s650 + $0x420] sm:$0xff]
        %v810 = vld [vmem:[%s650 + $0x428] sm:$0xff]
        %v811 = vld [vmem:[%s650 + $0x430] sm:$0xff]
        %v812 = vld [vmem:[%s650 + $0x438] sm:$0xff]
        %v813 = vld [vmem:[%s650 + $0x440] sm:$0xff]
        %v814 = vld [vmem:[%s650 + $0x448] sm:$0xff]
        %v815 = vld [vmem:[%s650 + $0x450] sm:$0xff]
        %v816 = vld [vmem:[%s650 + $0x458] sm:$0xff]
        %v817 = vld [vmem:[%s650 + $0x460] sm:$0xff]
        %v818 = vld [vmem:[%s650 + $0x468] sm:$0xff]
        %v819 = vld [vmem:[%s650 + $0x470] sm:$0xff]
        %v820 = vld [vmem:[%s650 + $0x478] sm:$0xff]
        %v821 = vld [vmem:[%s650 + $0x480] sm:$0xff]
        %v822 = vld [vmem:[%s650 + $0x488] sm:$0xff]
        %v823 = vld [vmem:[%s650 + $0x490] sm:$0xff]
        %v824 = vld [vmem:[%s650 + $0x498] sm:$0xff]
        %v825 = vld [vmem:[%s650 + $0x4a0] sm:$0xff]
        %v826 = vld [vmem:[%s650 + $0x4a8] sm:$0xff]
        %v827 = vld [vmem:[%s650 + $0x4b0] sm:$0xff]
        %v828 = vld [vmem:[%s650 + $0x4b8] sm:$0xff]
        %v829 = vld [vmem:[%s650 + $0x4c0] sm:$0xff]
        %v830 = vld [vmem:[%s650 + $0x4c8] sm:$0xff]
        %v831 = vld [vmem:[%s650 + $0x4d0] sm:$0xff]
        %v832 = vld [vmem:[%s650 + $0x4d8] sm:$0xff]
        %v833 = vld [vmem:[%s650 + $0x4e0] sm:$0xff]
        %v834 = vld [vmem:[%s650 + $0x4e8] sm:$0xff]
        %v835 = vld [vmem:[%s650 + $0x4f0] sm:$0xff]
        %v836 = vld [vmem:[%s650 + $0x4f8] sm:$0xff]
        %v837 = vld [vmem:[%s650 + $0x500] sm:$0xff]
        %v838 = vld [vmem:[%s650 + $0x508] sm:$0xff]
        %v839 = vld [vmem:[%s650 + $0x510] sm:$0xff]
        %v840 = vld [vmem:[%s650 + $0x518] sm:$0xff]
        %v841 = vld [vmem:[%s650 + $0x520] sm:$0xff]
        %v842 = vld [vmem:[%s650 + $0x528] sm:$0xff]
        %v843 = vld [vmem:[%s650 + $0x530] sm:$0xff]
        %v844 = vld [vmem:[%s650 + $0x538] sm:$0xff]
        %v845 = vld [vmem:[%s650 + $0x540] sm:$0xff]
        %v846 = vld [vmem:[%s650 + $0x548] sm:$0xff]
        %v847 = vld [vmem:[%s650 + $0x550] sm:$0xff]
        %v848 = vld [vmem:[%s650 + $0x558] sm:$0xff]
        %v849 = vld [vmem:[%s650 + $0x560] sm:$0xff]
        %v850 = vld [vmem:[%s650 + $0x568] sm:$0xff]
        %v851 = vld [vmem:[%s650 + $0x570] sm:$0xff]
        %v852 = vld [vmem:[%s650 + $0x578] sm:$0xff]
        %v853 = vld [vmem:[%s650 + $0x580] sm:$0xff]
        %v854 = vld [vmem:[%s650 + $0x588] sm:$0xff]
        %v855 = vld [vmem:[%s650 + $0x590] sm:$0xff]
        %v856 = vld [vmem:[%s650 + $0x598] sm:$0xff]
        %v857 = vld [vmem:[%s650 + $0x5a0] sm:$0xff]
        %v858 = vld [vmem:[%s650 + $0x5a8] sm:$0xff]
        %v859 = vld [vmem:[%s650 + $0x5b0] sm:$0xff]
        %v860 = vld [vmem:[%s650 + $0x5b8] sm:$0xff]
        %v861 = vld [vmem:[%s650 + $0x5c0] sm:$0xff]
        %v862 = vld [vmem:[%s650 + $0x5c8] sm:$0xff]
        %v863 = vld [vmem:[%s650 + $0x5d0] sm:$0xff]
        %v864 = vld [vmem:[%s650 + $0x5d8] sm:$0xff]
        %v865 = vld [vmem:[%s650 + $0x5e0] sm:$0xff]
        %v866 = vld [vmem:[%s650 + $0x5e8] sm:$0xff]
        %v867 = vld [vmem:[%s650 + $0x5f0] sm:$0xff]
        %v868 = vld [vmem:[%s650 + $0x5f8] sm:$0xff]
        %v869 = vld [vmem:[%s650 + $0x600] sm:$0xff]
        %v870 = vld [vmem:[%s650 + $0x608] sm:$0xff]
        %v871 = vld [vmem:[%s650 + $0x610] sm:$0xff]
        %v872 = vld [vmem:[%s650 + $0x618] sm:$0xff]
        %v873 = vld [vmem:[%s650 + $0x620] sm:$0xff]
        %v874 = vld [vmem:[%s650 + $0x628] sm:$0xff]
        %v875 = vld [vmem:[%s650 + $0x630] sm:$0xff]
        %v876 = vld [vmem:[%s650 + $0x638] sm:$0xff]
        %v877 = vld [vmem:[%s650 + $0x640] sm:$0xff]
        %v878 = vld [vmem:[%s650 + $0x648] sm:$0xff]
        %v879 = vld [vmem:[%s650 + $0x650] sm:$0xff]
        %v880 = vld [vmem:[%s650 + $0x658] sm:$0xff]
        %v881 = vld [vmem:[%s650 + $0x660] sm:$0xff]
        %v882 = vld [vmem:[%s650 + $0x668] sm:$0xff]
        %v883 = vld [vmem:[%s650 + $0x670] sm:$0xff]
        %v884 = vld [vmem:[%s650 + $0x678] sm:$0xff]
        %v885 = vld [vmem:[%s650 + $0x680] sm:$0xff]
        %v886 = vld [vmem:[%s650 + $0x688] sm:$0xff]
        %v887 = vld [vmem:[%s650 + $0x690] sm:$0xff]
        %v888 = vld [vmem:[%s650 + $0x698] sm:$0xff]
        %v889 = vld [vmem:[%s650 + $0x6a0] sm:$0xff]
        %v890 = vld [vmem:[%s650 + $0x6a8] sm:$0xff]
        %v891 = vld [vmem:[%s650 + $0x6b0] sm:$0xff]
        %v892 = vld [vmem:[%s650 + $0x6b8] sm:$0xff]
        %v893 = vld [vmem:[%s650 + $0x6c0] sm:$0xff]
        %v894 = vld [vmem:[%s650 + $0x6c8] sm:$0xff]
        %v895 = vld [vmem:[%s650 + $0x6d0] sm:$0xff]
        %v896 = vld [vmem:[%s650 + $0x6d8] sm:$0xff]
        %v897 = vld [vmem:[%s650 + $0x6e0] sm:$0xff]
        %v898 = vld [vmem:[%s650 + $0x6e8] sm:$0xff]
        %v899 = vld [vmem:[%s650 + $0x6f0] sm:$0xff]
        %v900 = vld [vmem:[%s650 + $0x6f8] sm:$0xff]
        %v901 = vld [vmem:[%s650 + $0x700] sm:$0xff]
        %v902 = vld [vmem:[%s650 + $0x708] sm:$0xff]
        %v903 = vld [vmem:[%s650 + $0x710] sm:$0xff]
        %v904 = vld [vmem:[%s650 + $0x718] sm:$0xff]
        %v905 = vld [vmem:[%s650 + $0x720] sm:$0xff]
        %v906 = vld [vmem:[%s650 + $0x728] sm:$0xff]
        %v907 = vld [vmem:[%s650 + $0x730] sm:$0xff]
        %v908 = vld [vmem:[%s650 + $0x738] sm:$0xff]
        %v909 = vld [vmem:[%s650 + $0x740] sm:$0xff]
        %v910 = vld [vmem:[%s650 + $0x748] sm:$0xff]
        %v911 = vld [vmem:[%s650 + $0x750] sm:$0xff]
        %v912 = vld [vmem:[%s650 + $0x758] sm:$0xff]
        %v913 = vld [vmem:[%s650 + $0x760] sm:$0xff]
        %v914 = vld [vmem:[%s650 + $0x768] sm:$0xff]
        %v915 = vld [vmem:[%s650 + $0x770] sm:$0xff]
        %v916 = vld [vmem:[%s650 + $0x778] sm:$0xff]
        %v917 = vld [vmem:[%s650 + $0x780] sm:$0xff]
        %v918 = vld [vmem:[%s650 + $0x788] sm:$0xff]
        %v919 = vld [vmem:[%s650 + $0x790] sm:$0xff]
        %v920 = vld [vmem:[%s650 + $0x798] sm:$0xff]
        %v921 = vld [vmem:[%s650 + $0x7a0] sm:$0xff]
        %v922 = vld [vmem:[%s650 + $0x7a8] sm:$0xff]
        %v923 = vld [vmem:[%s650 + $0x7b0] sm:$0xff]
        %v924 = vld [vmem:[%s650 + $0x7b8] sm:$0xff]
        %v925 = vld [vmem:[%s650 + $0x7c0] sm:$0xff]
        %v926 = vld [vmem:[%s650 + $0x7c8] sm:$0xff]
        %v927 = vld [vmem:[%s650 + $0x7d0] sm:$0xff]
        %v928 = vld [vmem:[%s650 + $0x7d8] sm:$0xff]
        %v929 = vld [vmem:[%s650 + $0x7e0] sm:$0xff]
        %v930 = vld [vmem:[%s650 + $0x7e8] sm:$0xff]
        %v931 = vld [vmem:[%s650 + $0x7f0] sm:$0xff]
        %v932 = vld [vmem:[%s650 + $0x7f8] sm:$0xff]
        %933 = vmatprep.subr.mxu0 %v678
        %934 = vmatpush1.msra.mxu0 %v677
        %935 = vmatprep.subr.mxu0 %v694
        %936 = vmatpush1.msra.mxu0 %v693
        %937 = vmatprep.subr.mxu0 %v710
        %938 = vmatpush1.msra.mxu0 %v709
        %939 = vmatprep.subr.mxu0 %v726
        %940 = vmatpush1.msra.mxu0 %v725
        %941 = vmatprep.subr.mxu0 %v742
        %942 = vmatpush1.msra.mxu0 %v741
        %943 = vmatprep.subr.mxu0 %v758
        %944 = vmatpush1.msra.mxu0 %v757
        %945 = vmatprep.subr.mxu0 %v774
        %946 = vmatpush1.msra.mxu0 %v773
        %947 = vmatprep.subr.mxu0 %v790
        %948 = vmatpush1.msra.mxu0 %v789
        %949 = vmatprep.subr.mxu0 %v806
        %950 = vmatpush1.msra.mxu0 %v805
        %951 = vmatprep.subr.mxu0 %v822
        %952 = vmatpush1.msra.mxu0 %v821
        %953 = vmatprep.subr.mxu0 %v838
        %954 = vmatpush1.msra.mxu0 %v837
        %955 = vmatprep.subr.mxu0 %v854
        %956 = vmatpush1.msra.mxu0 %v853
        %957 = vmatprep.subr.mxu0 %v870
        %958 = vmatpush1.msra.mxu0 %v869
        %959 = vmatprep.subr.mxu0 %v886
        %960 = vmatpush1.msra.mxu0 %v885
        %961 = vmatprep.subr.mxu0 %v902
        %962 = vmatpush1.msra.mxu0 %v901
        %963 = vmatprep.subr.mxu0 %v918
        %964 = vmatpush1.msra.mxu0 %v917
        %965 = vmatprep.subr.mxu0 0.0
        %966 = vmatpush1.msra.mxu0 0.0
        %967 = vmatprep.subr.mxu0 0.0
        %968 = vmatpush1.msra.mxu0 0.0
        %969 = vmatprep.subr.mxu0 0.0
        %970 = vmatpush1.msra.mxu0 0.0
        %971 = vmatprep.subr.mxu0 0.0
        %972 = vmatpush1.msra.mxu0 0.0
        %973 = vmatprep.subr.mxu0 0.0
        %974 = vmatpush1.msra.mxu0 0.0
        %975 = vmatprep.subr.mxu0 0.0
        %976 = vmatpush1.msra.mxu0 0.0
        %977 = vmatprep.subr.mxu0 0.0
        %978 = vmatpush1.msra.mxu0 0.0
        %979 = vmatprep.subr.mxu0 0.0
        %980 = vmatpush1.msra.mxu0 0.0
        %981 = vmatprep.subr.mxu0 0.0
        %982 = vmatpush1.msra.mxu0 0.0
        %983 = vmatprep.subr.mxu0 0.0
        %984 = vmatpush1.msra.mxu0 0.0
        %985 = vmatprep.subr.mxu0 0.0
        %986 = vmatpush1.msra.mxu0 0.0
        %987 = vmatprep.subr.mxu0 0.0
        %988 = vmatpush1.msra.mxu0 0.0
        %989 = vmatprep.subr.mxu0 0.0
        %990 = vmatpush1.msra.mxu0 0.0
        %991 = vmatprep.subr.mxu0 0.0
        %992 = vmatpush1.msra.mxu0 0.0
        %993 = vmatprep.subr.mxu0 0.0
        %994 = vmatpush1.msra.mxu0 0.0
        %995 = vmatprep.subr.mxu0 0.0
        %996 = vmatpush1.msra.mxu0 0.0
        %997 = vmatprep.mubr.f32.mxu0 0.0
        %998 = vmatmul.mubr.f32.gmra.mrb[0].mxu0 %v676
        %v999 = vpop.f32.mrb[0].mxu0
        %v1000 = vadd.f32 0.0, %v999
        %v1001 = vpop.f32.mrb[0].mxu0
        %v1002 = vadd.f32 0.0, %v1001
        %1003 = vdwg.mxu0
        %1004 = vmatprep.subr.mxu0 %v680
        %1005 = vmatpush1.msra.mxu0 %v679
        %1006 = vmatprep.subr.mxu0 %v696
        %1007 = vmatpush1.msra.mxu0 %v695
        %1008 = vmatprep.subr.mxu0 %v712
        %1009 = vmatpush1.msra.mxu0 %v711
        %1010 = vmatprep.subr.mxu0 %v728
        %1011 = vmatpush1.msra.mxu0 %v727
        %1012 = vmatprep.subr.mxu0 %v744
        %1013 = vmatpush1.msra.mxu0 %v743
        %1014 = vmatprep.subr.mxu0 %v760
        %1015 = vmatpush1.msra.mxu0 %v759
        %1016 = vmatprep.subr.mxu0 %v776
        %1017 = vmatpush1.msra.mxu0 %v775
        %1018 = vmatprep.subr.mxu0 %v792
        %1019 = vmatpush1.msra.mxu0 %v791
        %1020 = vmatprep.subr.mxu0 %v808
        %1021 = vmatpush1.msra.mxu0 %v807
        %1022 = vmatprep.subr.mxu0 %v824
        %1023 = vmatpush1.msra.mxu0 %v823
        %1024 = vmatprep.subr.mxu0 %v840
        %1025 = vmatpush1.msra.mxu0 %v839
        %1026 = vmatprep.subr.mxu0 %v856
        %1027 = vmatpush1.msra.mxu0 %v855
        %1028 = vmatprep.subr.mxu0 %v872
        %1029 = vmatpush1.msra.mxu0 %v871
        %1030 = vmatprep.subr.mxu0 %v888
        %1031 = vmatpush1.msra.mxu0 %v887
        %1032 = vmatprep.subr.mxu0 %v904
        %1033 = vmatpush1.msra.mxu0 %v903
        %1034 = vmatprep.subr.mxu0 %v920
        %1035 = vmatpush1.msra.mxu0 %v919
        %1036 = vmatprep.subr.mxu0 0.0
        %1037 = vmatpush1.msra.mxu0 0.0
        %1038 = vmatprep.subr.mxu0 0.0
        %1039 = vmatpush1.msra.mxu0 0.0
        %1040 = vmatprep.subr.mxu0 0.0
        %1041 = vmatpush1.msra.mxu0 0.0
        %1042 = vmatprep.subr.mxu0 0.0
        %1043 = vmatpush1.msra.mxu0 0.0
        %1044 = vmatprep.subr.mxu0 0.0
        %1045 = vmatpush1.msra.mxu0 0.0
        %1046 = vmatprep.subr.mxu0 0.0
        %1047 = vmatpush1.msra.mxu0 0.0
        %1048 = vmatprep.subr.mxu0 0.0
        %1049 = vmatpush1.msra.mxu0 0.0
        %1050 = vmatprep.subr.mxu0 0.0
        %1051 = vmatpush1.msra.mxu0 0.0
        %1052 = vmatprep.subr.mxu0 0.0
        %1053 = vmatpush1.msra.mxu0 0.0
        %1054 = vmatprep.subr.mxu0 0.0
        %1055 = vmatpush1.msra.mxu0 0.0
        %1056 = vmatprep.subr.mxu0 0.0
        %1057 = vmatpush1.msra.mxu0 0.0
        %1058 = vmatprep.subr.mxu0 0.0
        %1059 = vmatpush1.msra.mxu0 0.0
        %1060 = vmatprep.subr.mxu0 0.0
        %1061 = vmatpush1.msra.mxu0 0.0
        %1062 = vmatprep.subr.mxu0 0.0
        %1063 = vmatpush1.msra.mxu0 0.0
        %1064 = vmatprep.subr.mxu0 0.0
        %1065 = vmatpush1.msra.mxu0 0.0
        %1066 = vmatprep.subr.mxu0 0.0
        %1067 = vmatpush1.msra.mxu0 0.0
        %1068 = vmatprep.mubr.f32.mxu0 0.0
        %1069 = vmatmul.mubr.f32.gmra.mrb[0].mxu0 %v676
        %v1070 = vpop.f32.mrb[0].mxu0
        %v1071 = vadd.f32 0.0, %v1070
        %v1072 = vpop.f32.mrb[0].mxu0
        %v1073 = vadd.f32 0.0, %v1072
        %1074 = vdwg.mxu0
        %1075 = vmatprep.subr.mxu0 %v682
        %1076 = vmatpush1.msra.mxu0 %v681
        %1077 = vmatprep.subr.mxu0 %v698
        %1078 = vmatpush1.msra.mxu0 %v697
        %1079 = vmatprep.subr.mxu0 %v714
        %1080 = vmatpush1.msra.mxu0 %v713
        %1081 = vmatprep.subr.mxu0 %v730
        %1082 = vmatpush1.msra.mxu0 %v729
        %1083 = vmatprep.subr.mxu0 %v746
        %1084 = vmatpush1.msra.mxu0 %v745
        %1085 = vmatprep.subr.mxu0 %v762
        %1086 = vmatpush1.msra.mxu0 %v761
        %1087 = vmatprep.subr.mxu0 %v778
        %1088 = vmatpush1.msra.mxu0 %v777
        %1089 = vmatprep.subr.mxu0 %v794
        %1090 = vmatpush1.msra.mxu0 %v793
        %1091 = vmatprep.subr.mxu0 %v810
        %1092 = vmatpush1.msra.mxu0 %v809
        %1093 = vmatprep.subr.mxu0 %v826
        %1094 = vmatpush1.msra.mxu0 %v825
        %1095 = vmatprep.subr.mxu0 %v842
        %1096 = vmatpush1.msra.mxu0 %v841
        %1097 = vmatprep.subr.mxu0 %v858
        %1098 = vmatpush1.msra.mxu0 %v857
        %1099 = vmatprep.subr.mxu0 %v874
        %1100 = vmatpush1.msra.mxu0 %v873
        %1101 = vmatprep.subr.mxu0 %v890
        %1102 = vmatpush1.msra.mxu0 %v889
        %1103 = vmatprep.subr.mxu0 %v906
        %1104 = vmatpush1.msra.mxu0 %v905
        %1105 = vmatprep.subr.mxu0 %v922
        %1106 = vmatpush1.msra.mxu0 %v921
        %1107 = vmatprep.subr.mxu0 0.0
        %1108 = vmatpush1.msra.mxu0 0.0
        %1109 = vmatprep.subr.mxu0 0.0
        %1110 = vmatpush1.msra.mxu0 0.0
        %1111 = vmatprep.subr.mxu0 0.0
        %1112 = vmatpush1.msra.mxu0 0.0
        %1113 = vmatprep.subr.mxu0 0.0
        %1114 = vmatpush1.msra.mxu0 0.0
        %1115 = vmatprep.subr.mxu0 0.0
        %1116 = vmatpush1.msra.mxu0 0.0
        %1117 = vmatprep.subr.mxu0 0.0
        %1118 = vmatpush1.msra.mxu0 0.0
        %1119 = vmatprep.subr.mxu0 0.0
        %1120 = vmatpush1.msra.mxu0 0.0
        %1121 = vmatprep.subr.mxu0 0.0
        %1122 = vmatpush1.msra.mxu0 0.0
        %1123 = vmatprep.subr.mxu0 0.0
        %1124 = vmatpush1.msra.mxu0 0.0
        %1125 = vmatprep.subr.mxu0 0.0
        %1126 = vmatpush1.msra.mxu0 0.0
        %1127 = vmatprep.subr.mxu0 0.0
        %1128 = vmatpush1.msra.mxu0 0.0
        %1129 = vmatprep.subr.mxu0 0.0
        %1130 = vmatpush1.msra.mxu0 0.0
        %1131 = vmatprep.subr.mxu0 0.0
        %1132 = vmatpush1.msra.mxu0 0.0
        %1133 = vmatprep.subr.mxu0 0.0
        %1134 = vmatpush1.msra.mxu0 0.0
        %1135 = vmatprep.subr.mxu0 0.0
        %1136 = vmatpush1.msra.mxu0 0.0
        %1137 = vmatprep.subr.mxu0 0.0
        %1138 = vmatpush1.msra.mxu0 0.0
        %1139 = vmatprep.mubr.f32.mxu0 0.0
        %1140 = vmatmul.mubr.f32.gmra.mrb[0].mxu0 %v676
        %v1141 = vpop.f32.mrb[0].mxu0
        %v1142 = vadd.f32 0.0, %v1141
        %v1143 = vpop.f32.mrb[0].mxu0
        %v1144 = vadd.f32 0.0, %v1143
        %1145 = vdwg.mxu0
        %1146 = vmatprep.subr.mxu0 %v684
        %1147 = vmatpush1.msra.mxu0 %v683
        %1148 = vmatprep.subr.mxu0 %v700
        %1149 = vmatpush1.msra.mxu0 %v699
        %1150 = vmatprep.subr.mxu0 %v716
        %1151 = vmatpush1.msra.mxu0 %v715
        %1152 = vmatprep.subr.mxu0 %v732
        %1153 = vmatpush1.msra.mxu0 %v731
        %1154 = vmatprep.subr.mxu0 %v748
        %1155 = vmatpush1.msra.mxu0 %v747
        %1156 = vmatprep.subr.mxu0 %v764
        %1157 = vmatpush1.msra.mxu0 %v763
        %1158 = vmatprep.subr.mxu0 %v780
        %1159 = vmatpush1.msra.mxu0 %v779
        %1160 = vmatprep.subr.mxu0 %v796
        %1161 = vmatpush1.msra.mxu0 %v795
        %1162 = vmatprep.subr.mxu0 %v812
        %1163 = vmatpush1.msra.mxu0 %v811
        %1164 = vmatprep.subr.mxu0 %v828
        %1165 = vmatpush1.msra.mxu0 %v827
        %1166 = vmatprep.subr.mxu0 %v844
        %1167 = vmatpush1.msra.mxu0 %v843
        %1168 = vmatprep.subr.mxu0 %v860
        %1169 = vmatpush1.msra.mxu0 %v859
        %1170 = vmatprep.subr.mxu0 %v876
        %1171 = vmatpush1.msra.mxu0 %v875
        %1172 = vmatprep.subr.mxu0 %v892
        %1173 = vmatpush1.msra.mxu0 %v891
        %1174 = vmatprep.subr.mxu0 %v908
        %1175 = vmatpush1.msra.mxu0 %v907
        %1176 = vmatprep.subr.mxu0 %v924
        %1177 = vmatpush1.msra.mxu0 %v923
        %1178 = vmatprep.subr.mxu0 0.0
        %1179 = vmatpush1.msra.mxu0 0.0
        %1180 = vmatprep.subr.mxu0 0.0
        %1181 = vmatpush1.msra.mxu0 0.0
        %1182 = vmatprep.subr.mxu0 0.0
        %1183 = vmatpush1.msra.mxu0 0.0
        %1184 = vmatprep.subr.mxu0 0.0
        %1185 = vmatpush1.msra.mxu0 0.0
        %1186 = vmatprep.subr.mxu0 0.0
        %1187 = vmatpush1.msra.mxu0 0.0
        %1188 = vmatprep.subr.mxu0 0.0
        %1189 = vmatpush1.msra.mxu0 0.0
        %1190 = vmatprep.subr.mxu0 0.0
        %1191 = vmatpush1.msra.mxu0 0.0
        %1192 = vmatprep.subr.mxu0 0.0
        %1193 = vmatpush1.msra.mxu0 0.0
        %1194 = vmatprep.subr.mxu0 0.0
        %1195 = vmatpush1.msra.mxu0 0.0
        %1196 = vmatprep.subr.mxu0 0.0
        %1197 = vmatpush1.msra.mxu0 0.0
        %1198 = vmatprep.subr.mxu0 0.0
        %1199 = vmatpush1.msra.mxu0 0.0
        %1200 = vmatprep.subr.mxu0 0.0
        %1201 = vmatpush1.msra.mxu0 0.0
        %1202 = vmatprep.subr.mxu0 0.0
        %1203 = vmatpush1.msra.mxu0 0.0
        %1204 = vmatprep.subr.mxu0 0.0
        %1205 = vmatpush1.msra.mxu0 0.0
        %1206 = vmatprep.subr.mxu0 0.0
        %1207 = vmatpush1.msra.mxu0 0.0
        %1208 = vmatprep.subr.mxu0 0.0
        %1209 = vmatpush1.msra.mxu0 0.0
        %1210 = vmatprep.mubr.f32.mxu0 0.0
        %1211 = vmatmul.mubr.f32.gmra.mrb[0].mxu0 %v676
        %v1212 = vpop.f32.mrb[0].mxu0
        %v1213 = vadd.f32 0.0, %v1212
        %v1214 = vpop.f32.mrb[0].mxu0
        %v1215 = vadd.f32 0.0, %v1214
        %1216 = vdwg.mxu0
        %1217 = vmatprep.subr.mxu0 %v686
        %1218 = vmatpush1.msra.mxu0 %v685
        %1219 = vmatprep.subr.mxu0 %v702
        %1220 = vmatpush1.msra.mxu0 %v701
        %1221 = vmatprep.subr.mxu0 %v718
        %1222 = vmatpush1.msra.mxu0 %v717
        %1223 = vmatprep.subr.mxu0 %v734
        %1224 = vmatpush1.msra.mxu0 %v733
        %1225 = vmatprep.subr.mxu0 %v750
        %1226 = vmatpush1.msra.mxu0 %v749
        %1227 = vmatprep.subr.mxu0 %v766
        %1228 = vmatpush1.msra.mxu0 %v765
        %1229 = vmatprep.subr.mxu0 %v782
        %1230 = vmatpush1.msra.mxu0 %v781
        %1231 = vmatprep.subr.mxu0 %v798
        %1232 = vmatpush1.msra.mxu0 %v797
        %1233 = vmatprep.subr.mxu0 %v814
        %1234 = vmatpush1.msra.mxu0 %v813
        %1235 = vmatprep.subr.mxu0 %v830
        %1236 = vmatpush1.msra.mxu0 %v829
        %1237 = vmatprep.subr.mxu0 %v846
        %1238 = vmatpush1.msra.mxu0 %v845
        %1239 = vmatprep.subr.mxu0 %v862
        %1240 = vmatpush1.msra.mxu0 %v861
        %1241 = vmatprep.subr.mxu0 %v878
        %1242 = vmatpush1.msra.mxu0 %v877
        %1243 = vmatprep.subr.mxu0 %v894
        %1244 = vmatpush1.msra.mxu0 %v893
        %1245 = vmatprep.subr.mxu0 %v910
        %1246 = vmatpush1.msra.mxu0 %v909
        %1247 = vmatprep.subr.mxu0 %v926
        %1248 = vmatpush1.msra.mxu0 %v925
        %1249 = vmatprep.subr.mxu0 0.0
        %1250 = vmatpush1.msra.mxu0 0.0
        %1251 = vmatprep.subr.mxu0 0.0
        %1252 = vmatpush1.msra.mxu0 0.0
        %1253 = vmatprep.subr.mxu0 0.0
        %1254 = vmatpush1.msra.mxu0 0.0
        %1255 = vmatprep.subr.mxu0 0.0
        %1256 = vmatpush1.msra.mxu0 0.0
        %1257 = vmatprep.subr.mxu0 0.0
        %1258 = vmatpush1.msra.mxu0 0.0
        %1259 = vmatprep.subr.mxu0 0.0
        %1260 = vmatpush1.msra.mxu0 0.0
        %1261 = vmatprep.subr.mxu0 0.0
        %1262 = vmatpush1.msra.mxu0 0.0
        %1263 = vmatprep.subr.mxu0 0.0
        %1264 = vmatpush1.msra.mxu0 0.0
        %1265 = vmatprep.subr.mxu0 0.0
        %1266 = vmatpush1.msra.mxu0 0.0
        %1267 = vmatprep.subr.mxu0 0.0
        %1268 = vmatpush1.msra.mxu0 0.0
        %1269 = vmatprep.subr.mxu0 0.0
        %1270 = vmatpush1.msra.mxu0 0.0
        %1271 = vmatprep.subr.mxu0 0.0
        %1272 = vmatpush1.msra.mxu0 0.0
        %1273 = vmatprep.subr.mxu0 0.0
        %1274 = vmatpush1.msra.mxu0 0.0
        %1275 = vmatprep.subr.mxu0 0.0
        %1276 = vmatpush1.msra.mxu0 0.0
        %1277 = vmatprep.subr.mxu0 0.0
        %1278 = vmatpush1.msra.mxu0 0.0
        %1279 = vmatprep.subr.mxu0 0.0
        %1280 = vmatpush1.msra.mxu0 0.0
        %1281 = vmatprep.mubr.f32.mxu0 0.0
        %1282 = vmatmul.mubr.f32.gmra.mrb[0].mxu0 %v676
        %v1283 = vpop.f32.mrb[0].mxu0
        %v1284 = vadd.f32 0.0, %v1283
        %v1285 = vpop.f32.mrb[0].mxu0
        %v1286 = vadd.f32 0.0, %v1285
        %1287 = vdwg.mxu0
        %1288 = vmatprep.subr.mxu0 %v688
        %1289 = vmatpush1.msra.mxu0 %v687
        %1290 = vmatprep.subr.mxu0 %v704
        %1291 = vmatpush1.msra.mxu0 %v703
        %1292 = vmatprep.subr.mxu0 %v720
        %1293 = vmatpush1.msra.mxu0 %v719
        %1294 = vmatprep.subr.mxu0 %v736
        %1295 = vmatpush1.msra.mxu0 %v735
        %1296 = vmatprep.subr.mxu0 %v752
        %1297 = vmatpush1.msra.mxu0 %v751
        %1298 = vmatprep.subr.mxu0 %v768
        %1299 = vmatpush1.msra.mxu0 %v767
        %1300 = vmatprep.subr.mxu0 %v784
        %1301 = vmatpush1.msra.mxu0 %v783
        %1302 = vmatprep.subr.mxu0 %v800
        %1303 = vmatpush1.msra.mxu0 %v799
        %1304 = vmatprep.subr.mxu0 %v816
        %1305 = vmatpush1.msra.mxu0 %v815
        %1306 = vmatprep.subr.mxu0 %v832
        %1307 = vmatpush1.msra.mxu0 %v831
        %1308 = vmatprep.subr.mxu0 %v848
        %1309 = vmatpush1.msra.mxu0 %v847
        %1310 = vmatprep.subr.mxu0 %v864
        %1311 = vmatpush1.msra.mxu0 %v863
        %1312 = vmatprep.subr.mxu0 %v880
        %1313 = vmatpush1.msra.mxu0 %v879
        %1314 = vmatprep.subr.mxu0 %v896
        %1315 = vmatpush1.msra.mxu0 %v895
        %1316 = vmatprep.subr.mxu0 %v912
        %1317 = vmatpush1.msra.mxu0 %v911
        %1318 = vmatprep.subr.mxu0 %v928
        %1319 = vmatpush1.msra.mxu0 %v927
        %1320 = vmatprep.subr.mxu0 0.0
        %1321 = vmatpush1.msra.mxu0 0.0
        %1322 = vmatprep.subr.mxu0 0.0
        %1323 = vmatpush1.msra.mxu0 0.0
        %1324 = vmatprep.subr.mxu0 0.0
        %1325 = vmatpush1.msra.mxu0 0.0
        %1326 = vmatprep.subr.mxu0 0.0
        %1327 = vmatpush1.msra.mxu0 0.0
        %1328 = vmatprep.subr.mxu0 0.0
        %1329 = vmatpush1.msra.mxu0 0.0
        %1330 = vmatprep.subr.mxu0 0.0
        %1331 = vmatpush1.msra.mxu0 0.0
        %1332 = vmatprep.subr.mxu0 0.0
        %1333 = vmatpush1.msra.mxu0 0.0
        %1334 = vmatprep.subr.mxu0 0.0
        %1335 = vmatpush1.msra.mxu0 0.0
        %1336 = vmatprep.subr.mxu0 0.0
        %1337 = vmatpush1.msra.mxu0 0.0
        %1338 = vmatprep.subr.mxu0 0.0
        %1339 = vmatpush1.msra.mxu0 0.0
        %1340 = vmatprep.subr.mxu0 0.0
        %1341 = vmatpush1.msra.mxu0 0.0
        %1342 = vmatprep.subr.mxu0 0.0
        %1343 = vmatpush1.msra.mxu0 0.0
        %1344 = vmatprep.subr.mxu0 0.0
        %1345 = vmatpush1.msra.mxu0 0.0
        %1346 = vmatprep.subr.mxu0 0.0
        %1347 = vmatpush1.msra.mxu0 0.0
        %1348 = vmatprep.subr.mxu0 0.0
        %1349 = vmatpush1.msra.mxu0 0.0
        %1350 = vmatprep.subr.mxu0 0.0
        %1351 = vmatpush1.msra.mxu0 0.0
        %1352 = vmatprep.mubr.f32.mxu0 0.0
        %1353 = vmatmul.mubr.f32.gmra.mrb[0].mxu0 %v676
        %v1354 = vpop.f32.mrb[0].mxu0
        %v1355 = vadd.f32 0.0, %v1354
        %v1356 = vpop.f32.mrb[0].mxu0
        %v1357 = vadd.f32 0.0, %v1356
        %1358 = vdwg.mxu0
        %1359 = vmatprep.subr.mxu0 %v690
        %1360 = vmatpush1.msra.mxu0 %v689
        %1361 = vmatprep.subr.mxu0 %v706
        %1362 = vmatpush1.msra.mxu0 %v705
        %1363 = vmatprep.subr.mxu0 %v722
        %1364 = vmatpush1.msra.mxu0 %v721
        %1365 = vmatprep.subr.mxu0 %v738
        %1366 = vmatpush1.msra.mxu0 %v737
        %1367 = vmatprep.subr.mxu0 %v754
        %1368 = vmatpush1.msra.mxu0 %v753
        %1369 = vmatprep.subr.mxu0 %v770
        %1370 = vmatpush1.msra.mxu0 %v769
        %1371 = vmatprep.subr.mxu0 %v786
        %1372 = vmatpush1.msra.mxu0 %v785
        %1373 = vmatprep.subr.mxu0 %v802
        %1374 = vmatpush1.msra.mxu0 %v801
        %1375 = vmatprep.subr.mxu0 %v818
        %1376 = vmatpush1.msra.mxu0 %v817
        %1377 = vmatprep.subr.mxu0 %v834
        %1378 = vmatpush1.msra.mxu0 %v833
        %1379 = vmatprep.subr.mxu0 %v850
        %1380 = vmatpush1.msra.mxu0 %v849
        %1381 = vmatprep.subr.mxu0 %v866
        %1382 = vmatpush1.msra.mxu0 %v865
        %1383 = vmatprep.subr.mxu0 %v882
        %1384 = vmatpush1.msra.mxu0 %v881
        %1385 = vmatprep.subr.mxu0 %v898
        %1386 = vmatpush1.msra.mxu0 %v897
        %1387 = vmatprep.subr.mxu0 %v914
        %1388 = vmatpush1.msra.mxu0 %v913
        %1389 = vmatprep.subr.mxu0 %v930
        %1390 = vmatpush1.msra.mxu0 %v929
        %1391 = vmatprep.subr.mxu0 0.0
        %1392 = vmatpush1.msra.mxu0 0.0
        %1393 = vmatprep.subr.mxu0 0.0
        %1394 = vmatpush1.msra.mxu0 0.0
        %1395 = vmatprep.subr.mxu0 0.0
        %1396 = vmatpush1.msra.mxu0 0.0
        %1397 = vmatprep.subr.mxu0 0.0
        %1398 = vmatpush1.msra.mxu0 0.0
        %1399 = vmatprep.subr.mxu0 0.0
        %1400 = vmatpush1.msra.mxu0 0.0
        %1401 = vmatprep.subr.mxu0 0.0
        %1402 = vmatpush1.msra.mxu0 0.0
        %1403 = vmatprep.subr.mxu0 0.0
        %1404 = vmatpush1.msra.mxu0 0.0
        %1405 = vmatprep.subr.mxu0 0.0
        %1406 = vmatpush1.msra.mxu0 0.0
        %1407 = vmatprep.subr.mxu0 0.0
        %1408 = vmatpush1.msra.mxu0 0.0
        %1409 = vmatprep.subr.mxu0 0.0
        %1410 = vmatpush1.msra.mxu0 0.0
        %1411 = vmatprep.subr.mxu0 0.0
        %1412 = vmatpush1.msra.mxu0 0.0
        %1413 = vmatprep.subr.mxu0 0.0
        %1414 = vmatpush1.msra.mxu0 0.0
        %1415 = vmatprep.subr.mxu0 0.0
        %1416 = vmatpush1.msra.mxu0 0.0
        %1417 = vmatprep.subr.mxu0 0.0
        %1418 = vmatpush1.msra.mxu0 0.0
        %1419 = vmatprep.subr.mxu0 0.0
        %1420 = vmatpush1.msra.mxu0 0.0
        %1421 = vmatprep.subr.mxu0 0.0
        %1422 = vmatpush1.msra.mxu0 0.0
        %1423 = vmatprep.mubr.f32.mxu0 0.0
        %1424 = vmatmul.mubr.f32.gmra.mrb[0].mxu0 %v676
        %v1425 = vpop.f32.mrb[0].mxu0
        %v1426 = vadd.f32 0.0, %v1425
        %v1427 = vpop.f32.mrb[0].mxu0
        %v1428 = vadd.f32 0.0, %v1427
        %1429 = vdwg.mxu0
        %1430 = vmatprep.subr.mxu0 %v692
        %1431 = vmatpush1.msra.mxu0 %v691
        %1432 = vmatprep.subr.mxu0 %v708
        %1433 = vmatpush1.msra.mxu0 %v707
        %1434 = vmatprep.subr.mxu0 %v724
        %1435 = vmatpush1.msra.mxu0 %v723
        %1436 = vmatprep.subr.mxu0 %v740
        %1437 = vmatpush1.msra.mxu0 %v739
        %1438 = vmatprep.subr.mxu0 %v756
        %1439 = vmatpush1.msra.mxu0 %v755
        %1440 = vmatprep.subr.mxu0 %v772
        %1441 = vmatpush1.msra.mxu0 %v771
        %1442 = vmatprep.subr.mxu0 %v788
        %1443 = vmatpush1.msra.mxu0 %v787
        %1444 = vmatprep.subr.mxu0 %v804
        %1445 = vmatpush1.msra.mxu0 %v803
        %1446 = vmatprep.subr.mxu0 %v820
        %1447 = vmatpush1.msra.mxu0 %v819
        %1448 = vmatprep.subr.mxu0 %v836
        %1449 = vmatpush1.msra.mxu0 %v835
        %1450 = vmatprep.subr.mxu0 %v852
        %1451 = vmatpush1.msra.mxu0 %v851
        %1452 = vmatprep.subr.mxu0 %v868
        %1453 = vmatpush1.msra.mxu0 %v867
        %1454 = vmatprep.subr.mxu0 %v884
        %1455 = vmatpush1.msra.mxu0 %v883
        %1456 = vmatprep.subr.mxu0 %v900
        %1457 = vmatpush1.msra.mxu0 %v899
        %1458 = vmatprep.subr.mxu0 %v916
        %1459 = vmatpush1.msra.mxu0 %v915
        %1460 = vmatprep.subr.mxu0 %v932
        %1461 = vmatpush1.msra.mxu0 %v931
        %1462 = vmatprep.subr.mxu0 0.0
        %1463 = vmatpush1.msra.mxu0 0.0
        %1464 = vmatprep.subr.mxu0 0.0
        %1465 = vmatpush1.msra.mxu0 0.0
        %1466 = vmatprep.subr.mxu0 0.0
        %1467 = vmatpush1.msra.mxu0 0.0
        %1468 = vmatprep.subr.mxu0 0.0
        %1469 = vmatpush1.msra.mxu0 0.0
        %1470 = vmatprep.subr.mxu0 0.0
        %1471 = vmatpush1.msra.mxu0 0.0
        %1472 = vmatprep.subr.mxu0 0.0
        %1473 = vmatpush1.msra.mxu0 0.0
        %1474 = vmatprep.subr.mxu0 0.0
        %1475 = vmatpush1.msra.mxu0 0.0
        %1476 = vmatprep.subr.mxu0 0.0
        %1477 = vmatpush1.msra.mxu0 0.0
        %1478 = vmatprep.subr.mxu0 0.0
        %1479 = vmatpush1.msra.mxu0 0.0
        %1480 = vmatprep.subr.mxu0 0.0
        %1481 = vmatpush1.msra.mxu0 0.0
        %1482 = vmatprep.subr.mxu0 0.0
        %1483 = vmatpush1.msra.mxu0 0.0
        %1484 = vmatprep.subr.mxu0 0.0
        %1485 = vmatpush1.msra.mxu0 0.0
        %1486 = vmatprep.subr.mxu0 0.0
        %1487 = vmatpush1.msra.mxu0 0.0
        %1488 = vmatprep.subr.mxu0 0.0
        %1489 = vmatpush1.msra.mxu0 0.0
        %1490 = vmatprep.subr.mxu0 0.0
        %1491 = vmatpush1.msra.mxu0 0.0
        %1492 = vmatprep.subr.mxu0 0.0
        %1493 = vmatpush1.msra.mxu0 0.0
        %1494 = vmatprep.mubr.f32.mxu0 0.0
        %1495 = vmatmul.mubr.f32.gmra.mrb[0].mxu0 %v676
        %v1496 = vpop.f32.mrb[0].mxu0
        %v1497 = vadd.f32 0.0, %v1496
        %v1498 = vpop.f32.mrb[0].mxu0
        %v1499 = vadd.f32 0.0, %v1498
        %1500 = vdwg.mxu0
        %v1501 = vtanh.pop %v1000
        %v1502 = vtanh.pop %v1002
        %v1503 = vtanh.pop %v1071
        %v1504 = vtanh.pop %v1073
        %v1505 = vtanh.pop %v1142
        %v1506 = vtanh.pop %v1144
        %v1507 = vtanh.pop %v1213
        %v1508 = vtanh.pop %v1215
        %v1509 = vtanh.pop %v1284
        %v1510 = vtanh.pop %v1286
        %v1511 = vtanh.pop %v1355
        %v1512 = vtanh.pop %v1357
        %v1513 = vtanh.pop %v1426
        %v1514 = vtanh.pop %v1428
        %v1515 = vtanh.pop %v1497
        %v1516 = vtanh.pop %v1499
        %v1533 = vcombine.low %v1501, %v1502
        %v1534 = vcombine.low %v1503, %v1504
        %v1535 = vcombine.low %v1505, %v1506
        %v1536 = vcombine.low %v1507, %v1508
        %v1537 = vcombine.low %v1509, %v1510
        %v1538 = vcombine.low %v1511, %v1512
        %v1539 = vcombine.low %v1513, %v1514
        %v1540 = vcombine.low %v1515, %v1516
        %1549 = vst [vmem:[%s674] sm:$0x77] %v1533
        %1550 = vst [vmem:[%s674 + $0x8] sm:$0x77] %v1534
        %1551 = vst [vmem:[%s674 + $0x10] sm:$0x77] %v1535
        %1552 = vst [vmem:[%s674 + $0x18] sm:$0x77] %v1536
        %1553 = vst [vmem:[%s674 + $0x20] sm:$0x77] %v1537
        %1554 = vst [vmem:[%s674 + $0x28] sm:$0x77] %v1538
        %1555 = vst [vmem:[%s674 + $0x30] sm:$0x77] %v1539
        %1556 = vst [vmem:[%s674 + $0x38] sm:$0x77] %v1540
        %s1557 = smul.u32 16, %s13
        %p1558 = scmp.lt.s32.totalorder %s1557, 63
        %s1559 = scalar_select %p1558, %s1557, 63
        %s1560 = smul.addr %s1559, 4
        %s1561 = scalar_lea.vmem %s2, %s1560
        // Predicated region
        $region52: #{generator_forward.9} parent=46 // pred_check
          %p1562 = pneg %p78
        $region53: #{generator_forward.9} parent=46 // pred_check_branch
          %1564 = sbr.rel (%p1562) target = $region55
        $region54: #{generator_forward.9} parent=46 // pred_region
          %s1565 = smul.u32 16, %s13
        $region55: #{generator_forward.9} parent=46 // pred_fallthru
          _
      $region47: #{generator_forward.9} parent=5 // pred_fallthru
        _
      %p1566 = scmp.le.s32.totalorder 2, %s8
      // Predicated region
      $region56: #{generator_forward.9} parent=5 // pred_check
        %p1567 = pneg %p1566
      $region57: #{generator_forward.9} parent=5 // pred_check_branch
        %1569 = sbr.rel (%p1567) target = $region59
      $region58: #{generator_forward.9} parent=5 // pred_region
        %s1570 = ssub.s32 %s8, 2
        // Predicated region
        $region60: #{generator_forward.9} parent=58 // pred_check
          %p1571 = pneg %p84
        $region61: #{generator_forward.9} parent=58 // pred_check_branch
          %1573 = sbr.rel (%p1571) target = $region63
        $region62: #{generator_forward.9} parent=58 // pred_region
          %s1574 = smul.u32 16, %s14
          %p1575 = scmp.lt.s32.totalorder %s1574, 63
          %s1576 = scalar_select %p1575, %s1574, 63
          %s1577 = smul.addr %s1576, 4
          %s1578 = scalar_lea.vmem %s2, %s1577
        $region63: #{generator_forward.9} parent=58 // pred_fallthru
          _
      $region59: #{generator_forward.9} parent=5 // pred_fallthru
        _
    $region6: #{generator_forward.9} parent=1 // loop_footer
      %s12 = sadd.s32 1, %s8
    $region7: #{generator_forward.9} parent=1 // loop_footer_branch
      %7 = sbr.rel target = $region3
    $region8: #{generator_forward.9} parent=1 // loop_exit
      _

</llo_original>
